<compile_context>
chip_gen: v6e
topology: v6e:2x2x1
jax: 0.10.0
libtpu: 0.0.40
codegen_flags: <defaults>
</compile_context>

<pallas_src>
import functools
import math

import jax
import jax.numpy as jnp
from jax import lax
from jax.experimental import pallas as pl
from jax.experimental.pallas import tpu as pltpu


# ----------------------------------------------------------------------------
# Fused Pallas kernel: stacked GRU layers + MLP head, everything VMEM-resident.
# ----------------------------------------------------------------------------
def _make_fused_gru_kernel(num_layers, T, B, H, C):
    """Build a kernel closure for `num_layers` stacked GRU layers + the MLP head.

    Ref layout (inputs..., out):
      gi0   : (T, B, 3H)  hoisted layer-0 input projection (+ folded input biases)
      whh0  : (H, 3H)     layer-0 recurrent weights, columns ordered [r | z | n]
      bh0   : (1, 3H)     layer-0 recurrent bias [0 | 0 | b_hn]
      for each deeper layer l = 1..L-1:
        wih_l (H, 3H), bi_l (1, 3H), whh_l (H, 3H), bh_l (1, 3H)
      w1 (H, 128), b1 (1, 128), w2 (128, C), b2 (1, C)
      out   : (L*B, C)
    """

    def kernel(*refs):
        out_ref = refs[-1]
        gi0_ref, whh0_ref, bh0_ref = refs[0], refs[1], refs[2]
        pos = 3
        deeper = []
        for _ in range(num_layers - 1):
            deeper.append(refs[pos:pos + 4])
            pos += 4
        w1_ref, b1_ref, w2_ref, b2_ref = refs[pos:pos + 4]

        dot = functools.partial(jnp.dot, preferred_element_type=jnp.float32)

        def run_layer(gi_seq, whh_v, bh_v):
            # gi_seq[t]: (B, 3H) = x_t @ [W_ir|W_iz|W_in] + (b_ir+b_hr | b_iz+b_hz | b_in)
            h = jnp.zeros((B, H), jnp.float32)
            outs = []
            for t in range(T):           # statically unrolled; serial h dependence
                gh = dot(h, whh_v) + bh_v   # (B,3H): [h@W_hr | h@W_hz | h@W_hn + b_hn]
                gi = gi_seq[t]
                r = jax.nn.sigmoid(gi[:, :H] + gh[:, :H])
                z = jax.nn.sigmoid(gi[:, H:2 * H] + gh[:, H:2 * H])
                n = jnp.tanh(gi[:, 2 * H:] + r * gh[:, 2 * H:])
                h = (1.0 - z) * n + z * h
                outs.append(h)
            return outs, h

        # ---- layer 0: input projection already hoisted outside the kernel ----
        gi_seq = [gi0_ref[t] for t in range(T)]
        seq, h_fin = run_layer(gi_seq, whh0_ref[...], bh0_ref[...])
        finals = [h_fin]

        # ---- deeper layers: hoist their input projection out of the serial loop
        #      (T independent (B,H) x (H,3H) dots, then the recurrence) ----
        for wih_ref, bi_ref, whh_ref, bh_ref in deeper:
            wih_v, bi_v = wih_ref[...], bi_ref[...]
            gi_seq = [dot(seq[t], wih_v) + bi_v for t in range(T)]
            seq, h_fin = run_layer(gi_seq, whh_ref[...], bh_ref[...])
            finals.append(h_fin)

        # ---- fused MLP head: relu -> Linear(H,128) -> relu -> Linear(128,C) ----
        w1_v, b1_v = w1_ref[...], b1_ref[...]
        w2_v, b2_v = w2_ref[...], b2_ref[...]
        for l, h_fin in enumerate(finals):
            hr = jnp.maximum(h_fin, 0.0)
            h1 = jnp.maximum(dot(hr, w1_v) + b1_v, 0.0)
            out_ref[l * B:(l + 1) * B, :] = (dot(h1, w2_v) + b2_v).astype(out_ref.dtype)

    return kernel


# ----------------------------------------------------------------------------
# Wrapper: weight packing + single pallas_call
# ----------------------------------------------------------------------------
def _pack_gru_layer(lp):
    """PyTorch (3H,D_in)/(3H,H)/(3H,) -> concatenated (D_in,3H)/(H,3H) + folded biases."""
    H = lp["w_hh"].shape[1]
    wih = lp["w_ih"].T                  # (D_in, 3H), columns ordered [r | z | n]
    whh = lp["w_hh"].T                  # (H, 3H)
    b_ih, b_hh = lp["b_ih"], lp["b_hh"]
    bi = jnp.concatenate([b_ih[:H] + b_hh[:H],
                          b_ih[H:2 * H] + b_hh[H:2 * H],
                          b_ih[2 * H:]]).reshape(1, 3 * H)
    bh = jnp.concatenate([jnp.zeros((2 * H,), b_hh.dtype),
                          b_hh[2 * H:]]).reshape(1, 3 * H)
    return wih, whh, bi, bh


def gru_model_forward(params, x):
    """Equivalent to the PyTorch module forward. x: (B, T, input_size) -> (L*B, C)."""
    B, T, _ = x.shape
    layers = params["gru_layers"]
    L = len(layers)
    H = layers[0]["w_hh"].shape[1]
    C = params["fc_w"].shape[0]

    packed = [_pack_gru_layer(lp) for lp in layers]
    wih0, whh0, bi0, bh0 = packed[0]

    # Hoisted layer-0 input projection: one (B*T, D) x (D, 3H) matmul, time-major.
    gi0 = jnp.einsum("btd,dg->tbg", x.astype(jnp.float32), wih0) + bi0   # (T, B, 3H)

    def vspec(shape):
        if len(shape) == 2:
            return pl.BlockSpec(shape, lambda i: (0, 0))
        return pl.BlockSpec(shape, lambda i: (0, 0, 0))

    inputs = [gi0, whh0, bh0]
    in_specs = [vspec((T, B, 3 * H)), vspec((H, 3 * H)), vspec((1, 3 * H))]
    for wih, whh, bi, bh in packed[1:]:
        inputs += [wih, bi, whh, bh]
        in_specs += [vspec(wih.shape), vspec(bi.shape),
                     vspec(whh.shape), vspec(bh.shape)]

    w1t = params["fc1_w"].T             # (H, 128)
    w2t = params["fc_w"].T              # (128, C)
    inputs += [w1t, params["fc1_b"].reshape(1, -1),
               w2t, params["fc_b"].reshape(1, -1)]
    in_specs += [vspec(w1t.shape), vspec((1, w1t.shape[1])),
                 vspec(w2t.shape), vspec((1, C))]

    kernel = _make_fused_gru_kernel(L, T, B, H, C)
    return pl.pallas_call(
        kernel,
        out_shape=jax.ShapeDtypeStruct((L * B, C), jnp.float32),
        grid_spec=pltpu.PrefetchScalarGridSpec(
            num_scalar_prefetch=0,
            grid=(1,),
            in_specs=in_specs,
            out_specs=vspec((L * B, C)),
        ),
        compiler_params=pltpu.CompilerParams(dimension_semantics=("arbitrary",)),
    )(*inputs)


# ----------------------------------------------------------------------------
# Deterministic parameter init (PyTorch-style uniform ranges)
# ----------------------------------------------------------------------------
def init_params(key, num_classes, input_size, hidden_size, num_layers):
    k_gru = 1.0 / math.sqrt(hidden_size)
    params = {"gru_layers": []}
    for layer in range(num_layers):
        d_in = input_size if layer == 0 else hidden_size
        key, k1, k2, k3, k4 = jax.random.split(key, 5)
        params["gru_layers"].append({
            "w_ih": jax.random.uniform(k1, (3 * hidden_size, d_in), jnp.float32, -k_gru, k_gru),
            "w_hh": jax.random.uniform(k2, (3 * hidden_size, hidden_size), jnp.float32, -k_gru, k_gru),
            "b_ih": jax.random.uniform(k3, (3 * hidden_size,), jnp.float32, -k_gru, k_gru),
            "b_hh": jax.random.uniform(k4, (3 * hidden_size,), jnp.float32, -k_gru, k_gru),
        })
    key, k1, k2, k3, k4 = jax.random.split(key, 5)
    k_fc1 = 1.0 / math.sqrt(hidden_size)
    k_fc = 1.0 / math.sqrt(128)
    params["fc1_w"] = jax.random.uniform(k1, (128, hidden_size), jnp.float32, -k_fc1, k_fc1)
    params["fc1_b"] = jax.random.uniform(k2, (128,), jnp.float32, -k_fc1, k_fc1)
    params["fc_w"] = jax.random.uniform(k3, (num_classes, 128), jnp.float32, -k_fc, k_fc)
    params["fc_b"] = jax.random.uniform(k4, (num_classes,), jnp.float32, -k_fc, k_fc)
    return params


# ----------------------------------------------------------------------------
# Pure-JAX reference (f32, HIGHEST precision) for correctness check
# ----------------------------------------------------------------------------
def reference_forward(params, x):
    dot = functools.partial(jnp.dot, precision=lax.Precision.HIGHEST)
    B = x.shape[0]
    layer_in = jnp.transpose(x, (1, 0, 2))      # (T, B, D)
    finals = []
    for lp in params["gru_layers"]:
        H = lp["w_hh"].shape[1]
        wir, wiz, win = (lp["w_ih"][i * H:(i + 1) * H].T for i in range(3))
        whr, whz, whn = (lp["w_hh"][i * H:(i + 1) * H].T for i in range(3))
        b_ih, b_hh = lp["b_ih"], lp["b_hh"]

        def step(h, x_t):
            r = jax.nn.sigmoid(dot(x_t, wir) + b_ih[:H] + dot(h, whr) + b_hh[:H])
            z = jax.nn.sigmoid(dot(x_t, wiz) + b_ih[H:2 * H] + dot(h, whz) + b_hh[H:2 * H])
            n = jnp.tanh(dot(x_t, win) + b_ih[2 * H:] + r * (dot(h, whn) + b_hh[2 * H:]))
            h_new = (1.0 - z) * n + z * h
            return h_new, h_new

        h0 = jnp.zeros((B, H), jnp.float32)
        h_fin, out_seq = lax.scan(step, h0, layer_in)
        finals.append(h_fin)
        layer_in = out_seq
    hn = jnp.concatenate(finals, axis=0)
    h = jnp.maximum(hn, 0.0)
    h1 = jnp.maximum(dot(h, params["fc1_w"].T) + params["fc1_b"], 0.0)
    return dot(h1, params["fc_w"].T) + params["fc_b"]


# ----------------------------------------------------------------------------
if __name__ == "__main__":
    num_classes = 4
    input_size = 16
    hidden_size = 32
    num_layers = 2
    seq_length = 8
    batch = 2

    key = jax.random.PRNGKey(0)
    key, pkey, xkey = jax.random.split(key, 3)
    params = init_params(pkey, num_classes, input_size, hidden_size, num_layers)
    x = jax.random.normal(xkey, (batch, seq_length, input_size), jnp.float32)

    fwd = jax.jit(gru_model_forward)
    out = jax.block_until_ready(fwd(params, x))
    assert out.shape == (num_layers * batch, num_classes), out.shape

    ref = jax.block_until_ready(reference_forward(params, x))
    # Tolerance loosened vs. 1e-4: the kernel now uses default (single-pass bf16)
    # MXU precision per the perf review, the reference stays f32/HIGHEST.
    assert jnp.allclose(out, ref, atol=2e-2, rtol=2e-2), (out, ref)

    print("KERNEL_OK")
</pallas_src>

<mosaic_0001>
module attributes {stable_mosaic.version = 11 : i64} {
  func.func @kernel(%arg0: i32, %arg1: memref<8x2x96xf32, #tpu.memory_space<vmem>>, %arg2: memref<32x96xf32, #tpu.memory_space<vmem>>, %arg3: memref<1x96xf32, #tpu.memory_space<vmem>>, %arg4: memref<32x96xf32, #tpu.memory_space<vmem>>, %arg5: memref<1x96xf32, #tpu.memory_space<vmem>>, %arg6: memref<32x96xf32, #tpu.memory_space<vmem>>, %arg7: memref<1x96xf32, #tpu.memory_space<vmem>>, %arg8: memref<32x128xf32, #tpu.memory_space<vmem>>, %arg9: memref<1x128xf32, #tpu.memory_space<vmem>>, %arg10: memref<128x4xf32, #tpu.memory_space<vmem>>, %arg11: memref<1x4xf32, #tpu.memory_space<vmem>>, %arg12: memref<4x4xf32, #tpu.memory_space<vmem>>) attributes {dimension_semantics = [#tpu.dimension_semantics<arbitrary>], iteration_bounds = array<i64: 1>, scalar_prefetch = 0 : i64, scratch_operands = 0 : i64, tpu.core_type = #tpu.core_type<tc>, window_params = [{pipeline_mode = #tpu.pipeline_mode<synchronous>, transform_indices = @transform_0, window_bounds = array<i64: 8, 2, 96>}, {pipeline_mode = #tpu.pipeline_mode<synchronous>, transform_indices = @transform_1, window_bounds = array<i64: 32, 96>}, {pipeline_mode = #tpu.pipeline_mode<synchronous>, transform_indices = @transform_2, window_bounds = array<i64: 1, 96>}, {pipeline_mode = #tpu.pipeline_mode<synchronous>, transform_indices = @transform_3, window_bounds = array<i64: 32, 96>}, {pipeline_mode = #tpu.pipeline_mode<synchronous>, transform_indices = @transform_4, window_bounds = array<i64: 1, 96>}, {pipeline_mode = #tpu.pipeline_mode<synchronous>, transform_indices = @transform_5, window_bounds = array<i64: 32, 96>}, {pipeline_mode = #tpu.pipeline_mode<synchronous>, transform_indices = @transform_6, window_bounds = array<i64: 1, 96>}, {pipeline_mode = #tpu.pipeline_mode<synchronous>, transform_indices = @transform_7, window_bounds = array<i64: 32, 128>}, {pipeline_mode = #tpu.pipeline_mode<synchronous>, transform_indices = @transform_8, window_bounds = array<i64: 1, 128>}, {pipeline_mode = #tpu.pipeline_mode<synchronous>, transform_indices = @transform_9, window_bounds = array<i64: 128, 4>}, {pipeline_mode = #tpu.pipeline_mode<synchronous>, transform_indices = @transform_10, window_bounds = array<i64: 1, 4>}, {pipeline_mode = #tpu.pipeline_mode<synchronous>, transform_indices = @transform_11, window_bounds = array<i64: 4, 4>}]} {
    %c0 = arith.constant 0 : index
    %c0_0 = arith.constant 0 : index
    %c0_1 = arith.constant 0 : index
    %0 = vector.load %arg1[%c0, %c0_0, %c0_1] : memref<8x2x96xf32, #tpu.memory_space<vmem>>, vector<1x2x96xf32>
    %1 = vector.shape_cast %0 : vector<1x2x96xf32> to vector<2x96xf32>
    %c1 = arith.constant 1 : index
    %c0_2 = arith.constant 0 : index
    %c0_3 = arith.constant 0 : index
    %2 = vector.load %arg1[%c1, %c0_2, %c0_3] : memref<8x2x96xf32, #tpu.memory_space<vmem>>, vector<1x2x96xf32>
    %3 = vector.shape_cast %2 : vector<1x2x96xf32> to vector<2x96xf32>
    %c2 = arith.constant 2 : index
    %c0_4 = arith.constant 0 : index
    %c0_5 = arith.constant 0 : index
    %4 = vector.load %arg1[%c2, %c0_4, %c0_5] : memref<8x2x96xf32, #tpu.memory_space<vmem>>, vector<1x2x96xf32>
    %5 = vector.shape_cast %4 : vector<1x2x96xf32> to vector<2x96xf32>
    %c3 = arith.constant 3 : index
    %c0_6 = arith.constant 0 : index
    %c0_7 = arith.constant 0 : index
    %6 = vector.load %arg1[%c3, %c0_6, %c0_7] : memref<8x2x96xf32, #tpu.memory_space<vmem>>, vector<1x2x96xf32>
    %7 = vector.shape_cast %6 : vector<1x2x96xf32> to vector<2x96xf32>
    %c4 = arith.constant 4 : index
    %c0_8 = arith.constant 0 : index
    %c0_9 = arith.constant 0 : index
    %8 = vector.load %arg1[%c4, %c0_8, %c0_9] : memref<8x2x96xf32, #tpu.memory_space<vmem>>, vector<1x2x96xf32>
    %9 = vector.shape_cast %8 : vector<1x2x96xf32> to vector<2x96xf32>
    %c5 = arith.constant 5 : index
    %c0_10 = arith.constant 0 : index
    %c0_11 = arith.constant 0 : index
    %10 = vector.load %arg1[%c5, %c0_10, %c0_11] : memref<8x2x96xf32, #tpu.memory_space<vmem>>, vector<1x2x96xf32>
    %11 = vector.shape_cast %10 : vector<1x2x96xf32> to vector<2x96xf32>
    %c6 = arith.constant 6 : index
    %c0_12 = arith.constant 0 : index
    %c0_13 = arith.constant 0 : index
    %12 = vector.load %arg1[%c6, %c0_12, %c0_13] : memref<8x2x96xf32, #tpu.memory_space<vmem>>, vector<1x2x96xf32>
    %13 = vector.shape_cast %12 : vector<1x2x96xf32> to vector<2x96xf32>
    %c7 = arith.constant 7 : index
    %c0_14 = arith.constant 0 : index
    %c0_15 = arith.constant 0 : index
    %14 = vector.load %arg1[%c7, %c0_14, %c0_15] : memref<8x2x96xf32, #tpu.memory_space<vmem>>, vector<1x2x96xf32>
    %15 = vector.shape_cast %14 : vector<1x2x96xf32> to vector<2x96xf32>
    %c0_16 = arith.constant 0 : index
    %c0_17 = arith.constant 0 : index
    %16 = vector.load %arg2[%c0_16, %c0_17] : memref<32x96xf32, #tpu.memory_space<vmem>>, vector<32x96xf32>
    %c0_18 = arith.constant 0 : index
    %c0_19 = arith.constant 0 : index
    %17 = vector.load %arg3[%c0_18, %c0_19] : memref<1x96xf32, #tpu.memory_space<vmem>>, vector<1x96xf32>
    %cst = arith.constant 0.000000e+00 : f32
    %18 = vector.broadcast %cst : f32 to vector<2x32xf32>
    %cst_20 = arith.constant dense<0.000000e+00> : vector<2x96xf32>
    %19 = tpu.matmul %18, %16, %cst_20 {dimension_numbers = #tpu.dot_dimension_numbers<[1], [0], [0], [1], [0, 0, 1, 1], [], []>} : vector<2x32xf32>, vector<32x96xf32>, vector<2x96xf32> -> vector<2x96xf32>
    %20 = vector.broadcast %17 : vector<1x96xf32> to vector<2x96xf32>
    %21 = arith.addf %19, %20 : vector<2x96xf32>
    %22 = vector.extract_strided_slice %1 {offsets = [0, 0], sizes = [2, 32], strides = [1, 1]} : vector<2x96xf32> to vector<2x32xf32>
    %23 = vector.extract_strided_slice %21 {offsets = [0, 0], sizes = [2, 32], strides = [1, 1]} : vector<2x96xf32> to vector<2x32xf32>
    %24 = arith.addf %22, %23 : vector<2x32xf32>
    %25 = arith.negf %24 : vector<2x32xf32>
    %26 = math.exp %25 : vector<2x32xf32>
    %cst_21 = arith.constant 1.000000e+00 : f32
    %27 = vector.broadcast %cst_21 : f32 to vector<2x32xf32>
    %28 = arith.addf %27, %26 : vector<2x32xf32>
    %29 = arith.divf %27, %28 : vector<2x32xf32>
    %30 = vector.extract_strided_slice %1 {offsets = [0, 32], sizes = [2, 32], strides = [1, 1]} : vector<2x96xf32> to vector<2x32xf32>
    %31 = vector.extract_strided_slice %21 {offsets = [0, 32], sizes = [2, 32], strides = [1, 1]} : vector<2x96xf32> to vector<2x32xf32>
    %32 = arith.addf %30, %31 : vector<2x32xf32>
    %33 = arith.negf %32 : vector<2x32xf32>
    %34 = math.exp %33 : vector<2x32xf32>
    %cst_22 = arith.constant 1.000000e+00 : f32
    %35 = vector.broadcast %cst_22 : f32 to vector<2x32xf32>
    %36 = arith.addf %35, %34 : vector<2x32xf32>
    %37 = arith.divf %35, %36 : vector<2x32xf32>
    %38 = vector.extract_strided_slice %1 {offsets = [0, 64], sizes = [2, 32], strides = [1, 1]} : vector<2x96xf32> to vector<2x32xf32>
    %39 = vector.extract_strided_slice %21 {offsets = [0, 64], sizes = [2, 32], strides = [1, 1]} : vector<2x96xf32> to vector<2x32xf32>
    %40 = arith.mulf %29, %39 : vector<2x32xf32>
    %41 = arith.addf %38, %40 : vector<2x32xf32>
    %42 = math.tanh %41 : vector<2x32xf32>
    %cst_23 = arith.constant 1.000000e+00 : f32
    %43 = vector.broadcast %cst_23 : f32 to vector<2x32xf32>
    %44 = arith.subf %43, %37 : vector<2x32xf32>
    %45 = arith.mulf %44, %42 : vector<2x32xf32>
    %46 = arith.mulf %37, %18 : vector<2x32xf32>
    %47 = arith.addf %45, %46 : vector<2x32xf32>
    %cst_24 = arith.constant dense<0.000000e+00> : vector<2x96xf32>
    %48 = tpu.matmul %47, %16, %cst_24 {dimension_numbers = #tpu.dot_dimension_numbers<[1], [0], [0], [1], [0, 0, 1, 1], [], []>} : vector<2x32xf32>, vector<32x96xf32>, vector<2x96xf32> -> vector<2x96xf32>
    %49 = vector.broadcast %17 : vector<1x96xf32> to vector<2x96xf32>
    %50 = arith.addf %48, %49 : vector<2x96xf32>
    %51 = vector.extract_strided_slice %3 {offsets = [0, 0], sizes = [2, 32], strides = [1, 1]} : vector<2x96xf32> to vector<2x32xf32>
    %52 = vector.extract_strided_slice %50 {offsets = [0, 0], sizes = [2, 32], strides = [1, 1]} : vector<2x96xf32> to vector<2x32xf32>
    %53 = arith.addf %51, %52 : vector<2x32xf32>
    %54 = arith.negf %53 : vector<2x32xf32>
    %55 = math.exp %54 : vector<2x32xf32>
    %cst_25 = arith.constant 1.000000e+00 : f32
    %56 = vector.broadcast %cst_25 : f32 to vector<2x32xf32>
    %57 = arith.addf %56, %55 : vector<2x32xf32>
    %58 = arith.divf %56, %57 : vector<2x32xf32>
    %59 = vector.extract_strided_slice %3 {offsets = [0, 32], sizes = [2, 32], strides = [1, 1]} : vector<2x96xf32> to vector<2x32xf32>
    %60 = vector.extract_strided_slice %50 {offsets = [0, 32], sizes = [2, 32], strides = [1, 1]} : vector<2x96xf32> to vector<2x32xf32>
    %61 = arith.addf %59, %60 : vector<2x32xf32>
    %62 = arith.negf %61 : vector<2x32xf32>
    %63 = math.exp %62 : vector<2x32xf32>
    %cst_26 = arith.constant 1.000000e+00 : f32
    %64 = vector.broadcast %cst_26 : f32 to vector<2x32xf32>
    %65 = arith.addf %64, %63 : vector<2x32xf32>
    %66 = arith.divf %64, %65 : vector<2x32xf32>
    %67 = vector.extract_strided_slice %3 {offsets = [0, 64], sizes = [2, 32], strides = [1, 1]} : vector<2x96xf32> to vector<2x32xf32>
    %68 = vector.extract_strided_slice %50 {offsets = [0, 64], sizes = [2, 32], strides = [1, 1]} : vector<2x96xf32> to vector<2x32xf32>
    %69 = arith.mulf %58, %68 : vector<2x32xf32>
    %70 = arith.addf %67, %69 : vector<2x32xf32>
    %71 = math.tanh %70 : vector<2x32xf32>
    %cst_27 = arith.constant 1.000000e+00 : f32
    %72 = vector.broadcast %cst_27 : f32 to vector<2x32xf32>
    %73 = arith.subf %72, %66 : vector<2x32xf32>
    %74 = arith.mulf %73, %71 : vector<2x32xf32>
    %75 = arith.mulf %66, %47 : vector<2x32xf32>
    %76 = arith.addf %74, %75 : vector<2x32xf32>
    %cst_28 = arith.constant dense<0.000000e+00> : vector<2x96xf32>
    %77 = tpu.matmul %76, %16, %cst_28 {dimension_numbers = #tpu.dot_dimension_numbers<[1], [0], [0], [1], [0, 0, 1, 1], [], []>} : vector<2x32xf32>, vector<32x96xf32>, vector<2x96xf32> -> vector<2x96xf32>
    %78 = vector.broadcast %17 : vector<1x96xf32> to vector<2x96xf32>
    %79 = arith.addf %77, %78 : vector<2x96xf32>
    %80 = vector.extract_strided_slice %5 {offsets = [0, 0], sizes = [2, 32], strides = [1, 1]} : vector<2x96xf32> to vector<2x32xf32>
    %81 = vector.extract_strided_slice %79 {offsets = [0, 0], sizes = [2, 32], strides = [1, 1]} : vector<2x96xf32> to vector<2x32xf32>
    %82 = arith.addf %80, %81 : vector<2x32xf32>
    %83 = arith.negf %82 : vector<2x32xf32>
    %84 = math.exp %83 : vector<2x32xf32>
    %cst_29 = arith.constant 1.000000e+00 : f32
    %85 = vector.broadcast %cst_29 : f32 to vector<2x32xf32>
    %86 = arith.addf %85, %84 : vector<2x32xf32>
    %87 = arith.divf %85, %86 : vector<2x32xf32>
    %88 = vector.extract_strided_slice %5 {offsets = [0, 32], sizes = [2, 32], strides = [1, 1]} : vector<2x96xf32> to vector<2x32xf32>
    %89 = vector.extract_strided_slice %79 {offsets = [0, 32], sizes = [2, 32], strides = [1, 1]} : vector<2x96xf32> to vector<2x32xf32>
    %90 = arith.addf %88, %89 : vector<2x32xf32>
    %91 = arith.negf %90 : vector<2x32xf32>
    %92 = math.exp %91 : vector<2x32xf32>
    %cst_30 = arith.constant 1.000000e+00 : f32
    %93 = vector.broadcast %cst_30 : f32 to vector<2x32xf32>
    %94 = arith.addf %93, %92 : vector<2x32xf32>
    %95 = arith.divf %93, %94 : vector<2x32xf32>
    %96 = vector.extract_strided_slice %5 {offsets = [0, 64], sizes = [2, 32], strides = [1, 1]} : vector<2x96xf32> to vector<2x32xf32>
    %97 = vector.extract_strided_slice %79 {offsets = [0, 64], sizes = [2, 32], strides = [1, 1]} : vector<2x96xf32> to vector<2x32xf32>
    %98 = arith.mulf %87, %97 : vector<2x32xf32>
    %99 = arith.addf %96, %98 : vector<2x32xf32>
    %100 = math.tanh %99 : vector<2x32xf32>
    %cst_31 = arith.constant 1.000000e+00 : f32
    %101 = vector.broadcast %cst_31 : f32 to vector<2x32xf32>
    %102 = arith.subf %101, %95 : vector<2x32xf32>
    %103 = arith.mulf %102, %100 : vector<2x32xf32>
    %104 = arith.mulf %95, %76 : vector<2x32xf32>
    %105 = arith.addf %103, %104 : vector<2x32xf32>
    %cst_32 = arith.constant dense<0.000000e+00> : vector<2x96xf32>
    %106 = tpu.matmul %105, %16, %cst_32 {dimension_numbers = #tpu.dot_dimension_numbers<[1], [0], [0], [1], [0, 0, 1, 1], [], []>} : vector<2x32xf32>, vector<32x96xf32>, vector<2x96xf32> -> vector<2x96xf32>
    %107 = vector.broadcast %17 : vector<1x96xf32> to vector<2x96xf32>
    %108 = arith.addf %106, %107 : vector<2x96xf32>
    %109 = vector.extract_strided_slice %7 {offsets = [0, 0], sizes = [2, 32], strides = [1, 1]} : vector<2x96xf32> to vector<2x32xf32>
    %110 = vector.extract_strided_slice %108 {offsets = [0, 0], sizes = [2, 32], strides = [1, 1]} : vector<2x96xf32> to vector<2x32xf32>
    %111 = arith.addf %109, %110 : vector<2x32xf32>
    %112 = arith.negf %111 : vector<2x32xf32>
    %113 = math.exp %112 : vector<2x32xf32>
    %cst_33 = arith.constant 1.000000e+00 : f32
    %114 = vector.broadcast %cst_33 : f32 to vector<2x32xf32>
    %115 = arith.addf %114, %113 : vector<2x32xf32>
    %116 = arith.divf %114, %115 : vector<2x32xf32>
    %117 = vector.extract_strided_slice %7 {offsets = [0, 32], sizes = [2, 32], strides = [1, 1]} : vector<2x96xf32> to vector<2x32xf32>
    %118 = vector.extract_strided_slice %108 {offsets = [0, 32], sizes = [2, 32], strides = [1, 1]} : vector<2x96xf32> to vector<2x32xf32>
    %119 = arith.addf %117, %118 : vector<2x32xf32>
    %120 = arith.negf %119 : vector<2x32xf32>
    %121 = math.exp %120 : vector<2x32xf32>
    %cst_34 = arith.constant 1.000000e+00 : f32
    %122 = vector.broadcast %cst_34 : f32 to vector<2x32xf32>
    %123 = arith.addf %122, %121 : vector<2x32xf32>
    %124 = arith.divf %122, %123 : vector<2x32xf32>
    %125 = vector.extract_strided_slice %7 {offsets = [0, 64], sizes = [2, 32], strides = [1, 1]} : vector<2x96xf32> to vector<2x32xf32>
    %126 = vector.extract_strided_slice %108 {offsets = [0, 64], sizes = [2, 32], strides = [1, 1]} : vector<2x96xf32> to vector<2x32xf32>
    %127 = arith.mulf %116, %126 : vector<2x32xf32>
    %128 = arith.addf %125, %127 : vector<2x32xf32>
    %129 = math.tanh %128 : vector<2x32xf32>
    %cst_35 = arith.constant 1.000000e+00 : f32
    %130 = vector.broadcast %cst_35 : f32 to vector<2x32xf32>
    %131 = arith.subf %130, %124 : vector<2x32xf32>
    %132 = arith.mulf %131, %129 : vector<2x32xf32>
    %133 = arith.mulf %124, %105 : vector<2x32xf32>
    %134 = arith.addf %132, %133 : vector<2x32xf32>
    %cst_36 = arith.constant dense<0.000000e+00> : vector<2x96xf32>
    %135 = tpu.matmul %134, %16, %cst_36 {dimension_numbers = #tpu.dot_dimension_numbers<[1], [0], [0], [1], [0, 0, 1, 1], [], []>} : vector<2x32xf32>, vector<32x96xf32>, vector<2x96xf32> -> vector<2x96xf32>
    %136 = vector.broadcast %17 : vector<1x96xf32> to vector<2x96xf32>
    %137 = arith.addf %135, %136 : vector<2x96xf32>
    %138 = vector.extract_strided_slice %9 {offsets = [0, 0], sizes = [2, 32], strides = [1, 1]} : vector<2x96xf32> to vector<2x32xf32>
    %139 = vector.extract_strided_slice %137 {offsets = [0, 0], sizes = [2, 32], strides = [1, 1]} : vector<2x96xf32> to vector<2x32xf32>
    %140 = arith.addf %138, %139 : vector<2x32xf32>
    %141 = arith.negf %140 : vector<2x32xf32>
    %142 = math.exp %141 : vector<2x32xf32>
    %cst_37 = arith.constant 1.000000e+00 : f32
    %143 = vector.broadcast %cst_37 : f32 to vector<2x32xf32>
    %144 = arith.addf %143, %142 : vector<2x32xf32>
    %145 = arith.divf %143, %144 : vector<2x32xf32>
    %146 = vector.extract_strided_slice %9 {offsets = [0, 32], sizes = [2, 32], strides = [1, 1]} : vector<2x96xf32> to vector<2x32xf32>
    %147 = vector.extract_strided_slice %137 {offsets = [0, 32], sizes = [2, 32], strides = [1, 1]} : vector<2x96xf32> to vector<2x32xf32>
    %148 = arith.addf %146, %147 : vector<2x32xf32>
    %149 = arith.negf %148 : vector<2x32xf32>
    %150 = math.exp %149 : vector<2x32xf32>
    %cst_38 = arith.constant 1.000000e+00 : f32
    %151 = vector.broadcast %cst_38 : f32 to vector<2x32xf32>
    %152 = arith.addf %151, %150 : vector<2x32xf32>
    %153 = arith.divf %151, %152 : vector<2x32xf32>
    %154 = vector.extract_strided_slice %9 {offsets = [0, 64], sizes = [2, 32], strides = [1, 1]} : vector<2x96xf32> to vector<2x32xf32>
    %155 = vector.extract_strided_slice %137 {offsets = [0, 64], sizes = [2, 32], strides = [1, 1]} : vector<2x96xf32> to vector<2x32xf32>
    %156 = arith.mulf %145, %155 : vector<2x32xf32>
    %157 = arith.addf %154, %156 : vector<2x32xf32>
    %158 = math.tanh %157 : vector<2x32xf32>
    %cst_39 = arith.constant 1.000000e+00 : f32
    %159 = vector.broadcast %cst_39 : f32 to vector<2x32xf32>
    %160 = arith.subf %159, %153 : vector<2x32xf32>
    %161 = arith.mulf %160, %158 : vector<2x32xf32>
    %162 = arith.mulf %153, %134 : vector<2x32xf32>
    %163 = arith.addf %161, %162 : vector<2x32xf32>
    %cst_40 = arith.constant dense<0.000000e+00> : vector<2x96xf32>
    %164 = tpu.matmul %163, %16, %cst_40 {dimension_numbers = #tpu.dot_dimension_numbers<[1], [0], [0], [1], [0, 0, 1, 1], [], []>} : vector<2x32xf32>, vector<32x96xf32>, vector<2x96xf32> -> vector<2x96xf32>
    %165 = vector.broadcast %17 : vector<1x96xf32> to vector<2x96xf32>
    %166 = arith.addf %164, %165 : vector<2x96xf32>
    %167 = vector.extract_strided_slice %11 {offsets = [0, 0], sizes = [2, 32], strides = [1, 1]} : vector<2x96xf32> to vector<2x32xf32>
    %168 = vector.extract_strided_slice %166 {offsets = [0, 0], sizes = [2, 32], strides = [1, 1]} : vector<2x96xf32> to vector<2x32xf32>
    %169 = arith.addf %167, %168 : vector<2x32xf32>
    %170 = arith.negf %169 : vector<2x32xf32>
    %171 = math.exp %170 : vector<2x32xf32>
    %cst_41 = arith.constant 1.000000e+00 : f32
    %172 = vector.broadcast %cst_41 : f32 to vector<2x32xf32>
    %173 = arith.addf %172, %171 : vector<2x32xf32>
    %174 = arith.divf %172, %173 : vector<2x32xf32>
    %175 = vector.extract_strided_slice %11 {offsets = [0, 32], sizes = [2, 32], strides = [1, 1]} : vector<2x96xf32> to vector<2x32xf32>
    %176 = vector.extract_strided_slice %166 {offsets = [0, 32], sizes = [2, 32], strides = [1, 1]} : vector<2x96xf32> to vector<2x32xf32>
    %177 = arith.addf %175, %176 : vector<2x32xf32>
    %178 = arith.negf %177 : vector<2x32xf32>
    %179 = math.exp %178 : vector<2x32xf32>
    %cst_42 = arith.constant 1.000000e+00 : f32
    %180 = vector.broadcast %cst_42 : f32 to vector<2x32xf32>
    %181 = arith.addf %180, %179 : vector<2x32xf32>
    %182 = arith.divf %180, %181 : vector<2x32xf32>
    %183 = vector.extract_strided_slice %11 {offsets = [0, 64], sizes = [2, 32], strides = [1, 1]} : vector<2x96xf32> to vector<2x32xf32>
    %184 = vector.extract_strided_slice %166 {offsets = [0, 64], sizes = [2, 32], strides = [1, 1]} : vector<2x96xf32> to vector<2x32xf32>
    %185 = arith.mulf %174, %184 : vector<2x32xf32>
    %186 = arith.addf %183, %185 : vector<2x32xf32>
    %187 = math.tanh %186 : vector<2x32xf32>
    %cst_43 = arith.constant 1.000000e+00 : f32
    %188 = vector.broadcast %cst_43 : f32 to vector<2x32xf32>
    %189 = arith.subf %188, %182 : vector<2x32xf32>
    %190 = arith.mulf %189, %187 : vector<2x32xf32>
    %191 = arith.mulf %182, %163 : vector<2x32xf32>
    %192 = arith.addf %190, %191 : vector<2x32xf32>
    %cst_44 = arith.constant dense<0.000000e+00> : vector<2x96xf32>
    %193 = tpu.matmul %192, %16, %cst_44 {dimension_numbers = #tpu.dot_dimension_numbers<[1], [0], [0], [1], [0, 0, 1, 1], [], []>} : vector<2x32xf32>, vector<32x96xf32>, vector<2x96xf32> -> vector<2x96xf32>
    %194 = vector.broadcast %17 : vector<1x96xf32> to vector<2x96xf32>
    %195 = arith.addf %193, %194 : vector<2x96xf32>
    %196 = vector.extract_strided_slice %13 {offsets = [0, 0], sizes = [2, 32], strides = [1, 1]} : vector<2x96xf32> to vector<2x32xf32>
    %197 = vector.extract_strided_slice %195 {offsets = [0, 0], sizes = [2, 32], strides = [1, 1]} : vector<2x96xf32> to vector<2x32xf32>
    %198 = arith.addf %196, %197 : vector<2x32xf32>
    %199 = arith.negf %198 : vector<2x32xf32>
    %200 = math.exp %199 : vector<2x32xf32>
    %cst_45 = arith.constant 1.000000e+00 : f32
    %201 = vector.broadcast %cst_45 : f32 to vector<2x32xf32>
    %202 = arith.addf %201, %200 : vector<2x32xf32>
    %203 = arith.divf %201, %202 : vector<2x32xf32>
    %204 = vector.extract_strided_slice %13 {offsets = [0, 32], sizes = [2, 32], strides = [1, 1]} : vector<2x96xf32> to vector<2x32xf32>
    %205 = vector.extract_strided_slice %195 {offsets = [0, 32], sizes = [2, 32], strides = [1, 1]} : vector<2x96xf32> to vector<2x32xf32>
    %206 = arith.addf %204, %205 : vector<2x32xf32>
    %207 = arith.negf %206 : vector<2x32xf32>
    %208 = math.exp %207 : vector<2x32xf32>
    %cst_46 = arith.constant 1.000000e+00 : f32
    %209 = vector.broadcast %cst_46 : f32 to vector<2x32xf32>
    %210 = arith.addf %209, %208 : vector<2x32xf32>
    %211 = arith.divf %209, %210 : vector<2x32xf32>
    %212 = vector.extract_strided_slice %13 {offsets = [0, 64], sizes = [2, 32], strides = [1, 1]} : vector<2x96xf32> to vector<2x32xf32>
    %213 = vector.extract_strided_slice %195 {offsets = [0, 64], sizes = [2, 32], strides = [1, 1]} : vector<2x96xf32> to vector<2x32xf32>
    %214 = arith.mulf %203, %213 : vector<2x32xf32>
    %215 = arith.addf %212, %214 : vector<2x32xf32>
    %216 = math.tanh %215 : vector<2x32xf32>
    %cst_47 = arith.constant 1.000000e+00 : f32
    %217 = vector.broadcast %cst_47 : f32 to vector<2x32xf32>
    %218 = arith.subf %217, %211 : vector<2x32xf32>
    %219 = arith.mulf %218, %216 : vector<2x32xf32>
    %220 = arith.mulf %211, %192 : vector<2x32xf32>
    %221 = arith.addf %219, %220 : vector<2x32xf32>
    %cst_48 = arith.constant dense<0.000000e+00> : vector<2x96xf32>
    %222 = tpu.matmul %221, %16, %cst_48 {dimension_numbers = #tpu.dot_dimension_numbers<[1], [0], [0], [1], [0, 0, 1, 1], [], []>} : vector<2x32xf32>, vector<32x96xf32>, vector<2x96xf32> -> vector<2x96xf32>
    %223 = vector.broadcast %17 : vector<1x96xf32> to vector<2x96xf32>
    %224 = arith.addf %222, %223 : vector<2x96xf32>
    %225 = vector.extract_strided_slice %15 {offsets = [0, 0], sizes = [2, 32], strides = [1, 1]} : vector<2x96xf32> to vector<2x32xf32>
    %226 = vector.extract_strided_slice %224 {offsets = [0, 0], sizes = [2, 32], strides = [1, 1]} : vector<2x96xf32> to vector<2x32xf32>
    %227 = arith.addf %225, %226 : vector<2x32xf32>
    %228 = arith.negf %227 : vector<2x32xf32>
    %229 = math.exp %228 : vector<2x32xf32>
    %cst_49 = arith.constant 1.000000e+00 : f32
    %230 = vector.broadcast %cst_49 : f32 to vector<2x32xf32>
    %231 = arith.addf %230, %229 : vector<2x32xf32>
    %232 = arith.divf %230, %231 : vector<2x32xf32>
    %233 = vector.extract_strided_slice %15 {offsets = [0, 32], sizes = [2, 32], strides = [1, 1]} : vector<2x96xf32> to vector<2x32xf32>
    %234 = vector.extract_strided_slice %224 {offsets = [0, 32], sizes = [2, 32], strides = [1, 1]} : vector<2x96xf32> to vector<2x32xf32>
    %235 = arith.addf %233, %234 : vector<2x32xf32>
    %236 = arith.negf %235 : vector<2x32xf32>
    %237 = math.exp %236 : vector<2x32xf32>
    %cst_50 = arith.constant 1.000000e+00 : f32
    %238 = vector.broadcast %cst_50 : f32 to vector<2x32xf32>
    %239 = arith.addf %238, %237 : vector<2x32xf32>
    %240 = arith.divf %238, %239 : vector<2x32xf32>
    %241 = vector.extract_strided_slice %15 {offsets = [0, 64], sizes = [2, 32], strides = [1, 1]} : vector<2x96xf32> to vector<2x32xf32>
    %242 = vector.extract_strided_slice %224 {offsets = [0, 64], sizes = [2, 32], strides = [1, 1]} : vector<2x96xf32> to vector<2x32xf32>
    %243 = arith.mulf %232, %242 : vector<2x32xf32>
    %244 = arith.addf %241, %243 : vector<2x32xf32>
    %245 = math.tanh %244 : vector<2x32xf32>
    %cst_51 = arith.constant 1.000000e+00 : f32
    %246 = vector.broadcast %cst_51 : f32 to vector<2x32xf32>
    %247 = arith.subf %246, %240 : vector<2x32xf32>
    %248 = arith.mulf %247, %245 : vector<2x32xf32>
    %249 = arith.mulf %240, %221 : vector<2x32xf32>
    %250 = arith.addf %248, %249 : vector<2x32xf32>
    %c0_52 = arith.constant 0 : index
    %c0_53 = arith.constant 0 : index
    %251 = vector.load %arg4[%c0_52, %c0_53] : memref<32x96xf32, #tpu.memory_space<vmem>>, vector<32x96xf32>
    %c0_54 = arith.constant 0 : index
    %c0_55 = arith.constant 0 : index
    %252 = vector.load %arg5[%c0_54, %c0_55] : memref<1x96xf32, #tpu.memory_space<vmem>>, vector<1x96xf32>
    %cst_56 = arith.constant dense<0.000000e+00> : vector<2x96xf32>
    %253 = tpu.matmul %47, %251, %cst_56 {dimension_numbers = #tpu.dot_dimension_numbers<[1], [0], [0], [1], [0, 0, 1, 1], [], []>} : vector<2x32xf32>, vector<32x96xf32>, vector<2x96xf32> -> vector<2x96xf32>
    %254 = vector.broadcast %252 : vector<1x96xf32> to vector<2x96xf32>
    %255 = arith.addf %253, %254 : vector<2x96xf32>
    %cst_57 = arith.constant dense<0.000000e+00> : vector<2x96xf32>
    %256 = tpu.matmul %76, %251, %cst_57 {dimension_numbers = #tpu.dot_dimension_numbers<[1], [0], [0], [1], [0, 0, 1, 1], [], []>} : vector<2x32xf32>, vector<32x96xf32>, vector<2x96xf32> -> vector<2x96xf32>
    %257 = vector.broadcast %252 : vector<1x96xf32> to vector<2x96xf32>
    %258 = arith.addf %256, %257 : vector<2x96xf32>
    %cst_58 = arith.constant dense<0.000000e+00> : vector<2x96xf32>
    %259 = tpu.matmul %105, %251, %cst_58 {dimension_numbers = #tpu.dot_dimension_numbers<[1], [0], [0], [1], [0, 0, 1, 1], [], []>} : vector<2x32xf32>, vector<32x96xf32>, vector<2x96xf32> -> vector<2x96xf32>
    %260 = vector.broadcast %252 : vector<1x96xf32> to vector<2x96xf32>
    %261 = arith.addf %259, %260 : vector<2x96xf32>
    %cst_59 = arith.constant dense<0.000000e+00> : vector<2x96xf32>
    %262 = tpu.matmul %134, %251, %cst_59 {dimension_numbers = #tpu.dot_dimension_numbers<[1], [0], [0], [1], [0, 0, 1, 1], [], []>} : vector<2x32xf32>, vector<32x96xf32>, vector<2x96xf32> -> vector<2x96xf32>
    %263 = vector.broadcast %252 : vector<1x96xf32> to vector<2x96xf32>
    %264 = arith.addf %262, %263 : vector<2x96xf32>
    %cst_60 = arith.constant dense<0.000000e+00> : vector<2x96xf32>
    %265 = tpu.matmul %163, %251, %cst_60 {dimension_numbers = #tpu.dot_dimension_numbers<[1], [0], [0], [1], [0, 0, 1, 1], [], []>} : vector<2x32xf32>, vector<32x96xf32>, vector<2x96xf32> -> vector<2x96xf32>
    %266 = vector.broadcast %252 : vector<1x96xf32> to vector<2x96xf32>
    %267 = arith.addf %265, %266 : vector<2x96xf32>
    %cst_61 = arith.constant dense<0.000000e+00> : vector<2x96xf32>
    %268 = tpu.matmul %192, %251, %cst_61 {dimension_numbers = #tpu.dot_dimension_numbers<[1], [0], [0], [1], [0, 0, 1, 1], [], []>} : vector<2x32xf32>, vector<32x96xf32>, vector<2x96xf32> -> vector<2x96xf32>
    %269 = vector.broadcast %252 : vector<1x96xf32> to vector<2x96xf32>
    %270 = arith.addf %268, %269 : vector<2x96xf32>
    %cst_62 = arith.constant dense<0.000000e+00> : vector<2x96xf32>
    %271 = tpu.matmul %221, %251, %cst_62 {dimension_numbers = #tpu.dot_dimension_numbers<[1], [0], [0], [1], [0, 0, 1, 1], [], []>} : vector<2x32xf32>, vector<32x96xf32>, vector<2x96xf32> -> vector<2x96xf32>
    %272 = vector.broadcast %252 : vector<1x96xf32> to vector<2x96xf32>
    %273 = arith.addf %271, %272 : vector<2x96xf32>
    %cst_63 = arith.constant dense<0.000000e+00> : vector<2x96xf32>
    %274 = tpu.matmul %250, %251, %cst_63 {dimension_numbers = #tpu.dot_dimension_numbers<[1], [0], [0], [1], [0, 0, 1, 1], [], []>} : vector<2x32xf32>, vector<32x96xf32>, vector<2x96xf32> -> vector<2x96xf32>
    %275 = vector.broadcast %252 : vector<1x96xf32> to vector<2x96xf32>
    %276 = arith.addf %274, %275 : vector<2x96xf32>
    %c0_64 = arith.constant 0 : index
    %c0_65 = arith.constant 0 : index
    %277 = vector.load %arg6[%c0_64, %c0_65] : memref<32x96xf32, #tpu.memory_space<vmem>>, vector<32x96xf32>
    %c0_66 = arith.constant 0 : index
    %c0_67 = arith.constant 0 : index
    %278 = vector.load %arg7[%c0_66, %c0_67] : memref<1x96xf32, #tpu.memory_space<vmem>>, vector<1x96xf32>
    %cst_68 = arith.constant 0.000000e+00 : f32
    %279 = vector.broadcast %cst_68 : f32 to vector<2x32xf32>
    %cst_69 = arith.constant dense<0.000000e+00> : vector<2x96xf32>
    %280 = tpu.matmul %279, %277, %cst_69 {dimension_numbers = #tpu.dot_dimension_numbers<[1], [0], [0], [1], [0, 0, 1, 1], [], []>} : vector<2x32xf32>, vector<32x96xf32>, vector<2x96xf32> -> vector<2x96xf32>
    %281 = vector.broadcast %278 : vector<1x96xf32> to vector<2x96xf32>
    %282 = arith.addf %280, %281 : vector<2x96xf32>
    %283 = vector.extract_strided_slice %255 {offsets = [0, 0], sizes = [2, 32], strides = [1, 1]} : vector<2x96xf32> to vector<2x32xf32>
    %284 = vector.extract_strided_slice %282 {offsets = [0, 0], sizes = [2, 32], strides = [1, 1]} : vector<2x96xf32> to vector<2x32xf32>
    %285 = arith.addf %283, %284 : vector<2x32xf32>
    %286 = arith.negf %285 : vector<2x32xf32>
    %287 = math.exp %286 : vector<2x32xf32>
    %cst_70 = arith.constant 1.000000e+00 : f32
    %288 = vector.broadcast %cst_70 : f32 to vector<2x32xf32>
    %289 = arith.addf %288, %287 : vector<2x32xf32>
    %290 = arith.divf %288, %289 : vector<2x32xf32>
    %291 = vector.extract_strided_slice %255 {offsets = [0, 32], sizes = [2, 32], strides = [1, 1]} : vector<2x96xf32> to vector<2x32xf32>
    %292 = vector.extract_strided_slice %282 {offsets = [0, 32], sizes = [2, 32], strides = [1, 1]} : vector<2x96xf32> to vector<2x32xf32>
    %293 = arith.addf %291, %292 : vector<2x32xf32>
    %294 = arith.negf %293 : vector<2x32xf32>
    %295 = math.exp %294 : vector<2x32xf32>
    %cst_71 = arith.constant 1.000000e+00 : f32
    %296 = vector.broadcast %cst_71 : f32 to vector<2x32xf32>
    %297 = arith.addf %296, %295 : vector<2x32xf32>
    %298 = arith.divf %296, %297 : vector<2x32xf32>
    %299 = vector.extract_strided_slice %255 {offsets = [0, 64], sizes = [2, 32], strides = [1, 1]} : vector<2x96xf32> to vector<2x32xf32>
    %300 = vector.extract_strided_slice %282 {offsets = [0, 64], sizes = [2, 32], strides = [1, 1]} : vector<2x96xf32> to vector<2x32xf32>
    %301 = arith.mulf %290, %300 : vector<2x32xf32>
    %302 = arith.addf %299, %301 : vector<2x32xf32>
    %303 = math.tanh %302 : vector<2x32xf32>
    %cst_72 = arith.constant 1.000000e+00 : f32
    %304 = vector.broadcast %cst_72 : f32 to vector<2x32xf32>
    %305 = arith.subf %304, %298 : vector<2x32xf32>
    %306 = arith.mulf %305, %303 : vector<2x32xf32>
    %307 = arith.mulf %298, %279 : vector<2x32xf32>
    %308 = arith.addf %306, %307 : vector<2x32xf32>
    %cst_73 = arith.constant dense<0.000000e+00> : vector<2x96xf32>
    %309 = tpu.matmul %308, %277, %cst_73 {dimension_numbers = #tpu.dot_dimension_numbers<[1], [0], [0], [1], [0, 0, 1, 1], [], []>} : vector<2x32xf32>, vector<32x96xf32>, vector<2x96xf32> -> vector<2x96xf32>
    %310 = vector.broadcast %278 : vector<1x96xf32> to vector<2x96xf32>
    %311 = arith.addf %309, %310 : vector<2x96xf32>
    %312 = vector.extract_strided_slice %258 {offsets = [0, 0], sizes = [2, 32], strides = [1, 1]} : vector<2x96xf32> to vector<2x32xf32>
    %313 = vector.extract_strided_slice %311 {offsets = [0, 0], sizes = [2, 32], strides = [1, 1]} : vector<2x96xf32> to vector<2x32xf32>
    %314 = arith.addf %312, %313 : vector<2x32xf32>
    %315 = arith.negf %314 : vector<2x32xf32>
    %316 = math.exp %315 : vector<2x32xf32>
    %cst_74 = arith.constant 1.000000e+00 : f32
    %317 = vector.broadcast %cst_74 : f32 to vector<2x32xf32>
    %318 = arith.addf %317, %316 : vector<2x32xf32>
    %319 = arith.divf %317, %318 : vector<2x32xf32>
    %320 = vector.extract_strided_slice %258 {offsets = [0, 32], sizes = [2, 32], strides = [1, 1]} : vector<2x96xf32> to vector<2x32xf32>
    %321 = vector.extract_strided_slice %311 {offsets = [0, 32], sizes = [2, 32], strides = [1, 1]} : vector<2x96xf32> to vector<2x32xf32>
    %322 = arith.addf %320, %321 : vector<2x32xf32>
    %323 = arith.negf %322 : vector<2x32xf32>
    %324 = math.exp %323 : vector<2x32xf32>
    %cst_75 = arith.constant 1.000000e+00 : f32
    %325 = vector.broadcast %cst_75 : f32 to vector<2x32xf32>
    %326 = arith.addf %325, %324 : vector<2x32xf32>
    %327 = arith.divf %325, %326 : vector<2x32xf32>
    %328 = vector.extract_strided_slice %258 {offsets = [0, 64], sizes = [2, 32], strides = [1, 1]} : vector<2x96xf32> to vector<2x32xf32>
    %329 = vector.extract_strided_slice %311 {offsets = [0, 64], sizes = [2, 32], strides = [1, 1]} : vector<2x96xf32> to vector<2x32xf32>
    %330 = arith.mulf %319, %329 : vector<2x32xf32>
    %331 = arith.addf %328, %330 : vector<2x32xf32>
    %332 = math.tanh %331 : vector<2x32xf32>
    %cst_76 = arith.constant 1.000000e+00 : f32
    %333 = vector.broadcast %cst_76 : f32 to vector<2x32xf32>
    %334 = arith.subf %333, %327 : vector<2x32xf32>
    %335 = arith.mulf %334, %332 : vector<2x32xf32>
    %336 = arith.mulf %327, %308 : vector<2x32xf32>
    %337 = arith.addf %335, %336 : vector<2x32xf32>
    %cst_77 = arith.constant dense<0.000000e+00> : vector<2x96xf32>
    %338 = tpu.matmul %337, %277, %cst_77 {dimension_numbers = #tpu.dot_dimension_numbers<[1], [0], [0], [1], [0, 0, 1, 1], [], []>} : vector<2x32xf32>, vector<32x96xf32>, vector<2x96xf32> -> vector<2x96xf32>
    %339 = vector.broadcast %278 : vector<1x96xf32> to vector<2x96xf32>
    %340 = arith.addf %338, %339 : vector<2x96xf32>
    %341 = vector.extract_strided_slice %261 {offsets = [0, 0], sizes = [2, 32], strides = [1, 1]} : vector<2x96xf32> to vector<2x32xf32>
    %342 = vector.extract_strided_slice %340 {offsets = [0, 0], sizes = [2, 32], strides = [1, 1]} : vector<2x96xf32> to vector<2x32xf32>
    %343 = arith.addf %341, %342 : vector<2x32xf32>
    %344 = arith.negf %343 : vector<2x32xf32>
    %345 = math.exp %344 : vector<2x32xf32>
    %cst_78 = arith.constant 1.000000e+00 : f32
    %346 = vector.broadcast %cst_78 : f32 to vector<2x32xf32>
    %347 = arith.addf %346, %345 : vector<2x32xf32>
    %348 = arith.divf %346, %347 : vector<2x32xf32>
    %349 = vector.extract_strided_slice %261 {offsets = [0, 32], sizes = [2, 32], strides = [1, 1]} : vector<2x96xf32> to vector<2x32xf32>
    %350 = vector.extract_strided_slice %340 {offsets = [0, 32], sizes = [2, 32], strides = [1, 1]} : vector<2x96xf32> to vector<2x32xf32>
    %351 = arith.addf %349, %350 : vector<2x32xf32>
    %352 = arith.negf %351 : vector<2x32xf32>
    %353 = math.exp %352 : vector<2x32xf32>
    %cst_79 = arith.constant 1.000000e+00 : f32
    %354 = vector.broadcast %cst_79 : f32 to vector<2x32xf32>
    %355 = arith.addf %354, %353 : vector<2x32xf32>
    %356 = arith.divf %354, %355 : vector<2x32xf32>
    %357 = vector.extract_strided_slice %261 {offsets = [0, 64], sizes = [2, 32], strides = [1, 1]} : vector<2x96xf32> to vector<2x32xf32>
    %358 = vector.extract_strided_slice %340 {offsets = [0, 64], sizes = [2, 32], strides = [1, 1]} : vector<2x96xf32> to vector<2x32xf32>
    %359 = arith.mulf %348, %358 : vector<2x32xf32>
    %360 = arith.addf %357, %359 : vector<2x32xf32>
    %361 = math.tanh %360 : vector<2x32xf32>
    %cst_80 = arith.constant 1.000000e+00 : f32
    %362 = vector.broadcast %cst_80 : f32 to vector<2x32xf32>
    %363 = arith.subf %362, %356 : vector<2x32xf32>
    %364 = arith.mulf %363, %361 : vector<2x32xf32>
    %365 = arith.mulf %356, %337 : vector<2x32xf32>
    %366 = arith.addf %364, %365 : vector<2x32xf32>
    %cst_81 = arith.constant dense<0.000000e+00> : vector<2x96xf32>
    %367 = tpu.matmul %366, %277, %cst_81 {dimension_numbers = #tpu.dot_dimension_numbers<[1], [0], [0], [1], [0, 0, 1, 1], [], []>} : vector<2x32xf32>, vector<32x96xf32>, vector<2x96xf32> -> vector<2x96xf32>
    %368 = vector.broadcast %278 : vector<1x96xf32> to vector<2x96xf32>
    %369 = arith.addf %367, %368 : vector<2x96xf32>
    %370 = vector.extract_strided_slice %264 {offsets = [0, 0], sizes = [2, 32], strides = [1, 1]} : vector<2x96xf32> to vector<2x32xf32>
    %371 = vector.extract_strided_slice %369 {offsets = [0, 0], sizes = [2, 32], strides = [1, 1]} : vector<2x96xf32> to vector<2x32xf32>
    %372 = arith.addf %370, %371 : vector<2x32xf32>
    %373 = arith.negf %372 : vector<2x32xf32>
    %374 = math.exp %373 : vector<2x32xf32>
    %cst_82 = arith.constant 1.000000e+00 : f32
    %375 = vector.broadcast %cst_82 : f32 to vector<2x32xf32>
    %376 = arith.addf %375, %374 : vector<2x32xf32>
    %377 = arith.divf %375, %376 : vector<2x32xf32>
    %378 = vector.extract_strided_slice %264 {offsets = [0, 32], sizes = [2, 32], strides = [1, 1]} : vector<2x96xf32> to vector<2x32xf32>
    %379 = vector.extract_strided_slice %369 {offsets = [0, 32], sizes = [2, 32], strides = [1, 1]} : vector<2x96xf32> to vector<2x32xf32>
    %380 = arith.addf %378, %379 : vector<2x32xf32>
    %381 = arith.negf %380 : vector<2x32xf32>
    %382 = math.exp %381 : vector<2x32xf32>
    %cst_83 = arith.constant 1.000000e+00 : f32
    %383 = vector.broadcast %cst_83 : f32 to vector<2x32xf32>
    %384 = arith.addf %383, %382 : vector<2x32xf32>
    %385 = arith.divf %383, %384 : vector<2x32xf32>
    %386 = vector.extract_strided_slice %264 {offsets = [0, 64], sizes = [2, 32], strides = [1, 1]} : vector<2x96xf32> to vector<2x32xf32>
    %387 = vector.extract_strided_slice %369 {offsets = [0, 64], sizes = [2, 32], strides = [1, 1]} : vector<2x96xf32> to vector<2x32xf32>
    %388 = arith.mulf %377, %387 : vector<2x32xf32>
    %389 = arith.addf %386, %388 : vector<2x32xf32>
    %390 = math.tanh %389 : vector<2x32xf32>
    %cst_84 = arith.constant 1.000000e+00 : f32
    %391 = vector.broadcast %cst_84 : f32 to vector<2x32xf32>
    %392 = arith.subf %391, %385 : vector<2x32xf32>
    %393 = arith.mulf %392, %390 : vector<2x32xf32>
    %394 = arith.mulf %385, %366 : vector<2x32xf32>
    %395 = arith.addf %393, %394 : vector<2x32xf32>
    %cst_85 = arith.constant dense<0.000000e+00> : vector<2x96xf32>
    %396 = tpu.matmul %395, %277, %cst_85 {dimension_numbers = #tpu.dot_dimension_numbers<[1], [0], [0], [1], [0, 0, 1, 1], [], []>} : vector<2x32xf32>, vector<32x96xf32>, vector<2x96xf32> -> vector<2x96xf32>
    %397 = vector.broadcast %278 : vector<1x96xf32> to vector<2x96xf32>
    %398 = arith.addf %396, %397 : vector<2x96xf32>
    %399 = vector.extract_strided_slice %267 {offsets = [0, 0], sizes = [2, 32], strides = [1, 1]} : vector<2x96xf32> to vector<2x32xf32>
    %400 = vector.extract_strided_slice %398 {offsets = [0, 0], sizes = [2, 32], strides = [1, 1]} : vector<2x96xf32> to vector<2x32xf32>
    %401 = arith.addf %399, %400 : vector<2x32xf32>
    %402 = arith.negf %401 : vector<2x32xf32>
    %403 = math.exp %402 : vector<2x32xf32>
    %cst_86 = arith.constant 1.000000e+00 : f32
    %404 = vector.broadcast %cst_86 : f32 to vector<2x32xf32>
    %405 = arith.addf %404, %403 : vector<2x32xf32>
    %406 = arith.divf %404, %405 : vector<2x32xf32>
    %407 = vector.extract_strided_slice %267 {offsets = [0, 32], sizes = [2, 32], strides = [1, 1]} : vector<2x96xf32> to vector<2x32xf32>
    %408 = vector.extract_strided_slice %398 {offsets = [0, 32], sizes = [2, 32], strides = [1, 1]} : vector<2x96xf32> to vector<2x32xf32>
    %409 = arith.addf %407, %408 : vector<2x32xf32>
    %410 = arith.negf %409 : vector<2x32xf32>
    %411 = math.exp %410 : vector<2x32xf32>
    %cst_87 = arith.constant 1.000000e+00 : f32
    %412 = vector.broadcast %cst_87 : f32 to vector<2x32xf32>
    %413 = arith.addf %412, %411 : vector<2x32xf32>
    %414 = arith.divf %412, %413 : vector<2x32xf32>
    %415 = vector.extract_strided_slice %267 {offsets = [0, 64], sizes = [2, 32], strides = [1, 1]} : vector<2x96xf32> to vector<2x32xf32>
    %416 = vector.extract_strided_slice %398 {offsets = [0, 64], sizes = [2, 32], strides = [1, 1]} : vector<2x96xf32> to vector<2x32xf32>
    %417 = arith.mulf %406, %416 : vector<2x32xf32>
    %418 = arith.addf %415, %417 : vector<2x32xf32>
    %419 = math.tanh %418 : vector<2x32xf32>
    %cst_88 = arith.constant 1.000000e+00 : f32
    %420 = vector.broadcast %cst_88 : f32 to vector<2x32xf32>
    %421 = arith.subf %420, %414 : vector<2x32xf32>
    %422 = arith.mulf %421, %419 : vector<2x32xf32>
    %423 = arith.mulf %414, %395 : vector<2x32xf32>
    %424 = arith.addf %422, %423 : vector<2x32xf32>
    %cst_89 = arith.constant dense<0.000000e+00> : vector<2x96xf32>
    %425 = tpu.matmul %424, %277, %cst_89 {dimension_numbers = #tpu.dot_dimension_numbers<[1], [0], [0], [1], [0, 0, 1, 1], [], []>} : vector<2x32xf32>, vector<32x96xf32>, vector<2x96xf32> -> vector<2x96xf32>
    %426 = vector.broadcast %278 : vector<1x96xf32> to vector<2x96xf32>
    %427 = arith.addf %425, %426 : vector<2x96xf32>
    %428 = vector.extract_strided_slice %270 {offsets = [0, 0], sizes = [2, 32], strides = [1, 1]} : vector<2x96xf32> to vector<2x32xf32>
    %429 = vector.extract_strided_slice %427 {offsets = [0, 0], sizes = [2, 32], strides = [1, 1]} : vector<2x96xf32> to vector<2x32xf32>
    %430 = arith.addf %428, %429 : vector<2x32xf32>
    %431 = arith.negf %430 : vector<2x32xf32>
    %432 = math.exp %431 : vector<2x32xf32>
    %cst_90 = arith.constant 1.000000e+00 : f32
    %433 = vector.broadcast %cst_90 : f32 to vector<2x32xf32>
    %434 = arith.addf %433, %432 : vector<2x32xf32>
    %435 = arith.divf %433, %434 : vector<2x32xf32>
    %436 = vector.extract_strided_slice %270 {offsets = [0, 32], sizes = [2, 32], strides = [1, 1]} : vector<2x96xf32> to vector<2x32xf32>
    %437 = vector.extract_strided_slice %427 {offsets = [0, 32], sizes = [2, 32], strides = [1, 1]} : vector<2x96xf32> to vector<2x32xf32>
    %438 = arith.addf %436, %437 : vector<2x32xf32>
    %439 = arith.negf %438 : vector<2x32xf32>
    %440 = math.exp %439 : vector<2x32xf32>
    %cst_91 = arith.constant 1.000000e+00 : f32
    %441 = vector.broadcast %cst_91 : f32 to vector<2x32xf32>
    %442 = arith.addf %441, %440 : vector<2x32xf32>
    %443 = arith.divf %441, %442 : vector<2x32xf32>
    %444 = vector.extract_strided_slice %270 {offsets = [0, 64], sizes = [2, 32], strides = [1, 1]} : vector<2x96xf32> to vector<2x32xf32>
    %445 = vector.extract_strided_slice %427 {offsets = [0, 64], sizes = [2, 32], strides = [1, 1]} : vector<2x96xf32> to vector<2x32xf32>
    %446 = arith.mulf %435, %445 : vector<2x32xf32>
    %447 = arith.addf %444, %446 : vector<2x32xf32>
    %448 = math.tanh %447 : vector<2x32xf32>
    %cst_92 = arith.constant 1.000000e+00 : f32
    %449 = vector.broadcast %cst_92 : f32 to vector<2x32xf32>
    %450 = arith.subf %449, %443 : vector<2x32xf32>
    %451 = arith.mulf %450, %448 : vector<2x32xf32>
    %452 = arith.mulf %443, %424 : vector<2x32xf32>
    %453 = arith.addf %451, %452 : vector<2x32xf32>
    %cst_93 = arith.constant dense<0.000000e+00> : vector<2x96xf32>
    %454 = tpu.matmul %453, %277, %cst_93 {dimension_numbers = #tpu.dot_dimension_numbers<[1], [0], [0], [1], [0, 0, 1, 1], [], []>} : vector<2x32xf32>, vector<32x96xf32>, vector<2x96xf32> -> vector<2x96xf32>
    %455 = vector.broadcast %278 : vector<1x96xf32> to vector<2x96xf32>
    %456 = arith.addf %454, %455 : vector<2x96xf32>
    %457 = vector.extract_strided_slice %273 {offsets = [0, 0], sizes = [2, 32], strides = [1, 1]} : vector<2x96xf32> to vector<2x32xf32>
    %458 = vector.extract_strided_slice %456 {offsets = [0, 0], sizes = [2, 32], strides = [1, 1]} : vector<2x96xf32> to vector<2x32xf32>
    %459 = arith.addf %457, %458 : vector<2x32xf32>
    %460 = arith.negf %459 : vector<2x32xf32>
    %461 = math.exp %460 : vector<2x32xf32>
    %cst_94 = arith.constant 1.000000e+00 : f32
    %462 = vector.broadcast %cst_94 : f32 to vector<2x32xf32>
    %463 = arith.addf %462, %461 : vector<2x32xf32>
    %464 = arith.divf %462, %463 : vector<2x32xf32>
    %465 = vector.extract_strided_slice %273 {offsets = [0, 32], sizes = [2, 32], strides = [1, 1]} : vector<2x96xf32> to vector<2x32xf32>
    %466 = vector.extract_strided_slice %456 {offsets = [0, 32], sizes = [2, 32], strides = [1, 1]} : vector<2x96xf32> to vector<2x32xf32>
    %467 = arith.addf %465, %466 : vector<2x32xf32>
    %468 = arith.negf %467 : vector<2x32xf32>
    %469 = math.exp %468 : vector<2x32xf32>
    %cst_95 = arith.constant 1.000000e+00 : f32
    %470 = vector.broadcast %cst_95 : f32 to vector<2x32xf32>
    %471 = arith.addf %470, %469 : vector<2x32xf32>
    %472 = arith.divf %470, %471 : vector<2x32xf32>
    %473 = vector.extract_strided_slice %273 {offsets = [0, 64], sizes = [2, 32], strides = [1, 1]} : vector<2x96xf32> to vector<2x32xf32>
    %474 = vector.extract_strided_slice %456 {offsets = [0, 64], sizes = [2, 32], strides = [1, 1]} : vector<2x96xf32> to vector<2x32xf32>
    %475 = arith.mulf %464, %474 : vector<2x32xf32>
    %476 = arith.addf %473, %475 : vector<2x32xf32>
    %477 = math.tanh %476 : vector<2x32xf32>
    %cst_96 = arith.constant 1.000000e+00 : f32
    %478 = vector.broadcast %cst_96 : f32 to vector<2x32xf32>
    %479 = arith.subf %478, %472 : vector<2x32xf32>
    %480 = arith.mulf %479, %477 : vector<2x32xf32>
    %481 = arith.mulf %472, %453 : vector<2x32xf32>
    %482 = arith.addf %480, %481 : vector<2x32xf32>
    %cst_97 = arith.constant dense<0.000000e+00> : vector<2x96xf32>
    %483 = tpu.matmul %482, %277, %cst_97 {dimension_numbers = #tpu.dot_dimension_numbers<[1], [0], [0], [1], [0, 0, 1, 1], [], []>} : vector<2x32xf32>, vector<32x96xf32>, vector<2x96xf32> -> vector<2x96xf32>
    %484 = vector.broadcast %278 : vector<1x96xf32> to vector<2x96xf32>
    %485 = arith.addf %483, %484 : vector<2x96xf32>
    %486 = vector.extract_strided_slice %276 {offsets = [0, 0], sizes = [2, 32], strides = [1, 1]} : vector<2x96xf32> to vector<2x32xf32>
    %487 = vector.extract_strided_slice %485 {offsets = [0, 0], sizes = [2, 32], strides = [1, 1]} : vector<2x96xf32> to vector<2x32xf32>
    %488 = arith.addf %486, %487 : vector<2x32xf32>
    %489 = arith.negf %488 : vector<2x32xf32>
    %490 = math.exp %489 : vector<2x32xf32>
    %cst_98 = arith.constant 1.000000e+00 : f32
    %491 = vector.broadcast %cst_98 : f32 to vector<2x32xf32>
    %492 = arith.addf %491, %490 : vector<2x32xf32>
    %493 = arith.divf %491, %492 : vector<2x32xf32>
    %494 = vector.extract_strided_slice %276 {offsets = [0, 32], sizes = [2, 32], strides = [1, 1]} : vector<2x96xf32> to vector<2x32xf32>
    %495 = vector.extract_strided_slice %485 {offsets = [0, 32], sizes = [2, 32], strides = [1, 1]} : vector<2x96xf32> to vector<2x32xf32>
    %496 = arith.addf %494, %495 : vector<2x32xf32>
    %497 = arith.negf %496 : vector<2x32xf32>
    %498 = math.exp %497 : vector<2x32xf32>
    %cst_99 = arith.constant 1.000000e+00 : f32
    %499 = vector.broadcast %cst_99 : f32 to vector<2x32xf32>
    %500 = arith.addf %499, %498 : vector<2x32xf32>
    %501 = arith.divf %499, %500 : vector<2x32xf32>
    %502 = vector.extract_strided_slice %276 {offsets = [0, 64], sizes = [2, 32], strides = [1, 1]} : vector<2x96xf32> to vector<2x32xf32>
    %503 = vector.extract_strided_slice %485 {offsets = [0, 64], sizes = [2, 32], strides = [1, 1]} : vector<2x96xf32> to vector<2x32xf32>
    %504 = arith.mulf %493, %503 : vector<2x32xf32>
    %505 = arith.addf %502, %504 : vector<2x32xf32>
    %506 = math.tanh %505 : vector<2x32xf32>
    %cst_100 = arith.constant 1.000000e+00 : f32
    %507 = vector.broadcast %cst_100 : f32 to vector<2x32xf32>
    %508 = arith.subf %507, %501 : vector<2x32xf32>
    %509 = arith.mulf %508, %506 : vector<2x32xf32>
    %510 = arith.mulf %501, %482 : vector<2x32xf32>
    %511 = arith.addf %509, %510 : vector<2x32xf32>
    %c0_101 = arith.constant 0 : index
    %c0_102 = arith.constant 0 : index
    %512 = vector.load %arg8[%c0_101, %c0_102] : memref<32x128xf32, #tpu.memory_space<vmem>>, vector<32x128xf32>
    %c0_103 = arith.constant 0 : index
    %c0_104 = arith.constant 0 : index
    %513 = vector.load %arg9[%c0_103, %c0_104] : memref<1x128xf32, #tpu.memory_space<vmem>>, vector<1x128xf32>
    %c0_105 = arith.constant 0 : index
    %c0_106 = arith.constant 0 : index
    %514 = vector.load %arg10[%c0_105, %c0_106] : memref<128x4xf32, #tpu.memory_space<vmem>>, vector<128x4xf32>
    %c0_107 = arith.constant 0 : index
    %c0_108 = arith.constant 0 : index
    %515 = vector.load %arg11[%c0_107, %c0_108] : memref<1x4xf32, #tpu.memory_space<vmem>>, vector<1x4xf32>
    %cst_109 = arith.constant 0.000000e+00 : f32
    %516 = vector.broadcast %cst_109 : f32 to vector<2x32xf32>
    %517 = arith.maximumf %250, %516 : vector<2x32xf32>
    %cst_110 = arith.constant dense<0.000000e+00> : vector<2x128xf32>
    %518 = tpu.matmul %517, %512, %cst_110 {dimension_numbers = #tpu.dot_dimension_numbers<[1], [0], [0], [1], [0, 0, 1, 1], [], []>} : vector<2x32xf32>, vector<32x128xf32>, vector<2x128xf32> -> vector<2x128xf32>
    %519 = vector.broadcast %513 : vector<1x128xf32> to vector<2x128xf32>
    %520 = arith.addf %518, %519 : vector<2x128xf32>
    %cst_111 = arith.constant 0.000000e+00 : f32
    %521 = vector.broadcast %cst_111 : f32 to vector<2x128xf32>
    %522 = arith.maximumf %520, %521 : vector<2x128xf32>
    %cst_112 = arith.constant dense<0.000000e+00> : vector<2x4xf32>
    %523 = tpu.matmul %522, %514, %cst_112 {dimension_numbers = #tpu.dot_dimension_numbers<[1], [0], [0], [1], [0, 0, 1, 1], [], []>} : vector<2x128xf32>, vector<128x4xf32>, vector<2x4xf32> -> vector<2x4xf32>
    %524 = vector.broadcast %515 : vector<1x4xf32> to vector<2x4xf32>
    %525 = arith.addf %523, %524 : vector<2x4xf32>
    %c0_113 = arith.constant 0 : index
    %c0_114 = arith.constant 0 : index
    %526 = vector.load %arg12[%c0_113, %c0_114] : memref<4x4xf32, #tpu.memory_space<vmem>>, vector<2x4xf32>
    tpu.vector_store %arg12[%c0_113, %c0_114], %525 {strides = array<i32>} : memref<4x4xf32, #tpu.memory_space<vmem>>, vector<2x4xf32>,
    %cst_115 = arith.constant 0.000000e+00 : f32
    %527 = vector.broadcast %cst_115 : f32 to vector<2x32xf32>
    %528 = arith.maximumf %511, %527 : vector<2x32xf32>
    %cst_116 = arith.constant dense<0.000000e+00> : vector<2x128xf32>
    %529 = tpu.matmul %528, %512, %cst_116 {dimension_numbers = #tpu.dot_dimension_numbers<[1], [0], [0], [1], [0, 0, 1, 1], [], []>} : vector<2x32xf32>, vector<32x128xf32>, vector<2x128xf32> -> vector<2x128xf32>
    %530 = vector.broadcast %513 : vector<1x128xf32> to vector<2x128xf32>
    %531 = arith.addf %529, %530 : vector<2x128xf32>
    %cst_117 = arith.constant 0.000000e+00 : f32
    %532 = vector.broadcast %cst_117 : f32 to vector<2x128xf32>
    %533 = arith.maximumf %531, %532 : vector<2x128xf32>
    %cst_118 = arith.constant dense<0.000000e+00> : vector<2x4xf32>
    %534 = tpu.matmul %533, %514, %cst_118 {dimension_numbers = #tpu.dot_dimension_numbers<[1], [0], [0], [1], [0, 0, 1, 1], [], []>} : vector<2x128xf32>, vector<128x4xf32>, vector<2x4xf32> -> vector<2x4xf32>
    %535 = vector.broadcast %515 : vector<1x4xf32> to vector<2x4xf32>
    %536 = arith.addf %534, %535 : vector<2x4xf32>
    %c2_119 = arith.constant 2 : index
    %c0_120 = arith.constant 0 : index
    %537 = vector.load %arg12[%c2_119, %c0_120] : memref<4x4xf32, #tpu.memory_space<vmem>>, vector<2x4xf32>
    tpu.vector_store %arg12[%c2_119, %c0_120], %536 {strides = array<i32>} : memref<4x4xf32, #tpu.memory_space<vmem>>, vector<2x4xf32>,
    return
  }
  func.func @transform_0(%arg0: i32) -> (i32, i32, i32) {
    %c0_i32 = arith.constant 0 : i32
    %c0_i32_0 = arith.constant 0 : i32
    %c0_i32_1 = arith.constant 0 : i32
    %c0_i32_2 = arith.constant 0 : i32
    return %c0_i32, %c0_i32_0, %c0_i32_1 : i32, i32, i32
  }
  func.func @transform_1(%arg0: i32) -> (i32, i32) {
    %c0_i32 = arith.constant 0 : i32
    %c0_i32_0 = arith.constant 0 : i32
    %c0_i32_1 = arith.constant 0 : i32
    return %c0_i32, %c0_i32_0 : i32, i32
  }
  func.func @transform_2(%arg0: i32) -> (i32, i32) {
    %c0_i32 = arith.constant 0 : i32
    %c0_i32_0 = arith.constant 0 : i32
    %c0_i32_1 = arith.constant 0 : i32
    return %c0_i32, %c0_i32_0 : i32, i32
  }
  func.func @transform_3(%arg0: i32) -> (i32, i32) {
    %c0_i32 = arith.constant 0 : i32
    %c0_i32_0 = arith.constant 0 : i32
    %c0_i32_1 = arith.constant 0 : i32
    return %c0_i32, %c0_i32_0 : i32, i32
  }
  func.func @transform_4(%arg0: i32) -> (i32, i32) {
    %c0_i32 = arith.constant 0 : i32
    %c0_i32_0 = arith.constant 0 : i32
    %c0_i32_1 = arith.constant 0 : i32
    return %c0_i32, %c0_i32_0 : i32, i32
  }
  func.func @transform_5(%arg0: i32) -> (i32, i32) {
    %c0_i32 = arith.constant 0 : i32
    %c0_i32_0 = arith.constant 0 : i32
    %c0_i32_1 = arith.constant 0 : i32
    return %c0_i32, %c0_i32_0 : i32, i32
  }
  func.func @transform_6(%arg0: i32) -> (i32, i32) {
    %c0_i32 = arith.constant 0 : i32
    %c0_i32_0 = arith.constant 0 : i32
    %c0_i32_1 = arith.constant 0 : i32
    return %c0_i32, %c0_i32_0 : i32, i32
  }
  func.func @transform_7(%arg0: i32) -> (i32, i32) {
    %c0_i32 = arith.constant 0 : i32
    %c0_i32_0 = arith.constant 0 : i32
    %c0_i32_1 = arith.constant 0 : i32
    return %c0_i32, %c0_i32_0 : i32, i32
  }
  func.func @transform_8(%arg0: i32) -> (i32, i32) {
    %c0_i32 = arith.constant 0 : i32
    %c0_i32_0 = arith.constant 0 : i32
    %c0_i32_1 = arith.constant 0 : i32
    return %c0_i32, %c0_i32_0 : i32, i32
  }
  func.func @transform_9(%arg0: i32) -> (i32, i32) {
    %c0_i32 = arith.constant 0 : i32
    %c0_i32_0 = arith.constant 0 : i32
    %c0_i32_1 = arith.constant 0 : i32
    return %c0_i32, %c0_i32_0 : i32, i32
  }
  func.func @transform_10(%arg0: i32) -> (i32, i32) {
    %c0_i32 = arith.constant 0 : i32
    %c0_i32_0 = arith.constant 0 : i32
    %c0_i32_1 = arith.constant 0 : i32
    return %c0_i32, %c0_i32_0 : i32, i32
  }
  func.func @transform_11(%arg0: i32) -> (i32, i32) {
    %c0_i32 = arith.constant 0 : i32
    %c0_i32_0 = arith.constant 0 : i32
    %c0_i32_1 = arith.constant 0 : i32
    return %c0_i32, %c0_i32_0 : i32, i32
  }
}

</mosaic_0001>

<llo_original>
// kernel: gru_model_forward.1
$region0: #{gru_model_forward.1}
  #allocation0 [shape = 'u32[]', space=smem, size = 0x4, offset = 0x4, fixed_abs, tag = 'smem constant byte address 0x4 - core index']
  #allocation1 [shape = 'u32[144,128]{1,0:T(1,128)}', space=vmem, size = 0x12000, scoped, tag = 'internal scratch']
  %s0 = inlined_call_operand.vmem [shape: f32[8,2,96], index: 0, kind: input, shape index: {}]
  %s1 = inlined_call_operand.vmem [shape: f32[32,96], index: 1, kind: input, shape index: {}]
  %s2 = inlined_call_operand.vmem [shape: f32[1,96], index: 2, kind: input, shape index: {}]
  %s3 = inlined_call_operand.vmem [shape: f32[32,96], index: 3, kind: input, shape index: {}]
  %s4 = inlined_call_operand.vmem [shape: f32[1,96], index: 4, kind: input, shape index: {}]
  %s5 = inlined_call_operand.vmem [shape: f32[32,96], index: 5, kind: input, shape index: {}]
  %s6 = inlined_call_operand.vmem [shape: f32[1,96], index: 6, kind: input, shape index: {}]
  %s7 = inlined_call_operand.vmem [shape: f32[32,128], index: 7, kind: input, shape index: {}]
  %s8 = inlined_call_operand.vmem [shape: f32[1,128], index: 8, kind: input, shape index: {}]
  %s9 = inlined_call_operand.vmem [shape: f32[128,4], index: 9, kind: input, shape index: {}]
  %s10 = inlined_call_operand.vmem [shape: f32[1,4], index: 10, kind: input, shape index: {}]
  %s11 = inlined_call_operand.hbm [shape: f32[4,4], index: 11, kind: output, shape index: {}]
  %s12 = sld [smem:[#allocation0]]
  $region54: #{gru_model_forward.1} parent=0
    _
  %s14 = ssub.s32 1, %s12
  %s15 = scalar_select 0, %s14, %s12
  $region1: #{gru_model_forward.1} parent=0
    #allocation2 [shape = 'u8[2048]{0}', space=vmem, size = 0x800, scoped, tag = 'output window, operand 0, single buffered']
    #allocation3 [shape = 's32[1]{0}', space=sflag, size = 0x4, scoped, tag = 'scoped memory for gru_model_forward.1']
    %16 = vsyncpa [#allocation3], 0
    // Predicated region
    $region2: #{gru_model_forward.1} parent=1 // pred_check
      _
    $region3: #{gru_model_forward.1} parent=1 // pred_check_branch
      %18 = sbr.rel (0) target = $region5
    $region4: #{gru_model_forward.1} parent=1 // pred_region
      _
    $region5: #{gru_model_forward.1} parent=1 // pred_fallthru
      _
    // Predicated region
    $region6: #{gru_model_forward.1} parent=1 // pred_check
      _
    $region7: #{gru_model_forward.1} parent=1 // pred_check_branch
      %20 = sbr.rel (0) target = $region9
    $region8: #{gru_model_forward.1} parent=1 // pred_region
      _
    $region9: #{gru_model_forward.1} parent=1 // pred_fallthru
      _
    // Predicated region
    $region10: #{gru_model_forward.1} parent=1 // pred_check
      _
    $region11: #{gru_model_forward.1} parent=1 // pred_check_branch
      %22 = sbr.rel (0) target = $region13
    $region12: #{gru_model_forward.1} parent=1 // pred_region
      _
    $region13: #{gru_model_forward.1} parent=1 // pred_fallthru
      _
    // Predicated region
    $region14: #{gru_model_forward.1} parent=1 // pred_check
      _
    $region15: #{gru_model_forward.1} parent=1 // pred_check_branch
      %24 = sbr.rel (0) target = $region17
    $region16: #{gru_model_forward.1} parent=1 // pred_region
      _
    $region17: #{gru_model_forward.1} parent=1 // pred_fallthru
      _
    // Predicated region
    $region18: #{gru_model_forward.1} parent=1 // pred_check
      _
    $region19: #{gru_model_forward.1} parent=1 // pred_check_branch
      %26 = sbr.rel (0) target = $region21
    $region20: #{gru_model_forward.1} parent=1 // pred_region
      _
    $region21: #{gru_model_forward.1} parent=1 // pred_fallthru
      _
    // Predicated region
    $region22: #{gru_model_forward.1} parent=1 // pred_check
      _
    $region23: #{gru_model_forward.1} parent=1 // pred_check_branch
      %28 = sbr.rel (0) target = $region25
    $region24: #{gru_model_forward.1} parent=1 // pred_region
      _
    $region25: #{gru_model_forward.1} parent=1 // pred_fallthru
      _
    // Predicated region
    $region26: #{gru_model_forward.1} parent=1 // pred_check
      _
    $region27: #{gru_model_forward.1} parent=1 // pred_check_branch
      %30 = sbr.rel (0) target = $region29
    $region28: #{gru_model_forward.1} parent=1 // pred_region
      _
    $region29: #{gru_model_forward.1} parent=1 // pred_fallthru
      _
    // Predicated region
    $region30: #{gru_model_forward.1} parent=1 // pred_check
      _
    $region31: #{gru_model_forward.1} parent=1 // pred_check_branch
      %32 = sbr.rel (0) target = $region33
    $region32: #{gru_model_forward.1} parent=1 // pred_region
      _
    $region33: #{gru_model_forward.1} parent=1 // pred_fallthru
      _
    // Predicated region
    $region34: #{gru_model_forward.1} parent=1 // pred_check
      _
    $region35: #{gru_model_forward.1} parent=1 // pred_check_branch
      %34 = sbr.rel (0) target = $region37
    $region36: #{gru_model_forward.1} parent=1 // pred_region
      _
    $region37: #{gru_model_forward.1} parent=1 // pred_fallthru
      _
    // Predicated region
    $region38: #{gru_model_forward.1} parent=1 // pred_check
      _
    $region39: #{gru_model_forward.1} parent=1 // pred_check_branch
      %36 = sbr.rel (0) target = $region41
    $region40: #{gru_model_forward.1} parent=1 // pred_region
      _
    $region41: #{gru_model_forward.1} parent=1 // pred_fallthru
      _
    // Predicated region
    $region42: #{gru_model_forward.1} parent=1 // pred_check
      _
    $region43: #{gru_model_forward.1} parent=1 // pred_check_branch
      %38 = sbr.rel (0) target = $region45
    $region44: #{gru_model_forward.1} parent=1 // pred_region
      _
    $region45: #{gru_model_forward.1} parent=1 // pred_fallthru
      _
    %v39 = vld [vmem:[%s0] sm:$0x3]
    %s40 = scalar_lea.vmem %s0, 2
    %v41 = vld [vmem:[%s40] sm:$0x3]
    %s42 = scalar_lea.vmem %s0, 4
    %v43 = vld [vmem:[%s42] sm:$0x3]
    %s44 = scalar_lea.vmem %s0, 6
    %v45 = vld [vmem:[%s44] sm:$0x3]
    %s46 = scalar_lea.vmem %s0, 8
    %v47 = vld [vmem:[%s46] sm:$0x3]
    %s48 = scalar_lea.vmem %s0, 10
    %v49 = vld [vmem:[%s48] sm:$0x3]
    %s50 = scalar_lea.vmem %s0, 12
    %v51 = vld [vmem:[%s50] sm:$0x3]
    %s52 = scalar_lea.vmem %s0, 14
    %v53 = vld [vmem:[%s52] sm:$0x3]
    %v54 = vld [vmem:[%s1] sm:$0xff]
    %v55 = vld [vmem:[%s1 + $0x8] sm:$0xff]
    %v56 = vld [vmem:[%s1 + $0x10] sm:$0xff]
    %v57 = vld [vmem:[%s1 + $0x18] sm:$0xff]
    %v58 = vld [vmem:[%s2] sm:$0x1]
    %v60 = vlaneseq
    %v61 = vshrl.u32 %v60, 7
    %v62 = vsub.s32 0, %v61
    %v63 = vrot.slane %v58, %v62
    %vm65 = vcmask 261120
    %v67 = vsel %vm65, 0.0, 0
    %69 = vmatprep.subr.mxu0 0.0
    %70 = vmatpush1.msra.mxu0 0.0
    %71 = vmatprep.subr.mxu0 0.0
    %72 = vmatpush1.msra.mxu0 0.0
    %73 = vmatprep.subr.mxu0 0.0
    %74 = vmatpush1.msra.mxu0 0.0
    %75 = vmatprep.subr.mxu0 0.0
    %76 = vmatpush1.msra.mxu0 0.0
    %77 = vmatprep.subr.mxu0 0.0
    %78 = vmatpush1.msra.mxu0 0.0
    %79 = vmatprep.subr.mxu0 0.0
    %80 = vmatpush1.msra.mxu0 0.0
    %81 = vmatprep.subr.mxu0 0.0
    %82 = vmatpush1.msra.mxu0 0.0
    %83 = vmatprep.subr.mxu0 0.0
    %84 = vmatpush1.msra.mxu0 0.0
    %85 = vmatprep.subr.mxu0 0.0
    %86 = vmatpush1.msra.mxu0 0.0
    %87 = vmatprep.subr.mxu0 0.0
    %88 = vmatpush1.msra.mxu0 0.0
    %89 = vmatprep.subr.mxu0 0.0
    %90 = vmatpush1.msra.mxu0 0.0
    %91 = vmatprep.subr.mxu0 0.0
    %92 = vmatpush1.msra.mxu0 0.0
    %93 = vmatprep.subr.mxu0 0.0
    %94 = vmatpush1.msra.mxu0 %v57
    %95 = vmatprep.subr.mxu0 0.0
    %96 = vmatpush1.msra.mxu0 %v56
    %97 = vmatprep.subr.mxu0 0.0
    %98 = vmatpush1.msra.mxu0 %v55
    %99 = vmatprep.subr.mxu0 0.0
    %100 = vmatpush1.msra.mxu0 %v54
    %101 = vmatprep.subr.mxu0 0.0
    %102 = vmatpush2.msra.mxu0 0.0
    %103 = vmatprep.subr.mxu0 0.0
    %104 = vmatpush2.msra.mxu0 0.0
    %105 = vmatprep.subr.mxu0 0.0
    %106 = vmatpush2.msra.mxu0 0.0
    %107 = vmatprep.subr.mxu0 0.0
    %108 = vmatpush2.msra.mxu0 0.0
    %109 = vmatprep.subr.mxu0 0.0
    %110 = vmatpush2.msra.mxu0 0.0
    %111 = vmatprep.subr.mxu0 0.0
    %112 = vmatpush2.msra.mxu0 0.0
    %113 = vmatprep.subr.mxu0 0.0
    %114 = vmatpush2.msra.mxu0 0.0
    %115 = vmatprep.subr.mxu0 0.0
    %116 = vmatpush2.msra.mxu0 0.0
    %117 = vmatprep.subr.mxu0 0.0
    %118 = vmatpush2.msra.mxu0 0.0
    %119 = vmatprep.subr.mxu0 0.0
    %120 = vmatpush2.msra.mxu0 0.0
    %121 = vmatprep.subr.mxu0 0.0
    %122 = vmatpush2.msra.mxu0 0.0
    %123 = vmatprep.subr.mxu0 0.0
    %124 = vmatpush2.msra.mxu0 0.0
    %125 = vmatprep.subr.mxu0 0.0
    %126 = vmatpush2.msra.mxu0 0.0
    %127 = vmatprep.subr.mxu0 0.0
    %128 = vmatpush2.msra.mxu0 0.0
    %129 = vmatprep.subr.mxu0 0.0
    %130 = vmatpush2.msra.mxu0 0.0
    %131 = vmatprep.subr.mxu0 0.0
    %132 = vmatpush2.msra.mxu0 0.0
    %133 = vmatprep.mubr.f32.mxu0 0.0
    %134 = vmatmul.mubr.f32.gmra.mxu0 %v67
    %v135 = vpop.f32.mrf.mxu0
    %v136 = vadd.f32 %v63, %v135
    %v137 = vpop.f32.mrf.mxu0
    %138 = vdwg.mxu0
    %v139 = vadd.f32 %v39, %v136
    %v140 = vxor.u32 %v139, 2147483648
    %v141 = vmul.f32 %v140, 1.442695
    %v142 = vpow.pop %v141
    %v143 = vadd.f32 %v142, 1.0
    %v144 = vrcp.pop %v143
    %v145 = vmul.f32 1.0, %v144
    %147 = vrot.lane.b32.xlu0 %v136, 64
    %v148 = vpop.permute.xlu0 %147
    %v150 = vmul.f32 %v145, %v148
    %152 = vrot.lane.b32.xlu0 %v150, 64
    %v153 = vpop.permute.xlu0 %152
    %v155 = vadd.f32 %v39, %v153
    %v156 = vtanh.pop %v155
    %v157 = vsub.f32 1.0, %v145
    %159 = vrot.lane.b32.xlu0 %v156, 96
    %v160 = vpop.permute.xlu0 %159
    %v162 = vmul.f32 %v157, %v160
    %v163 = vmul.f32 %v145, 0.0
    %v164 = vadd.f32 %v162, %v163
    %166 = vrot.lane.b32.xlu0 %v164, 96
    %v167 = vpop.permute.xlu0 %166
    %v168 = vsel %vm65, %v167, 0
    %170 = vmatprep.subr.mxu0 0.0
    %171 = vmatpush1.msra.mxu0 0.0
    %172 = vmatprep.subr.mxu0 0.0
    %173 = vmatpush1.msra.mxu0 0.0
    %174 = vmatprep.subr.mxu0 0.0
    %175 = vmatpush1.msra.mxu0 0.0
    %176 = vmatprep.subr.mxu0 0.0
    %177 = vmatpush1.msra.mxu0 0.0
    %178 = vmatprep.subr.mxu0 0.0
    %179 = vmatpush1.msra.mxu0 0.0
    %180 = vmatprep.subr.mxu0 0.0
    %181 = vmatpush1.msra.mxu0 0.0
    %182 = vmatprep.subr.mxu0 0.0
    %183 = vmatpush1.msra.mxu0 0.0
    %184 = vmatprep.subr.mxu0 0.0
    %185 = vmatpush1.msra.mxu0 0.0
    %186 = vmatprep.subr.mxu0 0.0
    %187 = vmatpush1.msra.mxu0 0.0
    %188 = vmatprep.subr.mxu0 0.0
    %189 = vmatpush1.msra.mxu0 0.0
    %190 = vmatprep.subr.mxu0 0.0
    %191 = vmatpush1.msra.mxu0 0.0
    %192 = vmatprep.subr.mxu0 0.0
    %193 = vmatpush1.msra.mxu0 0.0
    %194 = vmatprep.subr.mxu0 0.0
    %195 = vmatpush1.msra.mxu0 %v57
    %196 = vmatprep.subr.mxu0 0.0
    %197 = vmatpush1.msra.mxu0 %v56
    %198 = vmatprep.subr.mxu0 0.0
    %199 = vmatpush1.msra.mxu0 %v55
    %200 = vmatprep.subr.mxu0 0.0
    %201 = vmatpush1.msra.mxu0 %v54
    %202 = vmatprep.subr.mxu0 0.0
    %203 = vmatpush2.msra.mxu0 0.0
    %204 = vmatprep.subr.mxu0 0.0
    %205 = vmatpush2.msra.mxu0 0.0
    %206 = vmatprep.subr.mxu0 0.0
    %207 = vmatpush2.msra.mxu0 0.0
    %208 = vmatprep.subr.mxu0 0.0
    %209 = vmatpush2.msra.mxu0 0.0
    %210 = vmatprep.subr.mxu0 0.0
    %211 = vmatpush2.msra.mxu0 0.0
    %212 = vmatprep.subr.mxu0 0.0
    %213 = vmatpush2.msra.mxu0 0.0
    %214 = vmatprep.subr.mxu0 0.0
    %215 = vmatpush2.msra.mxu0 0.0
    %216 = vmatprep.subr.mxu0 0.0
    %217 = vmatpush2.msra.mxu0 0.0
    %218 = vmatprep.subr.mxu0 0.0
    %219 = vmatpush2.msra.mxu0 0.0
    %220 = vmatprep.subr.mxu0 0.0
    %221 = vmatpush2.msra.mxu0 0.0
    %222 = vmatprep.subr.mxu0 0.0
    %223 = vmatpush2.msra.mxu0 0.0
    %224 = vmatprep.subr.mxu0 0.0
    %225 = vmatpush2.msra.mxu0 0.0
    %226 = vmatprep.subr.mxu0 0.0
    %227 = vmatpush2.msra.mxu0 0.0
    %228 = vmatprep.subr.mxu0 0.0
    %229 = vmatpush2.msra.mxu0 0.0
    %230 = vmatprep.subr.mxu0 0.0
    %231 = vmatpush2.msra.mxu0 0.0
    %232 = vmatprep.subr.mxu0 0.0
    %233 = vmatpush2.msra.mxu0 0.0
    %234 = vmatprep.mubr.f32.mxu0 0.0
    %235 = vmatmul.mubr.f32.gmra.mxu0 %v168
    %v236 = vpop.f32.mrf.mxu0
    %v237 = vadd.f32 %v63, %v236
    %v238 = vpop.f32.mrf.mxu0
    %239 = vdwg.mxu0
    %v240 = vadd.f32 %v41, %v237
    %v241 = vxor.u32 %v240, 2147483648
    %v242 = vmul.f32 %v241, 1.442695
    %v243 = vpow.pop %v242
    %v244 = vadd.f32 %v243, 1.0
    %v245 = vrcp.pop %v244
    %v246 = vmul.f32 1.0, %v245
    %248 = vrot.lane.b32.xlu0 %v237, 64
    %v249 = vpop.permute.xlu0 %248
    %v251 = vmul.f32 %v246, %v249
    %253 = vrot.lane.b32.xlu0 %v251, 64
    %v254 = vpop.permute.xlu0 %253
    %v256 = vadd.f32 %v41, %v254
    %v257 = vtanh.pop %v256
    %v258 = vsub.f32 1.0, %v246
    %260 = vrot.lane.b32.xlu0 %v257, 96
    %v261 = vpop.permute.xlu0 %260
    %v263 = vmul.f32 %v258, %v261
    %v264 = vmul.f32 %v246, %v164
    %v265 = vadd.f32 %v263, %v264
    %267 = vrot.lane.b32.xlu0 %v265, 96
    %v268 = vpop.permute.xlu0 %267
    %v269 = vsel %vm65, %v268, 0
    %271 = vmatprep.subr.mxu0 0.0
    %272 = vmatpush1.msra.mxu0 0.0
    %273 = vmatprep.subr.mxu0 0.0
    %274 = vmatpush1.msra.mxu0 0.0
    %275 = vmatprep.subr.mxu0 0.0
    %276 = vmatpush1.msra.mxu0 0.0
    %277 = vmatprep.subr.mxu0 0.0
    %278 = vmatpush1.msra.mxu0 0.0
    %279 = vmatprep.subr.mxu0 0.0
    %280 = vmatpush1.msra.mxu0 0.0
    %281 = vmatprep.subr.mxu0 0.0
    %282 = vmatpush1.msra.mxu0 0.0
    %283 = vmatprep.subr.mxu0 0.0
    %284 = vmatpush1.msra.mxu0 0.0
    %285 = vmatprep.subr.mxu0 0.0
    %286 = vmatpush1.msra.mxu0 0.0
    %287 = vmatprep.subr.mxu0 0.0
    %288 = vmatpush1.msra.mxu0 0.0
    %289 = vmatprep.subr.mxu0 0.0
    %290 = vmatpush1.msra.mxu0 0.0
    %291 = vmatprep.subr.mxu0 0.0
    %292 = vmatpush1.msra.mxu0 0.0
    %293 = vmatprep.subr.mxu0 0.0
    %294 = vmatpush1.msra.mxu0 0.0
    %295 = vmatprep.subr.mxu0 0.0
    %296 = vmatpush1.msra.mxu0 %v57
    %297 = vmatprep.subr.mxu0 0.0
    %298 = vmatpush1.msra.mxu0 %v56
    %299 = vmatprep.subr.mxu0 0.0
    %300 = vmatpush1.msra.mxu0 %v55
    %301 = vmatprep.subr.mxu0 0.0
    %302 = vmatpush1.msra.mxu0 %v54
    %303 = vmatprep.subr.mxu0 0.0
    %304 = vmatpush2.msra.mxu0 0.0
    %305 = vmatprep.subr.mxu0 0.0
    %306 = vmatpush2.msra.mxu0 0.0
    %307 = vmatprep.subr.mxu0 0.0
    %308 = vmatpush2.msra.mxu0 0.0
    %309 = vmatprep.subr.mxu0 0.0
    %310 = vmatpush2.msra.mxu0 0.0
    %311 = vmatprep.subr.mxu0 0.0
    %312 = vmatpush2.msra.mxu0 0.0
    %313 = vmatprep.subr.mxu0 0.0
    %314 = vmatpush2.msra.mxu0 0.0
    %315 = vmatprep.subr.mxu0 0.0
    %316 = vmatpush2.msra.mxu0 0.0
    %317 = vmatprep.subr.mxu0 0.0
    %318 = vmatpush2.msra.mxu0 0.0
    %319 = vmatprep.subr.mxu0 0.0
    %320 = vmatpush2.msra.mxu0 0.0
    %321 = vmatprep.subr.mxu0 0.0
    %322 = vmatpush2.msra.mxu0 0.0
    %323 = vmatprep.subr.mxu0 0.0
    %324 = vmatpush2.msra.mxu0 0.0
    %325 = vmatprep.subr.mxu0 0.0
    %326 = vmatpush2.msra.mxu0 0.0
    %327 = vmatprep.subr.mxu0 0.0
    %328 = vmatpush2.msra.mxu0 0.0
    %329 = vmatprep.subr.mxu0 0.0
    %330 = vmatpush2.msra.mxu0 0.0
    %331 = vmatprep.subr.mxu0 0.0
    %332 = vmatpush2.msra.mxu0 0.0
    %333 = vmatprep.subr.mxu0 0.0
    %334 = vmatpush2.msra.mxu0 0.0
    %335 = vmatprep.mubr.f32.mxu0 0.0
    %336 = vmatmul.mubr.f32.gmra.mxu0 %v269
    %v337 = vpop.f32.mrf.mxu0
    %v338 = vadd.f32 %v63, %v337
    %v339 = vpop.f32.mrf.mxu0
    %340 = vdwg.mxu0
    %v341 = vadd.f32 %v43, %v338
    %v342 = vxor.u32 %v341, 2147483648
    %v343 = vmul.f32 %v342, 1.442695
    %v344 = vpow.pop %v343
    %v345 = vadd.f32 %v344, 1.0
    %v346 = vrcp.pop %v345
    %v347 = vmul.f32 1.0, %v346
    %349 = vrot.lane.b32.xlu0 %v338, 64
    %v350 = vpop.permute.xlu0 %349
    %v352 = vmul.f32 %v347, %v350
    %354 = vrot.lane.b32.xlu0 %v352, 64
    %v355 = vpop.permute.xlu0 %354
    %v357 = vadd.f32 %v43, %v355
    %v358 = vtanh.pop %v357
    %v359 = vsub.f32 1.0, %v347
    %361 = vrot.lane.b32.xlu0 %v358, 96
    %v362 = vpop.permute.xlu0 %361
    %v364 = vmul.f32 %v359, %v362
    %v365 = vmul.f32 %v347, %v265
    %v366 = vadd.f32 %v364, %v365
    %368 = vrot.lane.b32.xlu0 %v366, 96
    %v369 = vpop.permute.xlu0 %368
    %v370 = vsel %vm65, %v369, 0
    %372 = vmatprep.subr.mxu0 0.0
    %373 = vmatpush1.msra.mxu0 0.0
    %374 = vmatprep.subr.mxu0 0.0
    %375 = vmatpush1.msra.mxu0 0.0
    %376 = vmatprep.subr.mxu0 0.0
    %377 = vmatpush1.msra.mxu0 0.0
    %378 = vmatprep.subr.mxu0 0.0
    %379 = vmatpush1.msra.mxu0 0.0
    %380 = vmatprep.subr.mxu0 0.0
    %381 = vmatpush1.msra.mxu0 0.0
    %382 = vmatprep.subr.mxu0 0.0
    %383 = vmatpush1.msra.mxu0 0.0
    %384 = vmatprep.subr.mxu0 0.0
    %385 = vmatpush1.msra.mxu0 0.0
    %386 = vmatprep.subr.mxu0 0.0
    %387 = vmatpush1.msra.mxu0 0.0
    %388 = vmatprep.subr.mxu0 0.0
    %389 = vmatpush1.msra.mxu0 0.0
    %390 = vmatprep.subr.mxu0 0.0
    %391 = vmatpush1.msra.mxu0 0.0
    %392 = vmatprep.subr.mxu0 0.0
    %393 = vmatpush1.msra.mxu0 0.0
    %394 = vmatprep.subr.mxu0 0.0
    %395 = vmatpush1.msra.mxu0 0.0
    %396 = vmatprep.subr.mxu0 0.0
    %397 = vmatpush1.msra.mxu0 %v57
    %398 = vmatprep.subr.mxu0 0.0
    %399 = vmatpush1.msra.mxu0 %v56
    %400 = vmatprep.subr.mxu0 0.0
    %401 = vmatpush1.msra.mxu0 %v55
    %402 = vmatprep.subr.mxu0 0.0
    %403 = vmatpush1.msra.mxu0 %v54
    %404 = vmatprep.subr.mxu0 0.0
    %405 = vmatpush2.msra.mxu0 0.0
    %406 = vmatprep.subr.mxu0 0.0
    %407 = vmatpush2.msra.mxu0 0.0
    %408 = vmatprep.subr.mxu0 0.0
    %409 = vmatpush2.msra.mxu0 0.0
    %410 = vmatprep.subr.mxu0 0.0
    %411 = vmatpush2.msra.mxu0 0.0
    %412 = vmatprep.subr.mxu0 0.0
    %413 = vmatpush2.msra.mxu0 0.0
    %414 = vmatprep.subr.mxu0 0.0
    %415 = vmatpush2.msra.mxu0 0.0
    %416 = vmatprep.subr.mxu0 0.0
    %417 = vmatpush2.msra.mxu0 0.0
    %418 = vmatprep.subr.mxu0 0.0
    %419 = vmatpush2.msra.mxu0 0.0
    %420 = vmatprep.subr.mxu0 0.0
    %421 = vmatpush2.msra.mxu0 0.0
    %422 = vmatprep.subr.mxu0 0.0
    %423 = vmatpush2.msra.mxu0 0.0
    %424 = vmatprep.subr.mxu0 0.0
    %425 = vmatpush2.msra.mxu0 0.0
    %426 = vmatprep.subr.mxu0 0.0
    %427 = vmatpush2.msra.mxu0 0.0
    %428 = vmatprep.subr.mxu0 0.0
    %429 = vmatpush2.msra.mxu0 0.0
    %430 = vmatprep.subr.mxu0 0.0
    %431 = vmatpush2.msra.mxu0 0.0
    %432 = vmatprep.subr.mxu0 0.0
    %433 = vmatpush2.msra.mxu0 0.0
    %434 = vmatprep.subr.mxu0 0.0
    %435 = vmatpush2.msra.mxu0 0.0
    %436 = vmatprep.mubr.f32.mxu0 0.0
    %437 = vmatmul.mubr.f32.gmra.mxu0 %v370
    %v438 = vpop.f32.mrf.mxu0
    %v439 = vadd.f32 %v63, %v438
    %v440 = vpop.f32.mrf.mxu0
    %441 = vdwg.mxu0
    %v442 = vadd.f32 %v45, %v439
    %v443 = vxor.u32 %v442, 2147483648
    %v444 = vmul.f32 %v443, 1.442695
    %v445 = vpow.pop %v444
    %v446 = vadd.f32 %v445, 1.0
    %v447 = vrcp.pop %v446
    %v448 = vmul.f32 1.0, %v447
    %450 = vrot.lane.b32.xlu0 %v439, 64
    %v451 = vpop.permute.xlu0 %450
    %v453 = vmul.f32 %v448, %v451
    %455 = vrot.lane.b32.xlu0 %v453, 64
    %v456 = vpop.permute.xlu0 %455
    %v458 = vadd.f32 %v45, %v456
    %v459 = vtanh.pop %v458
    %v460 = vsub.f32 1.0, %v448
    %462 = vrot.lane.b32.xlu0 %v459, 96
    %v463 = vpop.permute.xlu0 %462
    %v465 = vmul.f32 %v460, %v463
    %v466 = vmul.f32 %v448, %v366
    %v467 = vadd.f32 %v465, %v466
    %469 = vrot.lane.b32.xlu0 %v467, 96
    %v470 = vpop.permute.xlu0 %469
    %v471 = vsel %vm65, %v470, 0
    %473 = vmatprep.subr.mxu0 0.0
    %474 = vmatpush1.msra.mxu0 0.0
    %475 = vmatprep.subr.mxu0 0.0
    %476 = vmatpush1.msra.mxu0 0.0
    %477 = vmatprep.subr.mxu0 0.0
    %478 = vmatpush1.msra.mxu0 0.0
    %479 = vmatprep.subr.mxu0 0.0
    %480 = vmatpush1.msra.mxu0 0.0
    %481 = vmatprep.subr.mxu0 0.0
    %482 = vmatpush1.msra.mxu0 0.0
    %483 = vmatprep.subr.mxu0 0.0
    %484 = vmatpush1.msra.mxu0 0.0
    %485 = vmatprep.subr.mxu0 0.0
    %486 = vmatpush1.msra.mxu0 0.0
    %487 = vmatprep.subr.mxu0 0.0
    %488 = vmatpush1.msra.mxu0 0.0
    %489 = vmatprep.subr.mxu0 0.0
    %490 = vmatpush1.msra.mxu0 0.0
    %491 = vmatprep.subr.mxu0 0.0
    %492 = vmatpush1.msra.mxu0 0.0
    %493 = vmatprep.subr.mxu0 0.0
    %494 = vmatpush1.msra.mxu0 0.0
    %495 = vmatprep.subr.mxu0 0.0
    %496 = vmatpush1.msra.mxu0 0.0
    %497 = vmatprep.subr.mxu0 0.0
    %498 = vmatpush1.msra.mxu0 %v57
    %499 = vmatprep.subr.mxu0 0.0
    %500 = vmatpush1.msra.mxu0 %v56
    %501 = vmatprep.subr.mxu0 0.0
    %502 = vmatpush1.msra.mxu0 %v55
    %503 = vmatprep.subr.mxu0 0.0
    %504 = vmatpush1.msra.mxu0 %v54
    %505 = vmatprep.subr.mxu0 0.0
    %506 = vmatpush2.msra.mxu0 0.0
    %507 = vmatprep.subr.mxu0 0.0
    %508 = vmatpush2.msra.mxu0 0.0
    %509 = vmatprep.subr.mxu0 0.0
    %510 = vmatpush2.msra.mxu0 0.0
    %511 = vmatprep.subr.mxu0 0.0
    %512 = vmatpush2.msra.mxu0 0.0
    %513 = vmatprep.subr.mxu0 0.0
    %514 = vmatpush2.msra.mxu0 0.0
    %515 = vmatprep.subr.mxu0 0.0
    %516 = vmatpush2.msra.mxu0 0.0
    %517 = vmatprep.subr.mxu0 0.0
    %518 = vmatpush2.msra.mxu0 0.0
    %519 = vmatprep.subr.mxu0 0.0
    %520 = vmatpush2.msra.mxu0 0.0
    %521 = vmatprep.subr.mxu0 0.0
    %522 = vmatpush2.msra.mxu0 0.0
    %523 = vmatprep.subr.mxu0 0.0
    %524 = vmatpush2.msra.mxu0 0.0
    %525 = vmatprep.subr.mxu0 0.0
    %526 = vmatpush2.msra.mxu0 0.0
    %527 = vmatprep.subr.mxu0 0.0
    %528 = vmatpush2.msra.mxu0 0.0
    %529 = vmatprep.subr.mxu0 0.0
    %530 = vmatpush2.msra.mxu0 0.0
    %531 = vmatprep.subr.mxu0 0.0
    %532 = vmatpush2.msra.mxu0 0.0
    %533 = vmatprep.subr.mxu0 0.0
    %534 = vmatpush2.msra.mxu0 0.0
    %535 = vmatprep.subr.mxu0 0.0
    %536 = vmatpush2.msra.mxu0 0.0
    %537 = vmatprep.mubr.f32.mxu0 0.0
    %538 = vmatmul.mubr.f32.gmra.mxu0 %v471
    %v539 = vpop.f32.mrf.mxu0
    %v540 = vadd.f32 %v63, %v539
    %v541 = vpop.f32.mrf.mxu0
    %542 = vdwg.mxu0
    %v543 = vadd.f32 %v47, %v540
    %v544 = vxor.u32 %v543, 2147483648
    %v545 = vmul.f32 %v544, 1.442695
    %v546 = vpow.pop %v545
    %v547 = vadd.f32 %v546, 1.0
    %v548 = vrcp.pop %v547
    %v549 = vmul.f32 1.0, %v548
    %551 = vrot.lane.b32.xlu0 %v540, 64
    %v552 = vpop.permute.xlu0 %551
    %v554 = vmul.f32 %v549, %v552
    %556 = vrot.lane.b32.xlu0 %v554, 64
    %v557 = vpop.permute.xlu0 %556
    %v559 = vadd.f32 %v47, %v557
    %v560 = vtanh.pop %v559
    %v561 = vsub.f32 1.0, %v549
    %563 = vrot.lane.b32.xlu0 %v560, 96
    %v564 = vpop.permute.xlu0 %563
    %v566 = vmul.f32 %v561, %v564
    %v567 = vmul.f32 %v549, %v467
    %v568 = vadd.f32 %v566, %v567
    %570 = vrot.lane.b32.xlu0 %v568, 96
    %v571 = vpop.permute.xlu0 %570
    %v572 = vsel %vm65, %v571, 0
    %574 = vmatprep.subr.mxu0 0.0
    %575 = vmatpush1.msra.mxu0 0.0
    %576 = vmatprep.subr.mxu0 0.0
    %577 = vmatpush1.msra.mxu0 0.0
    %578 = vmatprep.subr.mxu0 0.0
    %579 = vmatpush1.msra.mxu0 0.0
    %580 = vmatprep.subr.mxu0 0.0
    %581 = vmatpush1.msra.mxu0 0.0
    %582 = vmatprep.subr.mxu0 0.0
    %583 = vmatpush1.msra.mxu0 0.0
    %584 = vmatprep.subr.mxu0 0.0
    %585 = vmatpush1.msra.mxu0 0.0
    %586 = vmatprep.subr.mxu0 0.0
    %587 = vmatpush1.msra.mxu0 0.0
    %588 = vmatprep.subr.mxu0 0.0
    %589 = vmatpush1.msra.mxu0 0.0
    %590 = vmatprep.subr.mxu0 0.0
    %591 = vmatpush1.msra.mxu0 0.0
    %592 = vmatprep.subr.mxu0 0.0
    %593 = vmatpush1.msra.mxu0 0.0
    %594 = vmatprep.subr.mxu0 0.0
    %595 = vmatpush1.msra.mxu0 0.0
    %596 = vmatprep.subr.mxu0 0.0
    %597 = vmatpush1.msra.mxu0 0.0
    %598 = vmatprep.subr.mxu0 0.0
    %599 = vmatpush1.msra.mxu0 %v57
    %600 = vmatprep.subr.mxu0 0.0
    %601 = vmatpush1.msra.mxu0 %v56
    %602 = vmatprep.subr.mxu0 0.0
    %603 = vmatpush1.msra.mxu0 %v55
    %604 = vmatprep.subr.mxu0 0.0
    %605 = vmatpush1.msra.mxu0 %v54
    %606 = vmatprep.subr.mxu0 0.0
    %607 = vmatpush2.msra.mxu0 0.0
    %608 = vmatprep.subr.mxu0 0.0
    %609 = vmatpush2.msra.mxu0 0.0
    %610 = vmatprep.subr.mxu0 0.0
    %611 = vmatpush2.msra.mxu0 0.0
    %612 = vmatprep.subr.mxu0 0.0
    %613 = vmatpush2.msra.mxu0 0.0
    %614 = vmatprep.subr.mxu0 0.0
    %615 = vmatpush2.msra.mxu0 0.0
    %616 = vmatprep.subr.mxu0 0.0
    %617 = vmatpush2.msra.mxu0 0.0
    %618 = vmatprep.subr.mxu0 0.0
    %619 = vmatpush2.msra.mxu0 0.0
    %620 = vmatprep.subr.mxu0 0.0
    %621 = vmatpush2.msra.mxu0 0.0
    %622 = vmatprep.subr.mxu0 0.0
    %623 = vmatpush2.msra.mxu0 0.0
    %624 = vmatprep.subr.mxu0 0.0
    %625 = vmatpush2.msra.mxu0 0.0
    %626 = vmatprep.subr.mxu0 0.0
    %627 = vmatpush2.msra.mxu0 0.0
    %628 = vmatprep.subr.mxu0 0.0
    %629 = vmatpush2.msra.mxu0 0.0
    %630 = vmatprep.subr.mxu0 0.0
    %631 = vmatpush2.msra.mxu0 0.0
    %632 = vmatprep.subr.mxu0 0.0
    %633 = vmatpush2.msra.mxu0 0.0
    %634 = vmatprep.subr.mxu0 0.0
    %635 = vmatpush2.msra.mxu0 0.0
    %636 = vmatprep.subr.mxu0 0.0
    %637 = vmatpush2.msra.mxu0 0.0
    %638 = vmatprep.mubr.f32.mxu0 0.0
    %639 = vmatmul.mubr.f32.gmra.mxu0 %v572
    %v640 = vpop.f32.mrf.mxu0
    %v641 = vadd.f32 %v63, %v640
    %v642 = vpop.f32.mrf.mxu0
    %643 = vdwg.mxu0
    %v644 = vadd.f32 %v49, %v641
    %v645 = vxor.u32 %v644, 2147483648
    %v646 = vmul.f32 %v645, 1.442695
    %v647 = vpow.pop %v646
    %v648 = vadd.f32 %v647, 1.0
    %v649 = vrcp.pop %v648
    %v650 = vmul.f32 1.0, %v649
    %652 = vrot.lane.b32.xlu0 %v641, 64
    %v653 = vpop.permute.xlu0 %652
    %v655 = vmul.f32 %v650, %v653
    %657 = vrot.lane.b32.xlu0 %v655, 64
    %v658 = vpop.permute.xlu0 %657
    %v660 = vadd.f32 %v49, %v658
    %v661 = vtanh.pop %v660
    %v662 = vsub.f32 1.0, %v650
    %664 = vrot.lane.b32.xlu0 %v661, 96
    %v665 = vpop.permute.xlu0 %664
    %v667 = vmul.f32 %v662, %v665
    %v668 = vmul.f32 %v650, %v568
    %v669 = vadd.f32 %v667, %v668
    %671 = vrot.lane.b32.xlu0 %v669, 96
    %v672 = vpop.permute.xlu0 %671
    %v673 = vsel %vm65, %v672, 0
    %675 = vmatprep.subr.mxu0 0.0
    %676 = vmatpush1.msra.mxu0 0.0
    %677 = vmatprep.subr.mxu0 0.0
    %678 = vmatpush1.msra.mxu0 0.0
    %679 = vmatprep.subr.mxu0 0.0
    %680 = vmatpush1.msra.mxu0 0.0
    %681 = vmatprep.subr.mxu0 0.0
    %682 = vmatpush1.msra.mxu0 0.0
    %683 = vmatprep.subr.mxu0 0.0
    %684 = vmatpush1.msra.mxu0 0.0
    %685 = vmatprep.subr.mxu0 0.0
    %686 = vmatpush1.msra.mxu0 0.0
    %687 = vmatprep.subr.mxu0 0.0
    %688 = vmatpush1.msra.mxu0 0.0
    %689 = vmatprep.subr.mxu0 0.0
    %690 = vmatpush1.msra.mxu0 0.0
    %691 = vmatprep.subr.mxu0 0.0
    %692 = vmatpush1.msra.mxu0 0.0
    %693 = vmatprep.subr.mxu0 0.0
    %694 = vmatpush1.msra.mxu0 0.0
    %695 = vmatprep.subr.mxu0 0.0
    %696 = vmatpush1.msra.mxu0 0.0
    %697 = vmatprep.subr.mxu0 0.0
    %698 = vmatpush1.msra.mxu0 0.0
    %699 = vmatprep.subr.mxu0 0.0
    %700 = vmatpush1.msra.mxu0 %v57
    %701 = vmatprep.subr.mxu0 0.0
    %702 = vmatpush1.msra.mxu0 %v56
    %703 = vmatprep.subr.mxu0 0.0
    %704 = vmatpush1.msra.mxu0 %v55
    %705 = vmatprep.subr.mxu0 0.0
    %706 = vmatpush1.msra.mxu0 %v54
    %707 = vmatprep.subr.mxu0 0.0
    %708 = vmatpush2.msra.mxu0 0.0
    %709 = vmatprep.subr.mxu0 0.0
    %710 = vmatpush2.msra.mxu0 0.0
    %711 = vmatprep.subr.mxu0 0.0
    %712 = vmatpush2.msra.mxu0 0.0
    %713 = vmatprep.subr.mxu0 0.0
    %714 = vmatpush2.msra.mxu0 0.0
    %715 = vmatprep.subr.mxu0 0.0
    %716 = vmatpush2.msra.mxu0 0.0
    %717 = vmatprep.subr.mxu0 0.0
    %718 = vmatpush2.msra.mxu0 0.0
    %719 = vmatprep.subr.mxu0 0.0
    %720 = vmatpush2.msra.mxu0 0.0
    %721 = vmatprep.subr.mxu0 0.0
    %722 = vmatpush2.msra.mxu0 0.0
    %723 = vmatprep.subr.mxu0 0.0
    %724 = vmatpush2.msra.mxu0 0.0
    %725 = vmatprep.subr.mxu0 0.0
    %726 = vmatpush2.msra.mxu0 0.0
    %727 = vmatprep.subr.mxu0 0.0
    %728 = vmatpush2.msra.mxu0 0.0
    %729 = vmatprep.subr.mxu0 0.0
    %730 = vmatpush2.msra.mxu0 0.0
    %731 = vmatprep.subr.mxu0 0.0
    %732 = vmatpush2.msra.mxu0 0.0
    %733 = vmatprep.subr.mxu0 0.0
    %734 = vmatpush2.msra.mxu0 0.0
    %735 = vmatprep.subr.mxu0 0.0
    %736 = vmatpush2.msra.mxu0 0.0
    %737 = vmatprep.subr.mxu0 0.0
    %738 = vmatpush2.msra.mxu0 0.0
    %739 = vmatprep.mubr.f32.mxu0 0.0
    %740 = vmatmul.mubr.f32.gmra.mxu0 %v673
    %v741 = vpop.f32.mrf.mxu0
    %v742 = vadd.f32 %v63, %v741
    %v743 = vpop.f32.mrf.mxu0
    %744 = vdwg.mxu0
    %v745 = vadd.f32 %v51, %v742
    %v746 = vxor.u32 %v745, 2147483648
    %v747 = vmul.f32 %v746, 1.442695
    %v748 = vpow.pop %v747
    %v749 = vadd.f32 %v748, 1.0
    %v750 = vrcp.pop %v749
    %v751 = vmul.f32 1.0, %v750
    %753 = vrot.lane.b32.xlu0 %v742, 64
    %v754 = vpop.permute.xlu0 %753
    %v756 = vmul.f32 %v751, %v754
    %758 = vrot.lane.b32.xlu0 %v756, 64
    %v759 = vpop.permute.xlu0 %758
    %v761 = vadd.f32 %v51, %v759
    %v762 = vtanh.pop %v761
    %v763 = vsub.f32 1.0, %v751
    %765 = vrot.lane.b32.xlu0 %v762, 96
    %v766 = vpop.permute.xlu0 %765
    %v768 = vmul.f32 %v763, %v766
    %v769 = vmul.f32 %v751, %v669
    %v770 = vadd.f32 %v768, %v769
    %772 = vrot.lane.b32.xlu0 %v770, 96
    %v773 = vpop.permute.xlu0 %772
    %v774 = vsel %vm65, %v773, 0
    %776 = vmatprep.subr.mxu0 0.0
    %777 = vmatpush1.msra.mxu0 0.0
    %778 = vmatprep.subr.mxu0 0.0
    %779 = vmatpush1.msra.mxu0 0.0
    %780 = vmatprep.subr.mxu0 0.0
    %781 = vmatpush1.msra.mxu0 0.0
    %782 = vmatprep.subr.mxu0 0.0
    %783 = vmatpush1.msra.mxu0 0.0
    %784 = vmatprep.subr.mxu0 0.0
    %785 = vmatpush1.msra.mxu0 0.0
    %786 = vmatprep.subr.mxu0 0.0
    %787 = vmatpush1.msra.mxu0 0.0
    %788 = vmatprep.subr.mxu0 0.0
    %789 = vmatpush1.msra.mxu0 0.0
    %790 = vmatprep.subr.mxu0 0.0
    %791 = vmatpush1.msra.mxu0 0.0
    %792 = vmatprep.subr.mxu0 0.0
    %793 = vmatpush1.msra.mxu0 0.0
    %794 = vmatprep.subr.mxu0 0.0
    %795 = vmatpush1.msra.mxu0 0.0
    %796 = vmatprep.subr.mxu0 0.0
    %797 = vmatpush1.msra.mxu0 0.0
    %798 = vmatprep.subr.mxu0 0.0
    %799 = vmatpush1.msra.mxu0 0.0
    %800 = vmatprep.subr.mxu0 0.0
    %801 = vmatpush1.msra.mxu0 %v57
    %802 = vmatprep.subr.mxu0 0.0
    %803 = vmatpush1.msra.mxu0 %v56
    %804 = vmatprep.subr.mxu0 0.0
    %805 = vmatpush1.msra.mxu0 %v55
    %806 = vmatprep.subr.mxu0 0.0
    %807 = vmatpush1.msra.mxu0 %v54
    %808 = vmatprep.subr.mxu0 0.0
    %809 = vmatpush2.msra.mxu0 0.0
    %810 = vmatprep.subr.mxu0 0.0
    %811 = vmatpush2.msra.mxu0 0.0
    %812 = vmatprep.subr.mxu0 0.0
    %813 = vmatpush2.msra.mxu0 0.0
    %814 = vmatprep.subr.mxu0 0.0
    %815 = vmatpush2.msra.mxu0 0.0
    %816 = vmatprep.subr.mxu0 0.0
    %817 = vmatpush2.msra.mxu0 0.0
    %818 = vmatprep.subr.mxu0 0.0
    %819 = vmatpush2.msra.mxu0 0.0
    %820 = vmatprep.subr.mxu0 0.0
    %821 = vmatpush2.msra.mxu0 0.0
    %822 = vmatprep.subr.mxu0 0.0
    %823 = vmatpush2.msra.mxu0 0.0
    %824 = vmatprep.subr.mxu0 0.0
    %825 = vmatpush2.msra.mxu0 0.0
    %826 = vmatprep.subr.mxu0 0.0
    %827 = vmatpush2.msra.mxu0 0.0
    %828 = vmatprep.subr.mxu0 0.0
    %829 = vmatpush2.msra.mxu0 0.0
    %830 = vmatprep.subr.mxu0 0.0
    %831 = vmatpush2.msra.mxu0 0.0
    %832 = vmatprep.subr.mxu0 0.0
    %833 = vmatpush2.msra.mxu0 0.0
    %834 = vmatprep.subr.mxu0 0.0
    %835 = vmatpush2.msra.mxu0 0.0
    %836 = vmatprep.subr.mxu0 0.0
    %837 = vmatpush2.msra.mxu0 0.0
    %838 = vmatprep.subr.mxu0 0.0
    %839 = vmatpush2.msra.mxu0 0.0
    %840 = vmatprep.mubr.f32.mxu0 0.0
    %841 = vmatmul.mubr.f32.gmra.mxu0 %v774
    %v842 = vpop.f32.mrf.mxu0
    %v843 = vadd.f32 %v63, %v842
    %v844 = vpop.f32.mrf.mxu0
    %845 = vdwg.mxu0
    %v846 = vadd.f32 %v53, %v843
    %v847 = vxor.u32 %v846, 2147483648
    %v848 = vmul.f32 %v847, 1.442695
    %v849 = vpow.pop %v848
    %v850 = vadd.f32 %v849, 1.0
    %v851 = vrcp.pop %v850
    %v852 = vmul.f32 1.0, %v851
    %854 = vrot.lane.b32.xlu0 %v843, 64
    %v855 = vpop.permute.xlu0 %854
    %v857 = vmul.f32 %v852, %v855
    %859 = vrot.lane.b32.xlu0 %v857, 64
    %v860 = vpop.permute.xlu0 %859
    %v862 = vadd.f32 %v53, %v860
    %v863 = vtanh.pop %v862
    %v864 = vsub.f32 1.0, %v852
    %866 = vrot.lane.b32.xlu0 %v863, 96
    %v867 = vpop.permute.xlu0 %866
    %v869 = vmul.f32 %v864, %v867
    %v870 = vmul.f32 %v852, %v770
    %v871 = vadd.f32 %v869, %v870
    %v872 = vld [vmem:[%s3] sm:$0xff]
    %v873 = vld [vmem:[%s3 + $0x8] sm:$0xff]
    %v874 = vld [vmem:[%s3 + $0x10] sm:$0xff]
    %v875 = vld [vmem:[%s3 + $0x18] sm:$0xff]
    %v876 = vld [vmem:[%s4] sm:$0x1]
    %v878 = vlaneseq
    %v879 = vshrl.u32 %v878, 7
    %v880 = vsub.s32 0, %v879
    %v881 = vrot.slane %v876, %v880
    %883 = vmatprep.subr.mxu0 0.0
    %884 = vmatpush1.msra.mxu0 0.0
    %885 = vmatprep.subr.mxu0 0.0
    %886 = vmatpush1.msra.mxu0 0.0
    %887 = vmatprep.subr.mxu0 0.0
    %888 = vmatpush1.msra.mxu0 0.0
    %889 = vmatprep.subr.mxu0 0.0
    %890 = vmatpush1.msra.mxu0 0.0
    %891 = vmatprep.subr.mxu0 0.0
    %892 = vmatpush1.msra.mxu0 0.0
    %893 = vmatprep.subr.mxu0 0.0
    %894 = vmatpush1.msra.mxu0 0.0
    %895 = vmatprep.subr.mxu0 0.0
    %896 = vmatpush1.msra.mxu0 0.0
    %897 = vmatprep.subr.mxu0 0.0
    %898 = vmatpush1.msra.mxu0 0.0
    %899 = vmatprep.subr.mxu0 0.0
    %900 = vmatpush1.msra.mxu0 0.0
    %901 = vmatprep.subr.mxu0 0.0
    %902 = vmatpush1.msra.mxu0 0.0
    %903 = vmatprep.subr.mxu0 0.0
    %904 = vmatpush1.msra.mxu0 0.0
    %905 = vmatprep.subr.mxu0 0.0
    %906 = vmatpush1.msra.mxu0 0.0
    %907 = vmatprep.subr.mxu0 0.0
    %908 = vmatpush1.msra.mxu0 %v875
    %909 = vmatprep.subr.mxu0 0.0
    %910 = vmatpush1.msra.mxu0 %v874
    %911 = vmatprep.subr.mxu0 0.0
    %912 = vmatpush1.msra.mxu0 %v873
    %913 = vmatprep.subr.mxu0 0.0
    %914 = vmatpush1.msra.mxu0 %v872
    %915 = vmatprep.subr.mxu0 0.0
    %916 = vmatpush2.msra.mxu0 0.0
    %917 = vmatprep.subr.mxu0 0.0
    %918 = vmatpush2.msra.mxu0 0.0
    %919 = vmatprep.subr.mxu0 0.0
    %920 = vmatpush2.msra.mxu0 0.0
    %921 = vmatprep.subr.mxu0 0.0
    %922 = vmatpush2.msra.mxu0 0.0
    %923 = vmatprep.subr.mxu0 0.0
    %924 = vmatpush2.msra.mxu0 0.0
    %925 = vmatprep.subr.mxu0 0.0
    %926 = vmatpush2.msra.mxu0 0.0
    %927 = vmatprep.subr.mxu0 0.0
    %928 = vmatpush2.msra.mxu0 0.0
    %929 = vmatprep.subr.mxu0 0.0
    %930 = vmatpush2.msra.mxu0 0.0
    %931 = vmatprep.subr.mxu0 0.0
    %932 = vmatpush2.msra.mxu0 0.0
    %933 = vmatprep.subr.mxu0 0.0
    %934 = vmatpush2.msra.mxu0 0.0
    %935 = vmatprep.subr.mxu0 0.0
    %936 = vmatpush2.msra.mxu0 0.0
    %937 = vmatprep.subr.mxu0 0.0
    %938 = vmatpush2.msra.mxu0 0.0
    %939 = vmatprep.subr.mxu0 0.0
    %940 = vmatpush2.msra.mxu0 0.0
    %941 = vmatprep.subr.mxu0 0.0
    %942 = vmatpush2.msra.mxu0 0.0
    %943 = vmatprep.subr.mxu0 0.0
    %944 = vmatpush2.msra.mxu0 0.0
    %945 = vmatprep.subr.mxu0 0.0
    %946 = vmatpush2.msra.mxu0 0.0
    %947 = vmatprep.mubr.f32.mxu0 0.0
    %948 = vmatmul.mubr.f32.gmra.mxu0 %v168
    %v949 = vpop.f32.mrf.mxu0
    %v950 = vadd.f32 %v881, %v949
    %v951 = vpop.f32.mrf.mxu0
    %952 = vdwg.mxu0
    %953 = vmatprep.subr.mxu0 0.0
    %954 = vmatpush1.msra.mxu0 0.0
    %955 = vmatprep.subr.mxu0 0.0
    %956 = vmatpush1.msra.mxu0 0.0
    %957 = vmatprep.subr.mxu0 0.0
    %958 = vmatpush1.msra.mxu0 0.0
    %959 = vmatprep.subr.mxu0 0.0
    %960 = vmatpush1.msra.mxu0 0.0
    %961 = vmatprep.subr.mxu0 0.0
    %962 = vmatpush1.msra.mxu0 0.0
    %963 = vmatprep.subr.mxu0 0.0
    %964 = vmatpush1.msra.mxu0 0.0
    %965 = vmatprep.subr.mxu0 0.0
    %966 = vmatpush1.msra.mxu0 0.0
    %967 = vmatprep.subr.mxu0 0.0
    %968 = vmatpush1.msra.mxu0 0.0
    %969 = vmatprep.subr.mxu0 0.0
    %970 = vmatpush1.msra.mxu0 0.0
    %971 = vmatprep.subr.mxu0 0.0
    %972 = vmatpush1.msra.mxu0 0.0
    %973 = vmatprep.subr.mxu0 0.0
    %974 = vmatpush1.msra.mxu0 0.0
    %975 = vmatprep.subr.mxu0 0.0
    %976 = vmatpush1.msra.mxu0 0.0
    %977 = vmatprep.subr.mxu0 0.0
    %978 = vmatpush1.msra.mxu0 %v875
    %979 = vmatprep.subr.mxu0 0.0
    %980 = vmatpush1.msra.mxu0 %v874
    %981 = vmatprep.subr.mxu0 0.0
    %982 = vmatpush1.msra.mxu0 %v873
    %983 = vmatprep.subr.mxu0 0.0
    %984 = vmatpush1.msra.mxu0 %v872
    %985 = vmatprep.subr.mxu0 0.0
    %986 = vmatpush2.msra.mxu0 0.0
    %987 = vmatprep.subr.mxu0 0.0
    %988 = vmatpush2.msra.mxu0 0.0
    %989 = vmatprep.subr.mxu0 0.0
    %990 = vmatpush2.msra.mxu0 0.0
    %991 = vmatprep.subr.mxu0 0.0
    %992 = vmatpush2.msra.mxu0 0.0
    %993 = vmatprep.subr.mxu0 0.0
    %994 = vmatpush2.msra.mxu0 0.0
    %995 = vmatprep.subr.mxu0 0.0
    %996 = vmatpush2.msra.mxu0 0.0
    %997 = vmatprep.subr.mxu0 0.0
    %998 = vmatpush2.msra.mxu0 0.0
    %999 = vmatprep.subr.mxu0 0.0
    %1000 = vmatpush2.msra.mxu0 0.0
    %1001 = vmatprep.subr.mxu0 0.0
    %1002 = vmatpush2.msra.mxu0 0.0
    %1003 = vmatprep.subr.mxu0 0.0
    %1004 = vmatpush2.msra.mxu0 0.0
    %1005 = vmatprep.subr.mxu0 0.0
    %1006 = vmatpush2.msra.mxu0 0.0
    %1007 = vmatprep.subr.mxu0 0.0
    %1008 = vmatpush2.msra.mxu0 0.0
    %1009 = vmatprep.subr.mxu0 0.0
    %1010 = vmatpush2.msra.mxu0 0.0
    %1011 = vmatprep.subr.mxu0 0.0
    %1012 = vmatpush2.msra.mxu0 0.0
    %1013 = vmatprep.subr.mxu0 0.0
    %1014 = vmatpush2.msra.mxu0 0.0
    %1015 = vmatprep.subr.mxu0 0.0
    %1016 = vmatpush2.msra.mxu0 0.0
    %1017 = vmatprep.mubr.f32.mxu0 0.0
    %1018 = vmatmul.mubr.f32.gmra.mxu0 %v269
    %v1019 = vpop.f32.mrf.mxu0
    %v1020 = vadd.f32 %v881, %v1019
    %v1021 = vpop.f32.mrf.mxu0
    %1022 = vdwg.mxu0
    %1023 = vmatprep.subr.mxu0 0.0
    %1024 = vmatpush1.msra.mxu0 0.0
    %1025 = vmatprep.subr.mxu0 0.0
    %1026 = vmatpush1.msra.mxu0 0.0
    %1027 = vmatprep.subr.mxu0 0.0
    %1028 = vmatpush1.msra.mxu0 0.0
    %1029 = vmatprep.subr.mxu0 0.0
    %1030 = vmatpush1.msra.mxu0 0.0
    %1031 = vmatprep.subr.mxu0 0.0
    %1032 = vmatpush1.msra.mxu0 0.0
    %1033 = vmatprep.subr.mxu0 0.0
    %1034 = vmatpush1.msra.mxu0 0.0
    %1035 = vmatprep.subr.mxu0 0.0
    %1036 = vmatpush1.msra.mxu0 0.0
    %1037 = vmatprep.subr.mxu0 0.0
    %1038 = vmatpush1.msra.mxu0 0.0
    %1039 = vmatprep.subr.mxu0 0.0
    %1040 = vmatpush1.msra.mxu0 0.0
    %1041 = vmatprep.subr.mxu0 0.0
    %1042 = vmatpush1.msra.mxu0 0.0
    %1043 = vmatprep.subr.mxu0 0.0
    %1044 = vmatpush1.msra.mxu0 0.0
    %1045 = vmatprep.subr.mxu0 0.0
    %1046 = vmatpush1.msra.mxu0 0.0
    %1047 = vmatprep.subr.mxu0 0.0
    %1048 = vmatpush1.msra.mxu0 %v875
    %1049 = vmatprep.subr.mxu0 0.0
    %1050 = vmatpush1.msra.mxu0 %v874
    %1051 = vmatprep.subr.mxu0 0.0
    %1052 = vmatpush1.msra.mxu0 %v873
    %1053 = vmatprep.subr.mxu0 0.0
    %1054 = vmatpush1.msra.mxu0 %v872
    %1055 = vmatprep.subr.mxu0 0.0
    %1056 = vmatpush2.msra.mxu0 0.0
    %1057 = vmatprep.subr.mxu0 0.0
    %1058 = vmatpush2.msra.mxu0 0.0
    %1059 = vmatprep.subr.mxu0 0.0
    %1060 = vmatpush2.msra.mxu0 0.0
    %1061 = vmatprep.subr.mxu0 0.0
    %1062 = vmatpush2.msra.mxu0 0.0
    %1063 = vmatprep.subr.mxu0 0.0
    %1064 = vmatpush2.msra.mxu0 0.0
    %1065 = vmatprep.subr.mxu0 0.0
    %1066 = vmatpush2.msra.mxu0 0.0
    %1067 = vmatprep.subr.mxu0 0.0
    %1068 = vmatpush2.msra.mxu0 0.0
    %1069 = vmatprep.subr.mxu0 0.0
    %1070 = vmatpush2.msra.mxu0 0.0
    %1071 = vmatprep.subr.mxu0 0.0
    %1072 = vmatpush2.msra.mxu0 0.0
    %1073 = vmatprep.subr.mxu0 0.0
    %1074 = vmatpush2.msra.mxu0 0.0
    %1075 = vmatprep.subr.mxu0 0.0
    %1076 = vmatpush2.msra.mxu0 0.0
    %1077 = vmatprep.subr.mxu0 0.0
    %1078 = vmatpush2.msra.mxu0 0.0
    %1079 = vmatprep.subr.mxu0 0.0
    %1080 = vmatpush2.msra.mxu0 0.0
    %1081 = vmatprep.subr.mxu0 0.0
    %1082 = vmatpush2.msra.mxu0 0.0
    %1083 = vmatprep.subr.mxu0 0.0
    %1084 = vmatpush2.msra.mxu0 0.0
    %1085 = vmatprep.subr.mxu0 0.0
    %1086 = vmatpush2.msra.mxu0 0.0
    %1087 = vmatprep.mubr.f32.mxu0 0.0
    %1088 = vmatmul.mubr.f32.gmra.mxu0 %v370
    %v1089 = vpop.f32.mrf.mxu0
    %v1090 = vadd.f32 %v881, %v1089
    %v1091 = vpop.f32.mrf.mxu0
    %1092 = vdwg.mxu0
    %1093 = vmatprep.subr.mxu0 0.0
    %1094 = vmatpush1.msra.mxu0 0.0
    %1095 = vmatprep.subr.mxu0 0.0
    %1096 = vmatpush1.msra.mxu0 0.0
    %1097 = vmatprep.subr.mxu0 0.0
    %1098 = vmatpush1.msra.mxu0 0.0
    %1099 = vmatprep.subr.mxu0 0.0
    %1100 = vmatpush1.msra.mxu0 0.0
    %1101 = vmatprep.subr.mxu0 0.0
    %1102 = vmatpush1.msra.mxu0 0.0
    %1103 = vmatprep.subr.mxu0 0.0
    %1104 = vmatpush1.msra.mxu0 0.0
    %1105 = vmatprep.subr.mxu0 0.0
    %1106 = vmatpush1.msra.mxu0 0.0
    %1107 = vmatprep.subr.mxu0 0.0
    %1108 = vmatpush1.msra.mxu0 0.0
    %1109 = vmatprep.subr.mxu0 0.0
    %1110 = vmatpush1.msra.mxu0 0.0
    %1111 = vmatprep.subr.mxu0 0.0
    %1112 = vmatpush1.msra.mxu0 0.0
    %1113 = vmatprep.subr.mxu0 0.0
    %1114 = vmatpush1.msra.mxu0 0.0
    %1115 = vmatprep.subr.mxu0 0.0
    %1116 = vmatpush1.msra.mxu0 0.0
    %1117 = vmatprep.subr.mxu0 0.0
    %1118 = vmatpush1.msra.mxu0 %v875
    %1119 = vmatprep.subr.mxu0 0.0
    %1120 = vmatpush1.msra.mxu0 %v874
    %1121 = vmatprep.subr.mxu0 0.0
    %1122 = vmatpush1.msra.mxu0 %v873
    %1123 = vmatprep.subr.mxu0 0.0
    %1124 = vmatpush1.msra.mxu0 %v872
    %1125 = vmatprep.subr.mxu0 0.0
    %1126 = vmatpush2.msra.mxu0 0.0
    %1127 = vmatprep.subr.mxu0 0.0
    %1128 = vmatpush2.msra.mxu0 0.0
    %1129 = vmatprep.subr.mxu0 0.0
    %1130 = vmatpush2.msra.mxu0 0.0
    %1131 = vmatprep.subr.mxu0 0.0
    %1132 = vmatpush2.msra.mxu0 0.0
    %1133 = vmatprep.subr.mxu0 0.0
    %1134 = vmatpush2.msra.mxu0 0.0
    %1135 = vmatprep.subr.mxu0 0.0
    %1136 = vmatpush2.msra.mxu0 0.0
    %1137 = vmatprep.subr.mxu0 0.0
    %1138 = vmatpush2.msra.mxu0 0.0
    %1139 = vmatprep.subr.mxu0 0.0
    %1140 = vmatpush2.msra.mxu0 0.0
    %1141 = vmatprep.subr.mxu0 0.0
    %1142 = vmatpush2.msra.mxu0 0.0
    %1143 = vmatprep.subr.mxu0 0.0
    %1144 = vmatpush2.msra.mxu0 0.0
    %1145 = vmatprep.subr.mxu0 0.0
    %1146 = vmatpush2.msra.mxu0 0.0
    %1147 = vmatprep.subr.mxu0 0.0
    %1148 = vmatpush2.msra.mxu0 0.0
    %1149 = vmatprep.subr.mxu0 0.0
    %1150 = vmatpush2.msra.mxu0 0.0
    %1151 = vmatprep.subr.mxu0 0.0
    %1152 = vmatpush2.msra.mxu0 0.0
    %1153 = vmatprep.subr.mxu0 0.0
    %1154 = vmatpush2.msra.mxu0 0.0
    %1155 = vmatprep.subr.mxu0 0.0
    %1156 = vmatpush2.msra.mxu0 0.0
    %1157 = vmatprep.mubr.f32.mxu0 0.0
    %1158 = vmatmul.mubr.f32.gmra.mxu0 %v471
    %v1159 = vpop.f32.mrf.mxu0
    %v1160 = vadd.f32 %v881, %v1159
    %v1161 = vpop.f32.mrf.mxu0
    %1162 = vdwg.mxu0
    %1163 = vmatprep.subr.mxu0 0.0
    %1164 = vmatpush1.msra.mxu0 0.0
    %1165 = vmatprep.subr.mxu0 0.0
    %1166 = vmatpush1.msra.mxu0 0.0
    %1167 = vmatprep.subr.mxu0 0.0
    %1168 = vmatpush1.msra.mxu0 0.0
    %1169 = vmatprep.subr.mxu0 0.0
    %1170 = vmatpush1.msra.mxu0 0.0
    %1171 = vmatprep.subr.mxu0 0.0
    %1172 = vmatpush1.msra.mxu0 0.0
    %1173 = vmatprep.subr.mxu0 0.0
    %1174 = vmatpush1.msra.mxu0 0.0
    %1175 = vmatprep.subr.mxu0 0.0
    %1176 = vmatpush1.msra.mxu0 0.0
    %1177 = vmatprep.subr.mxu0 0.0
    %1178 = vmatpush1.msra.mxu0 0.0
    %1179 = vmatprep.subr.mxu0 0.0
    %1180 = vmatpush1.msra.mxu0 0.0
    %1181 = vmatprep.subr.mxu0 0.0
    %1182 = vmatpush1.msra.mxu0 0.0
    %1183 = vmatprep.subr.mxu0 0.0
    %1184 = vmatpush1.msra.mxu0 0.0
    %1185 = vmatprep.subr.mxu0 0.0
    %1186 = vmatpush1.msra.mxu0 0.0
    %1187 = vmatprep.subr.mxu0 0.0
    %1188 = vmatpush1.msra.mxu0 %v875
    %1189 = vmatprep.subr.mxu0 0.0
    %1190 = vmatpush1.msra.mxu0 %v874
    %1191 = vmatprep.subr.mxu0 0.0
    %1192 = vmatpush1.msra.mxu0 %v873
    %1193 = vmatprep.subr.mxu0 0.0
    %1194 = vmatpush1.msra.mxu0 %v872
    %1195 = vmatprep.subr.mxu0 0.0
    %1196 = vmatpush2.msra.mxu0 0.0
    %1197 = vmatprep.subr.mxu0 0.0
    %1198 = vmatpush2.msra.mxu0 0.0
    %1199 = vmatprep.subr.mxu0 0.0
    %1200 = vmatpush2.msra.mxu0 0.0
    %1201 = vmatprep.subr.mxu0 0.0
    %1202 = vmatpush2.msra.mxu0 0.0
    %1203 = vmatprep.subr.mxu0 0.0
    %1204 = vmatpush2.msra.mxu0 0.0
    %1205 = vmatprep.subr.mxu0 0.0
    %1206 = vmatpush2.msra.mxu0 0.0
    %1207 = vmatprep.subr.mxu0 0.0
    %1208 = vmatpush2.msra.mxu0 0.0
    %1209 = vmatprep.subr.mxu0 0.0
    %1210 = vmatpush2.msra.mxu0 0.0
    %1211 = vmatprep.subr.mxu0 0.0
    %1212 = vmatpush2.msra.mxu0 0.0
    %1213 = vmatprep.subr.mxu0 0.0
    %1214 = vmatpush2.msra.mxu0 0.0
    %1215 = vmatprep.subr.mxu0 0.0
    %1216 = vmatpush2.msra.mxu0 0.0
    %1217 = vmatprep.subr.mxu0 0.0
    %1218 = vmatpush2.msra.mxu0 0.0
    %1219 = vmatprep.subr.mxu0 0.0
    %1220 = vmatpush2.msra.mxu0 0.0
    %1221 = vmatprep.subr.mxu0 0.0
    %1222 = vmatpush2.msra.mxu0 0.0
    %1223 = vmatprep.subr.mxu0 0.0
    %1224 = vmatpush2.msra.mxu0 0.0
    %1225 = vmatprep.subr.mxu0 0.0
    %1226 = vmatpush2.msra.mxu0 0.0
    %1227 = vmatprep.mubr.f32.mxu0 0.0
    %1228 = vmatmul.mubr.f32.gmra.mxu0 %v572
    %v1229 = vpop.f32.mrf.mxu0
    %v1230 = vadd.f32 %v881, %v1229
    %v1231 = vpop.f32.mrf.mxu0
    %1232 = vdwg.mxu0
    %1233 = vmatprep.subr.mxu0 0.0
    %1234 = vmatpush1.msra.mxu0 0.0
    %1235 = vmatprep.subr.mxu0 0.0
    %1236 = vmatpush1.msra.mxu0 0.0
    %1237 = vmatprep.subr.mxu0 0.0
    %1238 = vmatpush1.msra.mxu0 0.0
    %1239 = vmatprep.subr.mxu0 0.0
    %1240 = vmatpush1.msra.mxu0 0.0
    %1241 = vmatprep.subr.mxu0 0.0
    %1242 = vmatpush1.msra.mxu0 0.0
    %1243 = vmatprep.subr.mxu0 0.0
    %1244 = vmatpush1.msra.mxu0 0.0
    %1245 = vmatprep.subr.mxu0 0.0
    %1246 = vmatpush1.msra.mxu0 0.0
    %1247 = vmatprep.subr.mxu0 0.0
    %1248 = vmatpush1.msra.mxu0 0.0
    %1249 = vmatprep.subr.mxu0 0.0
    %1250 = vmatpush1.msra.mxu0 0.0
    %1251 = vmatprep.subr.mxu0 0.0
    %1252 = vmatpush1.msra.mxu0 0.0
    %1253 = vmatprep.subr.mxu0 0.0
    %1254 = vmatpush1.msra.mxu0 0.0
    %1255 = vmatprep.subr.mxu0 0.0
    %1256 = vmatpush1.msra.mxu0 0.0
    %1257 = vmatprep.subr.mxu0 0.0
    %1258 = vmatpush1.msra.mxu0 %v875
    %1259 = vmatprep.subr.mxu0 0.0
    %1260 = vmatpush1.msra.mxu0 %v874
    %1261 = vmatprep.subr.mxu0 0.0
    %1262 = vmatpush1.msra.mxu0 %v873
    %1263 = vmatprep.subr.mxu0 0.0
    %1264 = vmatpush1.msra.mxu0 %v872
    %1265 = vmatprep.subr.mxu0 0.0
    %1266 = vmatpush2.msra.mxu0 0.0
    %1267 = vmatprep.subr.mxu0 0.0
    %1268 = vmatpush2.msra.mxu0 0.0
    %1269 = vmatprep.subr.mxu0 0.0
    %1270 = vmatpush2.msra.mxu0 0.0
    %1271 = vmatprep.subr.mxu0 0.0
    %1272 = vmatpush2.msra.mxu0 0.0
    %1273 = vmatprep.subr.mxu0 0.0
    %1274 = vmatpush2.msra.mxu0 0.0
    %1275 = vmatprep.subr.mxu0 0.0
    %1276 = vmatpush2.msra.mxu0 0.0
    %1277 = vmatprep.subr.mxu0 0.0
    %1278 = vmatpush2.msra.mxu0 0.0
    %1279 = vmatprep.subr.mxu0 0.0
    %1280 = vmatpush2.msra.mxu0 0.0
    %1281 = vmatprep.subr.mxu0 0.0
    %1282 = vmatpush2.msra.mxu0 0.0
    %1283 = vmatprep.subr.mxu0 0.0
    %1284 = vmatpush2.msra.mxu0 0.0
    %1285 = vmatprep.subr.mxu0 0.0
    %1286 = vmatpush2.msra.mxu0 0.0
    %1287 = vmatprep.subr.mxu0 0.0
    %1288 = vmatpush2.msra.mxu0 0.0
    %1289 = vmatprep.subr.mxu0 0.0
    %1290 = vmatpush2.msra.mxu0 0.0
    %1291 = vmatprep.subr.mxu0 0.0
    %1292 = vmatpush2.msra.mxu0 0.0
    %1293 = vmatprep.subr.mxu0 0.0
    %1294 = vmatpush2.msra.mxu0 0.0
    %1295 = vmatprep.subr.mxu0 0.0
    %1296 = vmatpush2.msra.mxu0 0.0
    %1297 = vmatprep.mubr.f32.mxu0 0.0
    %1298 = vmatmul.mubr.f32.gmra.mxu0 %v673
    %v1299 = vpop.f32.mrf.mxu0
    %v1300 = vadd.f32 %v881, %v1299
    %v1301 = vpop.f32.mrf.mxu0
    %1302 = vdwg.mxu0
    %1303 = vmatprep.subr.mxu0 0.0
    %1304 = vmatpush1.msra.mxu0 0.0
    %1305 = vmatprep.subr.mxu0 0.0
    %1306 = vmatpush1.msra.mxu0 0.0
    %1307 = vmatprep.subr.mxu0 0.0
    %1308 = vmatpush1.msra.mxu0 0.0
    %1309 = vmatprep.subr.mxu0 0.0
    %1310 = vmatpush1.msra.mxu0 0.0
    %1311 = vmatprep.subr.mxu0 0.0
    %1312 = vmatpush1.msra.mxu0 0.0
    %1313 = vmatprep.subr.mxu0 0.0
    %1314 = vmatpush1.msra.mxu0 0.0
    %1315 = vmatprep.subr.mxu0 0.0
    %1316 = vmatpush1.msra.mxu0 0.0
    %1317 = vmatprep.subr.mxu0 0.0
    %1318 = vmatpush1.msra.mxu0 0.0
    %1319 = vmatprep.subr.mxu0 0.0
    %1320 = vmatpush1.msra.mxu0 0.0
    %1321 = vmatprep.subr.mxu0 0.0
    %1322 = vmatpush1.msra.mxu0 0.0
    %1323 = vmatprep.subr.mxu0 0.0
    %1324 = vmatpush1.msra.mxu0 0.0
    %1325 = vmatprep.subr.mxu0 0.0
    %1326 = vmatpush1.msra.mxu0 0.0
    %1327 = vmatprep.subr.mxu0 0.0
    %1328 = vmatpush1.msra.mxu0 %v875
    %1329 = vmatprep.subr.mxu0 0.0
    %1330 = vmatpush1.msra.mxu0 %v874
    %1331 = vmatprep.subr.mxu0 0.0
    %1332 = vmatpush1.msra.mxu0 %v873
    %1333 = vmatprep.subr.mxu0 0.0
    %1334 = vmatpush1.msra.mxu0 %v872
    %1335 = vmatprep.subr.mxu0 0.0
    %1336 = vmatpush2.msra.mxu0 0.0
    %1337 = vmatprep.subr.mxu0 0.0
    %1338 = vmatpush2.msra.mxu0 0.0
    %1339 = vmatprep.subr.mxu0 0.0
    %1340 = vmatpush2.msra.mxu0 0.0
    %1341 = vmatprep.subr.mxu0 0.0
    %1342 = vmatpush2.msra.mxu0 0.0
    %1343 = vmatprep.subr.mxu0 0.0
    %1344 = vmatpush2.msra.mxu0 0.0
    %1345 = vmatprep.subr.mxu0 0.0
    %1346 = vmatpush2.msra.mxu0 0.0
    %1347 = vmatprep.subr.mxu0 0.0
    %1348 = vmatpush2.msra.mxu0 0.0
    %1349 = vmatprep.subr.mxu0 0.0
    %1350 = vmatpush2.msra.mxu0 0.0
    %1351 = vmatprep.subr.mxu0 0.0
    %1352 = vmatpush2.msra.mxu0 0.0
    %1353 = vmatprep.subr.mxu0 0.0
    %1354 = vmatpush2.msra.mxu0 0.0
    %1355 = vmatprep.subr.mxu0 0.0
    %1356 = vmatpush2.msra.mxu0 0.0
    %1357 = vmatprep.subr.mxu0 0.0
    %1358 = vmatpush2.msra.mxu0 0.0
    %1359 = vmatprep.subr.mxu0 0.0
    %1360 = vmatpush2.msra.mxu0 0.0
    %1361 = vmatprep.subr.mxu0 0.0
    %1362 = vmatpush2.msra.mxu0 0.0
    %1363 = vmatprep.subr.mxu0 0.0
    %1364 = vmatpush2.msra.mxu0 0.0
    %1365 = vmatprep.subr.mxu0 0.0
    %1366 = vmatpush2.msra.mxu0 0.0
    %1367 = vmatprep.mubr.f32.mxu0 0.0
    %1368 = vmatmul.mubr.f32.gmra.mxu0 %v774
    %v1369 = vpop.f32.mrf.mxu0
    %v1370 = vadd.f32 %v881, %v1369
    %v1371 = vpop.f32.mrf.mxu0
    %1372 = vdwg.mxu0
    %1374 = vrot.lane.b32.xlu0 %v871, 96
    %v1375 = vpop.permute.xlu0 %1374
    %v1376 = vsel %vm65, %v1375, 0
    %1378 = vmatprep.subr.mxu0 0.0
    %1379 = vmatpush1.msra.mxu0 0.0
    %1380 = vmatprep.subr.mxu0 0.0
    %1381 = vmatpush1.msra.mxu0 0.0
    %1382 = vmatprep.subr.mxu0 0.0
    %1383 = vmatpush1.msra.mxu0 0.0
    %1384 = vmatprep.subr.mxu0 0.0
    %1385 = vmatpush1.msra.mxu0 0.0
    %1386 = vmatprep.subr.mxu0 0.0
    %1387 = vmatpush1.msra.mxu0 0.0
    %1388 = vmatprep.subr.mxu0 0.0
    %1389 = vmatpush1.msra.mxu0 0.0
    %1390 = vmatprep.subr.mxu0 0.0
    %1391 = vmatpush1.msra.mxu0 0.0
    %1392 = vmatprep.subr.mxu0 0.0
    %1393 = vmatpush1.msra.mxu0 0.0
    %1394 = vmatprep.subr.mxu0 0.0
    %1395 = vmatpush1.msra.mxu0 0.0
    %1396 = vmatprep.subr.mxu0 0.0
    %1397 = vmatpush1.msra.mxu0 0.0
    %1398 = vmatprep.subr.mxu0 0.0
    %1399 = vmatpush1.msra.mxu0 0.0
    %1400 = vmatprep.subr.mxu0 0.0
    %1401 = vmatpush1.msra.mxu0 0.0
    %1402 = vmatprep.subr.mxu0 0.0
    %1403 = vmatpush1.msra.mxu0 %v875
    %1404 = vmatprep.subr.mxu0 0.0
    %1405 = vmatpush1.msra.mxu0 %v874
    %1406 = vmatprep.subr.mxu0 0.0
    %1407 = vmatpush1.msra.mxu0 %v873
    %1408 = vmatprep.subr.mxu0 0.0
    %1409 = vmatpush1.msra.mxu0 %v872
    %1410 = vmatprep.subr.mxu0 0.0
    %1411 = vmatpush2.msra.mxu0 0.0
    %1412 = vmatprep.subr.mxu0 0.0
    %1413 = vmatpush2.msra.mxu0 0.0
    %1414 = vmatprep.subr.mxu0 0.0
    %1415 = vmatpush2.msra.mxu0 0.0
    %1416 = vmatprep.subr.mxu0 0.0
    %1417 = vmatpush2.msra.mxu0 0.0
    %1418 = vmatprep.subr.mxu0 0.0
    %1419 = vmatpush2.msra.mxu0 0.0
    %1420 = vmatprep.subr.mxu0 0.0
    %1421 = vmatpush2.msra.mxu0 0.0
    %1422 = vmatprep.subr.mxu0 0.0
    %1423 = vmatpush2.msra.mxu0 0.0
    %1424 = vmatprep.subr.mxu0 0.0
    %1425 = vmatpush2.msra.mxu0 0.0
    %1426 = vmatprep.subr.mxu0 0.0
    %1427 = vmatpush2.msra.mxu0 0.0
    %1428 = vmatprep.subr.mxu0 0.0
    %1429 = vmatpush2.msra.mxu0 0.0
    %1430 = vmatprep.subr.mxu0 0.0
    %1431 = vmatpush2.msra.mxu0 0.0
    %1432 = vmatprep.subr.mxu0 0.0
    %1433 = vmatpush2.msra.mxu0 0.0
    %1434 = vmatprep.subr.mxu0 0.0
    %1435 = vmatpush2.msra.mxu0 0.0
    %1436 = vmatprep.subr.mxu0 0.0
    %1437 = vmatpush2.msra.mxu0 0.0
    %1438 = vmatprep.subr.mxu0 0.0
    %1439 = vmatpush2.msra.mxu0 0.0
    %1440 = vmatprep.subr.mxu0 0.0
    %1441 = vmatpush2.msra.mxu0 0.0
    %1442 = vmatprep.mubr.f32.mxu0 0.0
    %1443 = vmatmul.mubr.f32.gmra.mxu0 %v1376
    %v1444 = vpop.f32.mrf.mxu0
    %v1445 = vadd.f32 %v881, %v1444
    %v1446 = vpop.f32.mrf.mxu0
    %1447 = vdwg.mxu0
    %v1448 = vld [vmem:[%s5] sm:$0xff]
    %v1449 = vld [vmem:[%s5 + $0x8] sm:$0xff]
    %v1450 = vld [vmem:[%s5 + $0x10] sm:$0xff]
    %v1451 = vld [vmem:[%s5 + $0x18] sm:$0xff]
    %v1452 = vld [vmem:[%s6] sm:$0x1]
    %v1454 = vlaneseq
    %v1455 = vshrl.u32 %v1454, 7
    %v1456 = vsub.s32 0, %v1455
    %v1457 = vrot.slane %v1452, %v1456
    %1459 = vmatprep.subr.mxu0 0.0
    %1460 = vmatpush1.msra.mxu0 0.0
    %1461 = vmatprep.subr.mxu0 0.0
    %1462 = vmatpush1.msra.mxu0 0.0
    %1463 = vmatprep.subr.mxu0 0.0
    %1464 = vmatpush1.msra.mxu0 0.0
    %1465 = vmatprep.subr.mxu0 0.0
    %1466 = vmatpush1.msra.mxu0 0.0
    %1467 = vmatprep.subr.mxu0 0.0
    %1468 = vmatpush1.msra.mxu0 0.0
    %1469 = vmatprep.subr.mxu0 0.0
    %1470 = vmatpush1.msra.mxu0 0.0
    %1471 = vmatprep.subr.mxu0 0.0
    %1472 = vmatpush1.msra.mxu0 0.0
    %1473 = vmatprep.subr.mxu0 0.0
    %1474 = vmatpush1.msra.mxu0 0.0
    %1475 = vmatprep.subr.mxu0 0.0
    %1476 = vmatpush1.msra.mxu0 0.0
    %1477 = vmatprep.subr.mxu0 0.0
    %1478 = vmatpush1.msra.mxu0 0.0
    %1479 = vmatprep.subr.mxu0 0.0
    %1480 = vmatpush1.msra.mxu0 0.0
    %1481 = vmatprep.subr.mxu0 0.0
    %1482 = vmatpush1.msra.mxu0 0.0
    %1483 = vmatprep.subr.mxu0 0.0
    %1484 = vmatpush1.msra.mxu0 %v1451
    %1485 = vmatprep.subr.mxu0 0.0
    %1486 = vmatpush1.msra.mxu0 %v1450
    %1487 = vmatprep.subr.mxu0 0.0
    %1488 = vmatpush1.msra.mxu0 %v1449
    %1489 = vmatprep.subr.mxu0 0.0
    %1490 = vmatpush1.msra.mxu0 %v1448
    %1491 = vmatprep.subr.mxu0 0.0
    %1492 = vmatpush2.msra.mxu0 0.0
    %1493 = vmatprep.subr.mxu0 0.0
    %1494 = vmatpush2.msra.mxu0 0.0
    %1495 = vmatprep.subr.mxu0 0.0
    %1496 = vmatpush2.msra.mxu0 0.0
    %1497 = vmatprep.subr.mxu0 0.0
    %1498 = vmatpush2.msra.mxu0 0.0
    %1499 = vmatprep.subr.mxu0 0.0
    %1500 = vmatpush2.msra.mxu0 0.0
    %1501 = vmatprep.subr.mxu0 0.0
    %1502 = vmatpush2.msra.mxu0 0.0
    %1503 = vmatprep.subr.mxu0 0.0
    %1504 = vmatpush2.msra.mxu0 0.0
    %1505 = vmatprep.subr.mxu0 0.0
    %1506 = vmatpush2.msra.mxu0 0.0
    %1507 = vmatprep.subr.mxu0 0.0
    %1508 = vmatpush2.msra.mxu0 0.0
    %1509 = vmatprep.subr.mxu0 0.0
    %1510 = vmatpush2.msra.mxu0 0.0
    %1511 = vmatprep.subr.mxu0 0.0
    %1512 = vmatpush2.msra.mxu0 0.0
    %1513 = vmatprep.subr.mxu0 0.0
    %1514 = vmatpush2.msra.mxu0 0.0
    %1515 = vmatprep.subr.mxu0 0.0
    %1516 = vmatpush2.msra.mxu0 0.0
    %1517 = vmatprep.subr.mxu0 0.0
    %1518 = vmatpush2.msra.mxu0 0.0
    %1519 = vmatprep.subr.mxu0 0.0
    %1520 = vmatpush2.msra.mxu0 0.0
    %1521 = vmatprep.subr.mxu0 0.0
    %1522 = vmatpush2.msra.mxu0 0.0
    %1523 = vmatprep.mubr.f32.mxu0 0.0
    %1524 = vmatmul.mubr.f32.gmra.mxu0 %v67
    %v1525 = vpop.f32.mrf.mxu0
    %v1526 = vadd.f32 %v1457, %v1525
    %v1527 = vpop.f32.mrf.mxu0
    %1528 = vdwg.mxu0
    %v1529 = vadd.f32 %v950, %v1526
    %v1530 = vxor.u32 %v1529, 2147483648
    %v1531 = vmul.f32 %v1530, 1.442695
    %v1532 = vpow.pop %v1531
    %v1533 = vadd.f32 %v1532, 1.0
    %v1534 = vrcp.pop %v1533
    %v1535 = vmul.f32 1.0, %v1534
    %1537 = vrot.lane.b32.xlu0 %v1526, 64
    %v1538 = vpop.permute.xlu0 %1537
    %v1540 = vmul.f32 %v1535, %v1538
    %1542 = vrot.lane.b32.xlu0 %v1540, 64
    %v1543 = vpop.permute.xlu0 %1542
    %v1545 = vadd.f32 %v950, %v1543
    %v1546 = vtanh.pop %v1545
    %v1547 = vsub.f32 1.0, %v1535
    %1549 = vrot.lane.b32.xlu0 %v1546, 96
    %v1550 = vpop.permute.xlu0 %1549
    %v1552 = vmul.f32 %v1547, %v1550
    %v1553 = vmul.f32 %v1535, 0.0
    %v1554 = vadd.f32 %v1552, %v1553
    %1556 = vrot.lane.b32.xlu0 %v1554, 96
    %v1557 = vpop.permute.xlu0 %1556
    %v1558 = vsel %vm65, %v1557, 0
    %1560 = vmatprep.subr.mxu0 0.0
    %1561 = vmatpush1.msra.mxu0 0.0
    %1562 = vmatprep.subr.mxu0 0.0
    %1563 = vmatpush1.msra.mxu0 0.0
    %1564 = vmatprep.subr.mxu0 0.0
    %1565 = vmatpush1.msra.mxu0 0.0
    %1566 = vmatprep.subr.mxu0 0.0
    %1567 = vmatpush1.msra.mxu0 0.0
    %1568 = vmatprep.subr.mxu0 0.0
    %1569 = vmatpush1.msra.mxu0 0.0
    %1570 = vmatprep.subr.mxu0 0.0
    %1571 = vmatpush1.msra.mxu0 0.0
    %1572 = vmatprep.subr.mxu0 0.0
    %1573 = vmatpush1.msra.mxu0 0.0
    %1574 = vmatprep.subr.mxu0 0.0
    %1575 = vmatpush1.msra.mxu0 0.0
    %1576 = vmatprep.subr.mxu0 0.0
    %1577 = vmatpush1.msra.mxu0 0.0
    %1578 = vmatprep.subr.mxu0 0.0
    %1579 = vmatpush1.msra.mxu0 0.0
    %1580 = vmatprep.subr.mxu0 0.0
    %1581 = vmatpush1.msra.mxu0 0.0
    %1582 = vmatprep.subr.mxu0 0.0
    %1583 = vmatpush1.msra.mxu0 0.0
    %1584 = vmatprep.subr.mxu0 0.0
    %1585 = vmatpush1.msra.mxu0 %v1451
    %1586 = vmatprep.subr.mxu0 0.0
    %1587 = vmatpush1.msra.mxu0 %v1450
    %1588 = vmatprep.subr.mxu0 0.0
    %1589 = vmatpush1.msra.mxu0 %v1449
    %1590 = vmatprep.subr.mxu0 0.0
    %1591 = vmatpush1.msra.mxu0 %v1448
    %1592 = vmatprep.subr.mxu0 0.0
    %1593 = vmatpush2.msra.mxu0 0.0
    %1594 = vmatprep.subr.mxu0 0.0
    %1595 = vmatpush2.msra.mxu0 0.0
    %1596 = vmatprep.subr.mxu0 0.0
    %1597 = vmatpush2.msra.mxu0 0.0
    %1598 = vmatprep.subr.mxu0 0.0
    %1599 = vmatpush2.msra.mxu0 0.0
    %1600 = vmatprep.subr.mxu0 0.0
    %1601 = vmatpush2.msra.mxu0 0.0
    %1602 = vmatprep.subr.mxu0 0.0
    %1603 = vmatpush2.msra.mxu0 0.0
    %1604 = vmatprep.subr.mxu0 0.0
    %1605 = vmatpush2.msra.mxu0 0.0
    %1606 = vmatprep.subr.mxu0 0.0
    %1607 = vmatpush2.msra.mxu0 0.0
    %1608 = vmatprep.subr.mxu0 0.0
    %1609 = vmatpush2.msra.mxu0 0.0
    %1610 = vmatprep.subr.mxu0 0.0
    %1611 = vmatpush2.msra.mxu0 0.0
    %1612 = vmatprep.subr.mxu0 0.0
    %1613 = vmatpush2.msra.mxu0 0.0
    %1614 = vmatprep.subr.mxu0 0.0
    %1615 = vmatpush2.msra.mxu0 0.0
    %1616 = vmatprep.subr.mxu0 0.0
    %1617 = vmatpush2.msra.mxu0 0.0
    %1618 = vmatprep.subr.mxu0 0.0
    %1619 = vmatpush2.msra.mxu0 0.0
    %1620 = vmatprep.subr.mxu0 0.0
    %1621 = vmatpush2.msra.mxu0 0.0
    %1622 = vmatprep.subr.mxu0 0.0
    %1623 = vmatpush2.msra.mxu0 0.0
    %1624 = vmatprep.mubr.f32.mxu0 0.0
    %1625 = vmatmul.mubr.f32.gmra.mxu0 %v1558
    %v1626 = vpop.f32.mrf.mxu0
    %v1627 = vadd.f32 %v1457, %v1626
    %v1628 = vpop.f32.mrf.mxu0
    %1629 = vdwg.mxu0
    %v1630 = vadd.f32 %v1020, %v1627
    %v1631 = vxor.u32 %v1630, 2147483648
    %v1632 = vmul.f32 %v1631, 1.442695
    %v1633 = vpow.pop %v1632
    %v1634 = vadd.f32 %v1633, 1.0
    %v1635 = vrcp.pop %v1634
    %v1636 = vmul.f32 1.0, %v1635
    %1638 = vrot.lane.b32.xlu0 %v1627, 64
    %v1639 = vpop.permute.xlu0 %1638
    %v1641 = vmul.f32 %v1636, %v1639
    %1643 = vrot.lane.b32.xlu0 %v1641, 64
    %v1644 = vpop.permute.xlu0 %1643
    %v1646 = vadd.f32 %v1020, %v1644
    %v1647 = vtanh.pop %v1646
    %v1648 = vsub.f32 1.0, %v1636
    %1650 = vrot.lane.b32.xlu0 %v1647, 96
    %v1651 = vpop.permute.xlu0 %1650
    %v1653 = vmul.f32 %v1648, %v1651
    %v1654 = vmul.f32 %v1636, %v1554
    %v1655 = vadd.f32 %v1653, %v1654
    %1657 = vrot.lane.b32.xlu0 %v1655, 96
    %v1658 = vpop.permute.xlu0 %1657
    %v1659 = vsel %vm65, %v1658, 0
    %1661 = vmatprep.subr.mxu0 0.0
    %1662 = vmatpush1.msra.mxu0 0.0
    %1663 = vmatprep.subr.mxu0 0.0
    %1664 = vmatpush1.msra.mxu0 0.0
    %1665 = vmatprep.subr.mxu0 0.0
    %1666 = vmatpush1.msra.mxu0 0.0
    %1667 = vmatprep.subr.mxu0 0.0
    %1668 = vmatpush1.msra.mxu0 0.0
    %1669 = vmatprep.subr.mxu0 0.0
    %1670 = vmatpush1.msra.mxu0 0.0
    %1671 = vmatprep.subr.mxu0 0.0
    %1672 = vmatpush1.msra.mxu0 0.0
    %1673 = vmatprep.subr.mxu0 0.0
    %1674 = vmatpush1.msra.mxu0 0.0
    %1675 = vmatprep.subr.mxu0 0.0
    %1676 = vmatpush1.msra.mxu0 0.0
    %1677 = vmatprep.subr.mxu0 0.0
    %1678 = vmatpush1.msra.mxu0 0.0
    %1679 = vmatprep.subr.mxu0 0.0
    %1680 = vmatpush1.msra.mxu0 0.0
    %1681 = vmatprep.subr.mxu0 0.0
    %1682 = vmatpush1.msra.mxu0 0.0
    %1683 = vmatprep.subr.mxu0 0.0
    %1684 = vmatpush1.msra.mxu0 0.0
    %1685 = vmatprep.subr.mxu0 0.0
    %1686 = vmatpush1.msra.mxu0 %v1451
    %1687 = vmatprep.subr.mxu0 0.0
    %1688 = vmatpush1.msra.mxu0 %v1450
    %1689 = vmatprep.subr.mxu0 0.0
    %1690 = vmatpush1.msra.mxu0 %v1449
    %1691 = vmatprep.subr.mxu0 0.0
    %1692 = vmatpush1.msra.mxu0 %v1448
    %1693 = vmatprep.subr.mxu0 0.0
    %1694 = vmatpush2.msra.mxu0 0.0
    %1695 = vmatprep.subr.mxu0 0.0
    %1696 = vmatpush2.msra.mxu0 0.0
    %1697 = vmatprep.subr.mxu0 0.0
    %1698 = vmatpush2.msra.mxu0 0.0
    %1699 = vmatprep.subr.mxu0 0.0
    %1700 = vmatpush2.msra.mxu0 0.0
    %1701 = vmatprep.subr.mxu0 0.0
    %1702 = vmatpush2.msra.mxu0 0.0
    %1703 = vmatprep.subr.mxu0 0.0
    %1704 = vmatpush2.msra.mxu0 0.0
    %1705 = vmatprep.subr.mxu0 0.0
    %1706 = vmatpush2.msra.mxu0 0.0
    %1707 = vmatprep.subr.mxu0 0.0
    %1708 = vmatpush2.msra.mxu0 0.0
    %1709 = vmatprep.subr.mxu0 0.0
    %1710 = vmatpush2.msra.mxu0 0.0
    %1711 = vmatprep.subr.mxu0 0.0
    %1712 = vmatpush2.msra.mxu0 0.0
    %1713 = vmatprep.subr.mxu0 0.0
    %1714 = vmatpush2.msra.mxu0 0.0
    %1715 = vmatprep.subr.mxu0 0.0
    %1716 = vmatpush2.msra.mxu0 0.0
    %1717 = vmatprep.subr.mxu0 0.0
    %1718 = vmatpush2.msra.mxu0 0.0
    %1719 = vmatprep.subr.mxu0 0.0
    %1720 = vmatpush2.msra.mxu0 0.0
    %1721 = vmatprep.subr.mxu0 0.0
    %1722 = vmatpush2.msra.mxu0 0.0
    %1723 = vmatprep.subr.mxu0 0.0
    %1724 = vmatpush2.msra.mxu0 0.0
    %1725 = vmatprep.mubr.f32.mxu0 0.0
    %1726 = vmatmul.mubr.f32.gmra.mxu0 %v1659
    %v1727 = vpop.f32.mrf.mxu0
    %v1728 = vadd.f32 %v1457, %v1727
    %v1729 = vpop.f32.mrf.mxu0
    %1730 = vdwg.mxu0
    %v1731 = vadd.f32 %v1090, %v1728
    %v1732 = vxor.u32 %v1731, 2147483648
    %v1733 = vmul.f32 %v1732, 1.442695
    %v1734 = vpow.pop %v1733
    %v1735 = vadd.f32 %v1734, 1.0
    %v1736 = vrcp.pop %v1735
    %v1737 = vmul.f32 1.0, %v1736
    %1739 = vrot.lane.b32.xlu0 %v1728, 64
    %v1740 = vpop.permute.xlu0 %1739
    %v1742 = vmul.f32 %v1737, %v1740
    %1744 = vrot.lane.b32.xlu0 %v1742, 64
    %v1745 = vpop.permute.xlu0 %1744
    %v1747 = vadd.f32 %v1090, %v1745
    %v1748 = vtanh.pop %v1747
    %v1749 = vsub.f32 1.0, %v1737
    %1751 = vrot.lane.b32.xlu0 %v1748, 96
    %v1752 = vpop.permute.xlu0 %1751
    %v1754 = vmul.f32 %v1749, %v1752
    %v1755 = vmul.f32 %v1737, %v1655
    %v1756 = vadd.f32 %v1754, %v1755
    %1758 = vrot.lane.b32.xlu0 %v1756, 96
    %v1759 = vpop.permute.xlu0 %1758
    %v1760 = vsel %vm65, %v1759, 0
    %1762 = vmatprep.subr.mxu0 0.0
    %1763 = vmatpush1.msra.mxu0 0.0
    %1764 = vmatprep.subr.mxu0 0.0
    %1765 = vmatpush1.msra.mxu0 0.0
    %1766 = vmatprep.subr.mxu0 0.0
    %1767 = vmatpush1.msra.mxu0 0.0
    %1768 = vmatprep.subr.mxu0 0.0
    %1769 = vmatpush1.msra.mxu0 0.0
    %1770 = vmatprep.subr.mxu0 0.0
    %1771 = vmatpush1.msra.mxu0 0.0
    %1772 = vmatprep.subr.mxu0 0.0
    %1773 = vmatpush1.msra.mxu0 0.0
    %1774 = vmatprep.subr.mxu0 0.0
    %1775 = vmatpush1.msra.mxu0 0.0
    %1776 = vmatprep.subr.mxu0 0.0
    %1777 = vmatpush1.msra.mxu0 0.0
    %1778 = vmatprep.subr.mxu0 0.0
    %1779 = vmatpush1.msra.mxu0 0.0
    %1780 = vmatprep.subr.mxu0 0.0
    %1781 = vmatpush1.msra.mxu0 0.0
    %1782 = vmatprep.subr.mxu0 0.0
    %1783 = vmatpush1.msra.mxu0 0.0
    %1784 = vmatprep.subr.mxu0 0.0
    %1785 = vmatpush1.msra.mxu0 0.0
    %1786 = vmatprep.subr.mxu0 0.0
    %1787 = vmatpush1.msra.mxu0 %v1451
    %1788 = vmatprep.subr.mxu0 0.0
    %1789 = vmatpush1.msra.mxu0 %v1450
    %1790 = vmatprep.subr.mxu0 0.0
    %1791 = vmatpush1.msra.mxu0 %v1449
    %1792 = vmatprep.subr.mxu0 0.0
    %1793 = vmatpush1.msra.mxu0 %v1448
    %1794 = vmatprep.subr.mxu0 0.0
    %1795 = vmatpush2.msra.mxu0 0.0
    %1796 = vmatprep.subr.mxu0 0.0
    %1797 = vmatpush2.msra.mxu0 0.0
    %1798 = vmatprep.subr.mxu0 0.0
    %1799 = vmatpush2.msra.mxu0 0.0
    %1800 = vmatprep.subr.mxu0 0.0
    %1801 = vmatpush2.msra.mxu0 0.0
    %1802 = vmatprep.subr.mxu0 0.0
    %1803 = vmatpush2.msra.mxu0 0.0
    %1804 = vmatprep.subr.mxu0 0.0
    %1805 = vmatpush2.msra.mxu0 0.0
    %1806 = vmatprep.subr.mxu0 0.0
    %1807 = vmatpush2.msra.mxu0 0.0
    %1808 = vmatprep.subr.mxu0 0.0
    %1809 = vmatpush2.msra.mxu0 0.0
    %1810 = vmatprep.subr.mxu0 0.0
    %1811 = vmatpush2.msra.mxu0 0.0
    %1812 = vmatprep.subr.mxu0 0.0
    %1813 = vmatpush2.msra.mxu0 0.0
    %1814 = vmatprep.subr.mxu0 0.0
    %1815 = vmatpush2.msra.mxu0 0.0
    %1816 = vmatprep.subr.mxu0 0.0
    %1817 = vmatpush2.msra.mxu0 0.0
    %1818 = vmatprep.subr.mxu0 0.0
    %1819 = vmatpush2.msra.mxu0 0.0
    %1820 = vmatprep.subr.mxu0 0.0
    %1821 = vmatpush2.msra.mxu0 0.0
    %1822 = vmatprep.subr.mxu0 0.0
    %1823 = vmatpush2.msra.mxu0 0.0
    %1824 = vmatprep.subr.mxu0 0.0
    %1825 = vmatpush2.msra.mxu0 0.0
    %1826 = vmatprep.mubr.f32.mxu0 0.0
    %1827 = vmatmul.mubr.f32.gmra.mxu0 %v1760
    %v1828 = vpop.f32.mrf.mxu0
    %v1829 = vadd.f32 %v1457, %v1828
    %v1830 = vpop.f32.mrf.mxu0
    %1831 = vdwg.mxu0
    %v1832 = vadd.f32 %v1160, %v1829
    %v1833 = vxor.u32 %v1832, 2147483648
    %v1834 = vmul.f32 %v1833, 1.442695
    %v1835 = vpow.pop %v1834
    %v1836 = vadd.f32 %v1835, 1.0
    %v1837 = vrcp.pop %v1836
    %v1838 = vmul.f32 1.0, %v1837
    %1840 = vrot.lane.b32.xlu0 %v1829, 64
    %v1841 = vpop.permute.xlu0 %1840
    %v1843 = vmul.f32 %v1838, %v1841
    %1845 = vrot.lane.b32.xlu0 %v1843, 64
    %v1846 = vpop.permute.xlu0 %1845
    %v1848 = vadd.f32 %v1160, %v1846
    %v1849 = vtanh.pop %v1848
    %v1850 = vsub.f32 1.0, %v1838
    %1852 = vrot.lane.b32.xlu0 %v1849, 96
    %v1853 = vpop.permute.xlu0 %1852
    %v1855 = vmul.f32 %v1850, %v1853
    %v1856 = vmul.f32 %v1838, %v1756
    %v1857 = vadd.f32 %v1855, %v1856
    %1859 = vrot.lane.b32.xlu0 %v1857, 96
    %v1860 = vpop.permute.xlu0 %1859
    %v1861 = vsel %vm65, %v1860, 0
    %1863 = vmatprep.subr.mxu0 0.0
    %1864 = vmatpush1.msra.mxu0 0.0
    %1865 = vmatprep.subr.mxu0 0.0
    %1866 = vmatpush1.msra.mxu0 0.0
    %1867 = vmatprep.subr.mxu0 0.0
    %1868 = vmatpush1.msra.mxu0 0.0
    %1869 = vmatprep.subr.mxu0 0.0
    %1870 = vmatpush1.msra.mxu0 0.0
    %1871 = vmatprep.subr.mxu0 0.0
    %1872 = vmatpush1.msra.mxu0 0.0
    %1873 = vmatprep.subr.mxu0 0.0
    %1874 = vmatpush1.msra.mxu0 0.0
    %1875 = vmatprep.subr.mxu0 0.0
    %1876 = vmatpush1.msra.mxu0 0.0
    %1877 = vmatprep.subr.mxu0 0.0
    %1878 = vmatpush1.msra.mxu0 0.0
    %1879 = vmatprep.subr.mxu0 0.0
    %1880 = vmatpush1.msra.mxu0 0.0
    %1881 = vmatprep.subr.mxu0 0.0
    %1882 = vmatpush1.msra.mxu0 0.0
    %1883 = vmatprep.subr.mxu0 0.0
    %1884 = vmatpush1.msra.mxu0 0.0
    %1885 = vmatprep.subr.mxu0 0.0
    %1886 = vmatpush1.msra.mxu0 0.0
    %1887 = vmatprep.subr.mxu0 0.0
    %1888 = vmatpush1.msra.mxu0 %v1451
    %1889 = vmatprep.subr.mxu0 0.0
    %1890 = vmatpush1.msra.mxu0 %v1450
    %1891 = vmatprep.subr.mxu0 0.0
    %1892 = vmatpush1.msra.mxu0 %v1449
    %1893 = vmatprep.subr.mxu0 0.0
    %1894 = vmatpush1.msra.mxu0 %v1448
    %1895 = vmatprep.subr.mxu0 0.0
    %1896 = vmatpush2.msra.mxu0 0.0
    %1897 = vmatprep.subr.mxu0 0.0
    %1898 = vmatpush2.msra.mxu0 0.0
    %1899 = vmatprep.subr.mxu0 0.0
    %1900 = vmatpush2.msra.mxu0 0.0
    %1901 = vmatprep.subr.mxu0 0.0
    %1902 = vmatpush2.msra.mxu0 0.0
    %1903 = vmatprep.subr.mxu0 0.0
    %1904 = vmatpush2.msra.mxu0 0.0
    %1905 = vmatprep.subr.mxu0 0.0
    %1906 = vmatpush2.msra.mxu0 0.0
    %1907 = vmatprep.subr.mxu0 0.0
    %1908 = vmatpush2.msra.mxu0 0.0
    %1909 = vmatprep.subr.mxu0 0.0
    %1910 = vmatpush2.msra.mxu0 0.0
    %1911 = vmatprep.subr.mxu0 0.0
    %1912 = vmatpush2.msra.mxu0 0.0
    %1913 = vmatprep.subr.mxu0 0.0
    %1914 = vmatpush2.msra.mxu0 0.0
    %1915 = vmatprep.subr.mxu0 0.0
    %1916 = vmatpush2.msra.mxu0 0.0
    %1917 = vmatprep.subr.mxu0 0.0
    %1918 = vmatpush2.msra.mxu0 0.0
    %1919 = vmatprep.subr.mxu0 0.0
    %1920 = vmatpush2.msra.mxu0 0.0
    %1921 = vmatprep.subr.mxu0 0.0
    %1922 = vmatpush2.msra.mxu0 0.0
    %1923 = vmatprep.subr.mxu0 0.0
    %1924 = vmatpush2.msra.mxu0 0.0
    %1925 = vmatprep.subr.mxu0 0.0
    %1926 = vmatpush2.msra.mxu0 0.0
    %1927 = vmatprep.mubr.f32.mxu0 0.0
    %1928 = vmatmul.mubr.f32.gmra.mxu0 %v1861
    %v1929 = vpop.f32.mrf.mxu0
    %v1930 = vadd.f32 %v1457, %v1929
    %v1931 = vpop.f32.mrf.mxu0
    %1932 = vdwg.mxu0
    %v1933 = vadd.f32 %v1230, %v1930
    %v1934 = vxor.u32 %v1933, 2147483648
    %v1935 = vmul.f32 %v1934, 1.442695
    %v1936 = vpow.pop %v1935
    %v1937 = vadd.f32 %v1936, 1.0
    %v1938 = vrcp.pop %v1937
    %v1939 = vmul.f32 1.0, %v1938
    %1941 = vrot.lane.b32.xlu0 %v1930, 64
    %v1942 = vpop.permute.xlu0 %1941
    %v1944 = vmul.f32 %v1939, %v1942
    %1946 = vrot.lane.b32.xlu0 %v1944, 64
    %v1947 = vpop.permute.xlu0 %1946
    %v1949 = vadd.f32 %v1230, %v1947
    %v1950 = vtanh.pop %v1949
    %v1951 = vsub.f32 1.0, %v1939
    %1953 = vrot.lane.b32.xlu0 %v1950, 96
    %v1954 = vpop.permute.xlu0 %1953
    %v1956 = vmul.f32 %v1951, %v1954
    %v1957 = vmul.f32 %v1939, %v1857
    %v1958 = vadd.f32 %v1956, %v1957
    %1960 = vrot.lane.b32.xlu0 %v1958, 96
    %v1961 = vpop.permute.xlu0 %1960
    %v1962 = vsel %vm65, %v1961, 0
    %1964 = vmatprep.subr.mxu0 0.0
    %1965 = vmatpush1.msra.mxu0 0.0
    %1966 = vmatprep.subr.mxu0 0.0
    %1967 = vmatpush1.msra.mxu0 0.0
    %1968 = vmatprep.subr.mxu0 0.0
    %1969 = vmatpush1.msra.mxu0 0.0
    %1970 = vmatprep.subr.mxu0 0.0
    %1971 = vmatpush1.msra.mxu0 0.0
    %1972 = vmatprep.subr.mxu0 0.0
    %1973 = vmatpush1.msra.mxu0 0.0
    %1974 = vmatprep.subr.mxu0 0.0
    %1975 = vmatpush1.msra.mxu0 0.0
    %1976 = vmatprep.subr.mxu0 0.0
    %1977 = vmatpush1.msra.mxu0 0.0
    %1978 = vmatprep.subr.mxu0 0.0
    %1979 = vmatpush1.msra.mxu0 0.0
    %1980 = vmatprep.subr.mxu0 0.0
    %1981 = vmatpush1.msra.mxu0 0.0
    %1982 = vmatprep.subr.mxu0 0.0
    %1983 = vmatpush1.msra.mxu0 0.0
    %1984 = vmatprep.subr.mxu0 0.0
    %1985 = vmatpush1.msra.mxu0 0.0
    %1986 = vmatprep.subr.mxu0 0.0
    %1987 = vmatpush1.msra.mxu0 0.0
    %1988 = vmatprep.subr.mxu0 0.0
    %1989 = vmatpush1.msra.mxu0 %v1451
    %1990 = vmatprep.subr.mxu0 0.0
    %1991 = vmatpush1.msra.mxu0 %v1450
    %1992 = vmatprep.subr.mxu0 0.0
    %1993 = vmatpush1.msra.mxu0 %v1449
    %1994 = vmatprep.subr.mxu0 0.0
    %1995 = vmatpush1.msra.mxu0 %v1448
    %1996 = vmatprep.subr.mxu0 0.0
    %1997 = vmatpush2.msra.mxu0 0.0
    %1998 = vmatprep.subr.mxu0 0.0
    %1999 = vmatpush2.msra.mxu0 0.0
    %2000 = vmatprep.subr.mxu0 0.0
    %2001 = vmatpush2.msra.mxu0 0.0
    %2002 = vmatprep.subr.mxu0 0.0
    %2003 = vmatpush2.msra.mxu0 0.0
    %2004 = vmatprep.subr.mxu0 0.0
    %2005 = vmatpush2.msra.mxu0 0.0
    %2006 = vmatprep.subr.mxu0 0.0
    %2007 = vmatpush2.msra.mxu0 0.0
    %2008 = vmatprep.subr.mxu0 0.0
    %2009 = vmatpush2.msra.mxu0 0.0
    %2010 = vmatprep.subr.mxu0 0.0
    %2011 = vmatpush2.msra.mxu0 0.0
    %2012 = vmatprep.subr.mxu0 0.0
    %2013 = vmatpush2.msra.mxu0 0.0
    %2014 = vmatprep.subr.mxu0 0.0
    %2015 = vmatpush2.msra.mxu0 0.0
    %2016 = vmatprep.subr.mxu0 0.0
    %2017 = vmatpush2.msra.mxu0 0.0
    %2018 = vmatprep.subr.mxu0 0.0
    %2019 = vmatpush2.msra.mxu0 0.0
    %2020 = vmatprep.subr.mxu0 0.0
    %2021 = vmatpush2.msra.mxu0 0.0
    %2022 = vmatprep.subr.mxu0 0.0
    %2023 = vmatpush2.msra.mxu0 0.0
    %2024 = vmatprep.subr.mxu0 0.0
    %2025 = vmatpush2.msra.mxu0 0.0
    %2026 = vmatprep.subr.mxu0 0.0
    %2027 = vmatpush2.msra.mxu0 0.0
    %2028 = vmatprep.mubr.f32.mxu0 0.0
    %2029 = vmatmul.mubr.f32.gmra.mxu0 %v1962
    %v2030 = vpop.f32.mrf.mxu0
    %v2031 = vadd.f32 %v1457, %v2030
    %v2032 = vpop.f32.mrf.mxu0
    %2033 = vdwg.mxu0
    %v2034 = vadd.f32 %v1300, %v2031
    %v2035 = vxor.u32 %v2034, 2147483648
    %v2036 = vmul.f32 %v2035, 1.442695
    %v2037 = vpow.pop %v2036
    %v2038 = vadd.f32 %v2037, 1.0
    %v2039 = vrcp.pop %v2038
    %v2040 = vmul.f32 1.0, %v2039
    %2042 = vrot.lane.b32.xlu0 %v2031, 64
    %v2043 = vpop.permute.xlu0 %2042
    %v2045 = vmul.f32 %v2040, %v2043
    %2047 = vrot.lane.b32.xlu0 %v2045, 64
    %v2048 = vpop.permute.xlu0 %2047
    %v2050 = vadd.f32 %v1300, %v2048
    %v2051 = vtanh.pop %v2050
    %v2052 = vsub.f32 1.0, %v2040
    %2054 = vrot.lane.b32.xlu0 %v2051, 96
    %v2055 = vpop.permute.xlu0 %2054
    %v2057 = vmul.f32 %v2052, %v2055
    %v2058 = vmul.f32 %v2040, %v1958
    %v2059 = vadd.f32 %v2057, %v2058
    %2061 = vrot.lane.b32.xlu0 %v2059, 96
    %v2062 = vpop.permute.xlu0 %2061
    %v2063 = vsel %vm65, %v2062, 0
    %2065 = vmatprep.subr.mxu0 0.0
    %2066 = vmatpush1.msra.mxu0 0.0
    %2067 = vmatprep.subr.mxu0 0.0
    %2068 = vmatpush1.msra.mxu0 0.0
    %2069 = vmatprep.subr.mxu0 0.0
    %2070 = vmatpush1.msra.mxu0 0.0
    %2071 = vmatprep.subr.mxu0 0.0
    %2072 = vmatpush1.msra.mxu0 0.0
    %2073 = vmatprep.subr.mxu0 0.0
    %2074 = vmatpush1.msra.mxu0 0.0
    %2075 = vmatprep.subr.mxu0 0.0
    %2076 = vmatpush1.msra.mxu0 0.0
    %2077 = vmatprep.subr.mxu0 0.0
    %2078 = vmatpush1.msra.mxu0 0.0
    %2079 = vmatprep.subr.mxu0 0.0
    %2080 = vmatpush1.msra.mxu0 0.0
    %2081 = vmatprep.subr.mxu0 0.0
    %2082 = vmatpush1.msra.mxu0 0.0
    %2083 = vmatprep.subr.mxu0 0.0
    %2084 = vmatpush1.msra.mxu0 0.0
    %2085 = vmatprep.subr.mxu0 0.0
    %2086 = vmatpush1.msra.mxu0 0.0
    %2087 = vmatprep.subr.mxu0 0.0
    %2088 = vmatpush1.msra.mxu0 0.0
    %2089 = vmatprep.subr.mxu0 0.0
    %2090 = vmatpush1.msra.mxu0 %v1451
    %2091 = vmatprep.subr.mxu0 0.0
    %2092 = vmatpush1.msra.mxu0 %v1450
    %2093 = vmatprep.subr.mxu0 0.0
    %2094 = vmatpush1.msra.mxu0 %v1449
    %2095 = vmatprep.subr.mxu0 0.0
    %2096 = vmatpush1.msra.mxu0 %v1448
    %2097 = vmatprep.subr.mxu0 0.0
    %2098 = vmatpush2.msra.mxu0 0.0
    %2099 = vmatprep.subr.mxu0 0.0
    %2100 = vmatpush2.msra.mxu0 0.0
    %2101 = vmatprep.subr.mxu0 0.0
    %2102 = vmatpush2.msra.mxu0 0.0
    %2103 = vmatprep.subr.mxu0 0.0
    %2104 = vmatpush2.msra.mxu0 0.0
    %2105 = vmatprep.subr.mxu0 0.0
    %2106 = vmatpush2.msra.mxu0 0.0
    %2107 = vmatprep.subr.mxu0 0.0
    %2108 = vmatpush2.msra.mxu0 0.0
    %2109 = vmatprep.subr.mxu0 0.0
    %2110 = vmatpush2.msra.mxu0 0.0
    %2111 = vmatprep.subr.mxu0 0.0
    %2112 = vmatpush2.msra.mxu0 0.0
    %2113 = vmatprep.subr.mxu0 0.0
    %2114 = vmatpush2.msra.mxu0 0.0
    %2115 = vmatprep.subr.mxu0 0.0
    %2116 = vmatpush2.msra.mxu0 0.0
    %2117 = vmatprep.subr.mxu0 0.0
    %2118 = vmatpush2.msra.mxu0 0.0
    %2119 = vmatprep.subr.mxu0 0.0
    %2120 = vmatpush2.msra.mxu0 0.0
    %2121 = vmatprep.subr.mxu0 0.0
    %2122 = vmatpush2.msra.mxu0 0.0
    %2123 = vmatprep.subr.mxu0 0.0
    %2124 = vmatpush2.msra.mxu0 0.0
    %2125 = vmatprep.subr.mxu0 0.0
    %2126 = vmatpush2.msra.mxu0 0.0
    %2127 = vmatprep.subr.mxu0 0.0
    %2128 = vmatpush2.msra.mxu0 0.0
    %2129 = vmatprep.mubr.f32.mxu0 0.0
    %2130 = vmatmul.mubr.f32.gmra.mxu0 %v2063
    %v2131 = vpop.f32.mrf.mxu0
    %v2132 = vadd.f32 %v1457, %v2131
    %v2133 = vpop.f32.mrf.mxu0
    %2134 = vdwg.mxu0
    %v2135 = vadd.f32 %v1370, %v2132
    %v2136 = vxor.u32 %v2135, 2147483648
    %v2137 = vmul.f32 %v2136, 1.442695
    %v2138 = vpow.pop %v2137
    %v2139 = vadd.f32 %v2138, 1.0
    %v2140 = vrcp.pop %v2139
    %v2141 = vmul.f32 1.0, %v2140
    %2143 = vrot.lane.b32.xlu0 %v2132, 64
    %v2144 = vpop.permute.xlu0 %2143
    %v2146 = vmul.f32 %v2141, %v2144
    %2148 = vrot.lane.b32.xlu0 %v2146, 64
    %v2149 = vpop.permute.xlu0 %2148
    %v2151 = vadd.f32 %v1370, %v2149
    %v2152 = vtanh.pop %v2151
    %v2153 = vsub.f32 1.0, %v2141
    %2155 = vrot.lane.b32.xlu0 %v2152, 96
    %v2156 = vpop.permute.xlu0 %2155
    %v2158 = vmul.f32 %v2153, %v2156
    %v2159 = vmul.f32 %v2141, %v2059
    %v2160 = vadd.f32 %v2158, %v2159
    %2162 = vrot.lane.b32.xlu0 %v2160, 96
    %v2163 = vpop.permute.xlu0 %2162
    %v2164 = vsel %vm65, %v2163, 0
    %2166 = vmatprep.subr.mxu0 0.0
    %2167 = vmatpush1.msra.mxu0 0.0
    %2168 = vmatprep.subr.mxu0 0.0
    %2169 = vmatpush1.msra.mxu0 0.0
    %2170 = vmatprep.subr.mxu0 0.0
    %2171 = vmatpush1.msra.mxu0 0.0
    %2172 = vmatprep.subr.mxu0 0.0
    %2173 = vmatpush1.msra.mxu0 0.0
    %2174 = vmatprep.subr.mxu0 0.0
    %2175 = vmatpush1.msra.mxu0 0.0
    %2176 = vmatprep.subr.mxu0 0.0
    %2177 = vmatpush1.msra.mxu0 0.0
    %2178 = vmatprep.subr.mxu0 0.0
    %2179 = vmatpush1.msra.mxu0 0.0
    %2180 = vmatprep.subr.mxu0 0.0
    %2181 = vmatpush1.msra.mxu0 0.0
    %2182 = vmatprep.subr.mxu0 0.0
    %2183 = vmatpush1.msra.mxu0 0.0
    %2184 = vmatprep.subr.mxu0 0.0
    %2185 = vmatpush1.msra.mxu0 0.0
    %2186 = vmatprep.subr.mxu0 0.0
    %2187 = vmatpush1.msra.mxu0 0.0
    %2188 = vmatprep.subr.mxu0 0.0
    %2189 = vmatpush1.msra.mxu0 0.0
    %2190 = vmatprep.subr.mxu0 0.0
    %2191 = vmatpush1.msra.mxu0 %v1451
    %2192 = vmatprep.subr.mxu0 0.0
    %2193 = vmatpush1.msra.mxu0 %v1450
    %2194 = vmatprep.subr.mxu0 0.0
    %2195 = vmatpush1.msra.mxu0 %v1449
    %2196 = vmatprep.subr.mxu0 0.0
    %2197 = vmatpush1.msra.mxu0 %v1448
    %2198 = vmatprep.subr.mxu0 0.0
    %2199 = vmatpush2.msra.mxu0 0.0
    %2200 = vmatprep.subr.mxu0 0.0
    %2201 = vmatpush2.msra.mxu0 0.0
    %2202 = vmatprep.subr.mxu0 0.0
    %2203 = vmatpush2.msra.mxu0 0.0
    %2204 = vmatprep.subr.mxu0 0.0
    %2205 = vmatpush2.msra.mxu0 0.0
    %2206 = vmatprep.subr.mxu0 0.0
    %2207 = vmatpush2.msra.mxu0 0.0
    %2208 = vmatprep.subr.mxu0 0.0
    %2209 = vmatpush2.msra.mxu0 0.0
    %2210 = vmatprep.subr.mxu0 0.0
    %2211 = vmatpush2.msra.mxu0 0.0
    %2212 = vmatprep.subr.mxu0 0.0
    %2213 = vmatpush2.msra.mxu0 0.0
    %2214 = vmatprep.subr.mxu0 0.0
    %2215 = vmatpush2.msra.mxu0 0.0
    %2216 = vmatprep.subr.mxu0 0.0
    %2217 = vmatpush2.msra.mxu0 0.0
    %2218 = vmatprep.subr.mxu0 0.0
    %2219 = vmatpush2.msra.mxu0 0.0
    %2220 = vmatprep.subr.mxu0 0.0
    %2221 = vmatpush2.msra.mxu0 0.0
    %2222 = vmatprep.subr.mxu0 0.0
    %2223 = vmatpush2.msra.mxu0 0.0
    %2224 = vmatprep.subr.mxu0 0.0
    %2225 = vmatpush2.msra.mxu0 0.0
    %2226 = vmatprep.subr.mxu0 0.0
    %2227 = vmatpush2.msra.mxu0 0.0
    %2228 = vmatprep.subr.mxu0 0.0
    %2229 = vmatpush2.msra.mxu0 0.0
    %2230 = vmatprep.mubr.f32.mxu0 0.0
    %2231 = vmatmul.mubr.f32.gmra.mxu0 %v2164
    %v2232 = vpop.f32.mrf.mxu0
    %v2233 = vadd.f32 %v1457, %v2232
    %v2234 = vpop.f32.mrf.mxu0
    %2235 = vdwg.mxu0
    %v2236 = vadd.f32 %v1445, %v2233
    %v2237 = vxor.u32 %v2236, 2147483648
    %v2238 = vmul.f32 %v2237, 1.442695
    %v2239 = vpow.pop %v2238
    %v2240 = vadd.f32 %v2239, 1.0
    %v2241 = vrcp.pop %v2240
    %v2242 = vmul.f32 1.0, %v2241
    %2244 = vrot.lane.b32.xlu0 %v2233, 64
    %v2245 = vpop.permute.xlu0 %2244
    %v2247 = vmul.f32 %v2242, %v2245
    %2249 = vrot.lane.b32.xlu0 %v2247, 64
    %v2250 = vpop.permute.xlu0 %2249
    %v2252 = vadd.f32 %v1445, %v2250
    %v2253 = vtanh.pop %v2252
    %v2254 = vsub.f32 1.0, %v2242
    %2256 = vrot.lane.b32.xlu0 %v2253, 96
    %v2257 = vpop.permute.xlu0 %2256
    %v2259 = vmul.f32 %v2254, %v2257
    %v2260 = vmul.f32 %v2242, %v2160
    %v2261 = vadd.f32 %v2259, %v2260
    %v2262 = vld [vmem:[%s7] sm:$0xff]
    %v2263 = vld [vmem:[%s7 + $0x8] sm:$0xff]
    %v2264 = vld [vmem:[%s7 + $0x10] sm:$0xff]
    %v2265 = vld [vmem:[%s7 + $0x18] sm:$0xff]
    %v2266 = vld [vmem:[%s8] sm:$0x1]
    %v2267 = vld [vmem:[%s9] sm:$0xff]
    %v2268 = vld [vmem:[%s9 + $0x8] sm:$0xff]
    %v2269 = vld [vmem:[%s9 + $0x10] sm:$0xff]
    %v2270 = vld [vmem:[%s9 + $0x18] sm:$0xff]
    %v2271 = vld [vmem:[%s9 + $0x20] sm:$0xff]
    %v2272 = vld [vmem:[%s9 + $0x28] sm:$0xff]
    %v2273 = vld [vmem:[%s9 + $0x30] sm:$0xff]
    %v2274 = vld [vmem:[%s9 + $0x38] sm:$0xff]
    %v2275 = vld [vmem:[%s9 + $0x40] sm:$0xff]
    %v2276 = vld [vmem:[%s9 + $0x48] sm:$0xff]
    %v2277 = vld [vmem:[%s9 + $0x50] sm:$0xff]
    %v2278 = vld [vmem:[%s9 + $0x58] sm:$0xff]
    %v2279 = vld [vmem:[%s9 + $0x60] sm:$0xff]
    %v2280 = vld [vmem:[%s9 + $0x68] sm:$0xff]
    %v2281 = vld [vmem:[%s9 + $0x70] sm:$0xff]
    %v2282 = vld [vmem:[%s9 + $0x78] sm:$0xff]
    %v2283 = vld [vmem:[%s10] sm:$0x1]
    %v2284 = vmax.f32 %v871, 0.0
    %v2286 = vlaneseq
    %v2287 = vshrl.u32 %v2286, 7
    %v2288 = vsub.s32 0, %v2287
    %v2289 = vrot.slane %v2266, %v2288
    %2292 = vrot.lane.b32.xlu0 %v2284, 96
    %v2293 = vpop.permute.xlu0 %2292
    %v2294 = vsel %vm65, %v2293, 0
    %2296 = vmatprep.subr.mxu0 0.0
    %2297 = vmatpush1.msra.mxu0 0.0
    %2298 = vmatprep.subr.mxu0 0.0
    %2299 = vmatpush1.msra.mxu0 0.0
    %2300 = vmatprep.subr.mxu0 0.0
    %2301 = vmatpush1.msra.mxu0 0.0
    %2302 = vmatprep.subr.mxu0 0.0
    %2303 = vmatpush1.msra.mxu0 0.0
    %2304 = vmatprep.subr.mxu0 0.0
    %2305 = vmatpush1.msra.mxu0 0.0
    %2306 = vmatprep.subr.mxu0 0.0
    %2307 = vmatpush1.msra.mxu0 0.0
    %2308 = vmatprep.subr.mxu0 0.0
    %2309 = vmatpush1.msra.mxu0 0.0
    %2310 = vmatprep.subr.mxu0 0.0
    %2311 = vmatpush1.msra.mxu0 0.0
    %2312 = vmatprep.subr.mxu0 0.0
    %2313 = vmatpush1.msra.mxu0 0.0
    %2314 = vmatprep.subr.mxu0 0.0
    %2315 = vmatpush1.msra.mxu0 0.0
    %2316 = vmatprep.subr.mxu0 0.0
    %2317 = vmatpush1.msra.mxu0 0.0
    %2318 = vmatprep.subr.mxu0 0.0
    %2319 = vmatpush1.msra.mxu0 0.0
    %2320 = vmatprep.subr.mxu0 0.0
    %2321 = vmatpush1.msra.mxu0 %v2265
    %2322 = vmatprep.subr.mxu0 0.0
    %2323 = vmatpush1.msra.mxu0 %v2264
    %2324 = vmatprep.subr.mxu0 0.0
    %2325 = vmatpush1.msra.mxu0 %v2263
    %2326 = vmatprep.subr.mxu0 0.0
    %2327 = vmatpush1.msra.mxu0 %v2262
    %2328 = vmatprep.subr.mxu0 0.0
    %2329 = vmatpush2.msra.mxu0 0.0
    %2330 = vmatprep.subr.mxu0 0.0
    %2331 = vmatpush2.msra.mxu0 0.0
    %2332 = vmatprep.subr.mxu0 0.0
    %2333 = vmatpush2.msra.mxu0 0.0
    %2334 = vmatprep.subr.mxu0 0.0
    %2335 = vmatpush2.msra.mxu0 0.0
    %2336 = vmatprep.subr.mxu0 0.0
    %2337 = vmatpush2.msra.mxu0 0.0
    %2338 = vmatprep.subr.mxu0 0.0
    %2339 = vmatpush2.msra.mxu0 0.0
    %2340 = vmatprep.subr.mxu0 0.0
    %2341 = vmatpush2.msra.mxu0 0.0
    %2342 = vmatprep.subr.mxu0 0.0
    %2343 = vmatpush2.msra.mxu0 0.0
    %2344 = vmatprep.subr.mxu0 0.0
    %2345 = vmatpush2.msra.mxu0 0.0
    %2346 = vmatprep.subr.mxu0 0.0
    %2347 = vmatpush2.msra.mxu0 0.0
    %2348 = vmatprep.subr.mxu0 0.0
    %2349 = vmatpush2.msra.mxu0 0.0
    %2350 = vmatprep.subr.mxu0 0.0
    %2351 = vmatpush2.msra.mxu0 0.0
    %2352 = vmatprep.subr.mxu0 0.0
    %2353 = vmatpush2.msra.mxu0 0.0
    %2354 = vmatprep.subr.mxu0 0.0
    %2355 = vmatpush2.msra.mxu0 0.0
    %2356 = vmatprep.subr.mxu0 0.0
    %2357 = vmatpush2.msra.mxu0 0.0
    %2358 = vmatprep.subr.mxu0 0.0
    %2359 = vmatpush2.msra.mxu0 0.0
    %2360 = vmatprep.mubr.f32.mxu0 0.0
    %2361 = vmatmul.mubr.f32.gmra.mxu0 %v2294
    %v2362 = vpop.f32.mrf.mxu0
    %v2363 = vadd.f32 %v2289, %v2362
    %v2364 = vpop.f32.mrf.mxu0
    %2365 = vdwg.mxu0
    %v2366 = vmax.f32 %v2363, 0.0
    %v2368 = vlaneseq
    %v2369 = vshrl.u32 %v2368, 7
    %v2370 = vsub.s32 0, %v2369
    %v2371 = vrot.slane %v2283, %v2370
    %2373 = vmatprep.subr.mxu0 0.0
    %2374 = vmatpush1.msra.mxu0 %v2282
    %2375 = vmatprep.subr.mxu0 0.0
    %2376 = vmatpush1.msra.mxu0 %v2281
    %2377 = vmatprep.subr.mxu0 0.0
    %2378 = vmatpush1.msra.mxu0 %v2280
    %2379 = vmatprep.subr.mxu0 0.0
    %2380 = vmatpush1.msra.mxu0 %v2279
    %2381 = vmatprep.subr.mxu0 0.0
    %2382 = vmatpush1.msra.mxu0 %v2278
    %2383 = vmatprep.subr.mxu0 0.0
    %2384 = vmatpush1.msra.mxu0 %v2277
    %2385 = vmatprep.subr.mxu0 0.0
    %2386 = vmatpush1.msra.mxu0 %v2276
    %2387 = vmatprep.subr.mxu0 0.0
    %2388 = vmatpush1.msra.mxu0 %v2275
    %2389 = vmatprep.subr.mxu0 0.0
    %2390 = vmatpush1.msra.mxu0 %v2274
    %2391 = vmatprep.subr.mxu0 0.0
    %2392 = vmatpush1.msra.mxu0 %v2273
    %2393 = vmatprep.subr.mxu0 0.0
    %2394 = vmatpush1.msra.mxu0 %v2272
    %2395 = vmatprep.subr.mxu0 0.0
    %2396 = vmatpush1.msra.mxu0 %v2271
    %2397 = vmatprep.subr.mxu0 0.0
    %2398 = vmatpush1.msra.mxu0 %v2270
    %2399 = vmatprep.subr.mxu0 0.0
    %2400 = vmatpush1.msra.mxu0 %v2269
    %2401 = vmatprep.subr.mxu0 0.0
    %2402 = vmatpush1.msra.mxu0 %v2268
    %2403 = vmatprep.subr.mxu0 0.0
    %2404 = vmatpush1.msra.mxu0 %v2267
    %2405 = vmatprep.subr.mxu0 0.0
    %2406 = vmatpush2.msra.mxu0 0.0
    %2407 = vmatprep.subr.mxu0 0.0
    %2408 = vmatpush2.msra.mxu0 0.0
    %2409 = vmatprep.subr.mxu0 0.0
    %2410 = vmatpush2.msra.mxu0 0.0
    %2411 = vmatprep.subr.mxu0 0.0
    %2412 = vmatpush2.msra.mxu0 0.0
    %2413 = vmatprep.subr.mxu0 0.0
    %2414 = vmatpush2.msra.mxu0 0.0
    %2415 = vmatprep.subr.mxu0 0.0
    %2416 = vmatpush2.msra.mxu0 0.0
    %2417 = vmatprep.subr.mxu0 0.0
    %2418 = vmatpush2.msra.mxu0 0.0
    %2419 = vmatprep.subr.mxu0 0.0
    %2420 = vmatpush2.msra.mxu0 0.0
    %2421 = vmatprep.subr.mxu0 0.0
    %2422 = vmatpush2.msra.mxu0 0.0
    %2423 = vmatprep.subr.mxu0 0.0
    %2424 = vmatpush2.msra.mxu0 0.0
    %2425 = vmatprep.subr.mxu0 0.0
    %2426 = vmatpush2.msra.mxu0 0.0
    %2427 = vmatprep.subr.mxu0 0.0
    %2428 = vmatpush2.msra.mxu0 0.0
    %2429 = vmatprep.subr.mxu0 0.0
    %2430 = vmatpush2.msra.mxu0 0.0
    %2431 = vmatprep.subr.mxu0 0.0
    %2432 = vmatpush2.msra.mxu0 0.0
    %2433 = vmatprep.subr.mxu0 0.0
    %2434 = vmatpush2.msra.mxu0 0.0
    %2435 = vmatprep.subr.mxu0 0.0
    %2436 = vmatpush2.msra.mxu0 0.0
    %2437 = vmatprep.mubr.f32.mxu0 0.0
    %2438 = vmatmul.mubr.f32.gmra.mxu0 %v2366
    %v2439 = vpop.f32.mrf.mxu0
    %v2440 = vadd.f32 %v2371, %v2439
    %v2441 = vpop.f32.mrf.mxu0
    %2442 = vdwg.mxu0
    %vm2443 = vcmask 25600
    %2444 = vst.msk [vmem:[#allocation2] sm:$0x3] %vm2443, %v2440
    %v2445 = vmax.f32 %v2261, 0.0
    %2447 = vrot.lane.b32.xlu0 %v2445, 96
    %v2448 = vpop.permute.xlu0 %2447
    %v2449 = vsel %vm65, %v2448, 0
    %2451 = vmatprep.subr.mxu0 0.0
    %2452 = vmatpush1.msra.mxu0 0.0
    %2453 = vmatprep.subr.mxu0 0.0
    %2454 = vmatpush1.msra.mxu0 0.0
    %2455 = vmatprep.subr.mxu0 0.0
    %2456 = vmatpush1.msra.mxu0 0.0
    %2457 = vmatprep.subr.mxu0 0.0
    %2458 = vmatpush1.msra.mxu0 0.0
    %2459 = vmatprep.subr.mxu0 0.0
    %2460 = vmatpush1.msra.mxu0 0.0
    %2461 = vmatprep.subr.mxu0 0.0
    %2462 = vmatpush1.msra.mxu0 0.0
    %2463 = vmatprep.subr.mxu0 0.0
    %2464 = vmatpush1.msra.mxu0 0.0
    %2465 = vmatprep.subr.mxu0 0.0
    %2466 = vmatpush1.msra.mxu0 0.0
    %2467 = vmatprep.subr.mxu0 0.0
    %2468 = vmatpush1.msra.mxu0 0.0
    %2469 = vmatprep.subr.mxu0 0.0
    %2470 = vmatpush1.msra.mxu0 0.0
    %2471 = vmatprep.subr.mxu0 0.0
    %2472 = vmatpush1.msra.mxu0 0.0
    %2473 = vmatprep.subr.mxu0 0.0
    %2474 = vmatpush1.msra.mxu0 0.0
    %2475 = vmatprep.subr.mxu0 0.0
    %2476 = vmatpush1.msra.mxu0 %v2265
    %2477 = vmatprep.subr.mxu0 0.0
    %2478 = vmatpush1.msra.mxu0 %v2264
    %2479 = vmatprep.subr.mxu0 0.0
    %2480 = vmatpush1.msra.mxu0 %v2263
    %2481 = vmatprep.subr.mxu0 0.0
    %2482 = vmatpush1.msra.mxu0 %v2262
    %2483 = vmatprep.subr.mxu0 0.0
    %2484 = vmatpush2.msra.mxu0 0.0
    %2485 = vmatprep.subr.mxu0 0.0
    %2486 = vmatpush2.msra.mxu0 0.0
    %2487 = vmatprep.subr.mxu0 0.0
    %2488 = vmatpush2.msra.mxu0 0.0
    %2489 = vmatprep.subr.mxu0 0.0
    %2490 = vmatpush2.msra.mxu0 0.0
    %2491 = vmatprep.subr.mxu0 0.0
    %2492 = vmatpush2.msra.mxu0 0.0
    %2493 = vmatprep.subr.mxu0 0.0
    %2494 = vmatpush2.msra.mxu0 0.0
    %2495 = vmatprep.subr.mxu0 0.0
    %2496 = vmatpush2.msra.mxu0 0.0
    %2497 = vmatprep.subr.mxu0 0.0
    %2498 = vmatpush2.msra.mxu0 0.0
    %2499 = vmatprep.subr.mxu0 0.0
    %2500 = vmatpush2.msra.mxu0 0.0
    %2501 = vmatprep.subr.mxu0 0.0
    %2502 = vmatpush2.msra.mxu0 0.0
    %2503 = vmatprep.subr.mxu0 0.0
    %2504 = vmatpush2.msra.mxu0 0.0
    %2505 = vmatprep.subr.mxu0 0.0
    %2506 = vmatpush2.msra.mxu0 0.0
    %2507 = vmatprep.subr.mxu0 0.0
    %2508 = vmatpush2.msra.mxu0 0.0
    %2509 = vmatprep.subr.mxu0 0.0
    %2510 = vmatpush2.msra.mxu0 0.0
    %2511 = vmatprep.subr.mxu0 0.0
    %2512 = vmatpush2.msra.mxu0 0.0
    %2513 = vmatprep.subr.mxu0 0.0
    %2514 = vmatpush2.msra.mxu0 0.0
    %2515 = vmatprep.mubr.f32.mxu0 0.0
    %2516 = vmatmul.mubr.f32.gmra.mxu0 %v2449
    %v2517 = vpop.f32.mrf.mxu0
    %v2518 = vadd.f32 %v2289, %v2517
    %v2519 = vpop.f32.mrf.mxu0
    %2520 = vdwg.mxu0
    %v2521 = vmax.f32 %v2518, 0.0
    %2522 = vmatprep.subr.mxu0 0.0
    %2523 = vmatpush1.msra.mxu0 %v2282
    %2524 = vmatprep.subr.mxu0 0.0
    %2525 = vmatpush1.msra.mxu0 %v2281
    %2526 = vmatprep.subr.mxu0 0.0
    %2527 = vmatpush1.msra.mxu0 %v2280
    %2528 = vmatprep.subr.mxu0 0.0
    %2529 = vmatpush1.msra.mxu0 %v2279
    %2530 = vmatprep.subr.mxu0 0.0
    %2531 = vmatpush1.msra.mxu0 %v2278
    %2532 = vmatprep.subr.mxu0 0.0
    %2533 = vmatpush1.msra.mxu0 %v2277
    %2534 = vmatprep.subr.mxu0 0.0
    %2535 = vmatpush1.msra.mxu0 %v2276
    %2536 = vmatprep.subr.mxu0 0.0
    %2537 = vmatpush1.msra.mxu0 %v2275
    %2538 = vmatprep.subr.mxu0 0.0
    %2539 = vmatpush1.msra.mxu0 %v2274
    %2540 = vmatprep.subr.mxu0 0.0
    %2541 = vmatpush1.msra.mxu0 %v2273
    %2542 = vmatprep.subr.mxu0 0.0
    %2543 = vmatpush1.msra.mxu0 %v2272
    %2544 = vmatprep.subr.mxu0 0.0
    %2545 = vmatpush1.msra.mxu0 %v2271
    %2546 = vmatprep.subr.mxu0 0.0
    %2547 = vmatpush1.msra.mxu0 %v2270
    %2548 = vmatprep.subr.mxu0 0.0
    %2549 = vmatpush1.msra.mxu0 %v2269
    %2550 = vmatprep.subr.mxu0 0.0
    %2551 = vmatpush1.msra.mxu0 %v2268
    %2552 = vmatprep.subr.mxu0 0.0
    %2553 = vmatpush1.msra.mxu0 %v2267
    %2554 = vmatprep.subr.mxu0 0.0
    %2555 = vmatpush2.msra.mxu0 0.0
    %2556 = vmatprep.subr.mxu0 0.0
    %2557 = vmatpush2.msra.mxu0 0.0
    %2558 = vmatprep.subr.mxu0 0.0
    %2559 = vmatpush2.msra.mxu0 0.0
    %2560 = vmatprep.subr.mxu0 0.0
    %2561 = vmatpush2.msra.mxu0 0.0
    %2562 = vmatprep.subr.mxu0 0.0
    %2563 = vmatpush2.msra.mxu0 0.0
    %2564 = vmatprep.subr.mxu0 0.0
    %2565 = vmatpush2.msra.mxu0 0.0
    %2566 = vmatprep.subr.mxu0 0.0
    %2567 = vmatpush2.msra.mxu0 0.0
    %2568 = vmatprep.subr.mxu0 0.0
    %2569 = vmatpush2.msra.mxu0 0.0
    %2570 = vmatprep.subr.mxu0 0.0
    %2571 = vmatpush2.msra.mxu0 0.0
    %2572 = vmatprep.subr.mxu0 0.0
    %2573 = vmatpush2.msra.mxu0 0.0
    %2574 = vmatprep.subr.mxu0 0.0
    %2575 = vmatpush2.msra.mxu0 0.0
    %2576 = vmatprep.subr.mxu0 0.0
    %2577 = vmatpush2.msra.mxu0 0.0
    %2578 = vmatprep.subr.mxu0 0.0
    %2579 = vmatpush2.msra.mxu0 0.0
    %2580 = vmatprep.subr.mxu0 0.0
    %2581 = vmatpush2.msra.mxu0 0.0
    %2582 = vmatprep.subr.mxu0 0.0
    %2583 = vmatpush2.msra.mxu0 0.0
    %2584 = vmatprep.subr.mxu0 0.0
    %2585 = vmatpush2.msra.mxu0 0.0
    %2586 = vmatprep.mubr.f32.mxu0 0.0
    %2587 = vmatmul.mubr.f32.gmra.mxu0 %v2521
    %v2588 = vpop.f32.mrf.mxu0
    %v2589 = vadd.f32 %v2371, %v2588
    %v2590 = vpop.f32.mrf.mxu0
    %2591 = vdwg.mxu0
    %2592 = vst.msk [vmem:[#allocation2 + $0x2] sm:$0x3] %vm2443, %v2589
    // Predicated region
    $region46: #{gru_model_forward.1} parent=1 // pred_check
      _
    $region47: #{gru_model_forward.1} parent=1 // pred_check_branch
      %2594 = sbr.rel (0) target = $region49
    $region48: #{gru_model_forward.1} parent=1 // pred_region
      %s2596 = ssub.s32 64, 64
      %2597 = vsyncadd [#allocation3], %s2596
      %s2599 = sshll.u32 [#allocation2], 4
      %s2600 = int_to_ptr.vmem [resolvable:$true] %s2599
      %2602 = dma.vmem_to_hbm [thread:$0]  %s2600, 64, %s11, [#allocation3]
    $region49: #{gru_model_forward.1} parent=1 // pred_fallthru
      _
    // Predicated region
    $region50: #{gru_model_forward.1} parent=1 // pred_check
      _
    $region51: #{gru_model_forward.1} parent=1 // pred_check_branch
      %2604 = sbr.rel (0) target = $region53
    $region52: #{gru_model_forward.1} parent=1 // pred_region
      %2605 = dma.done [#allocation3], 64
    $region53: #{gru_model_forward.1} parent=1 // pred_fallthru
      _
    %2606 = vsyncpa [#allocation3], 1

</llo_original>
